<compile_context>
chip_gen: v5e
topology: v5e:2x2
jax: 0.10.0
libtpu: 0.0.40
codegen_flags: <defaults>
</compile_context>

<pallas_src>
import functools
import math

import jax
import jax.numpy as jnp
from jax import lax
from jax.experimental import pallas as pl
from jax.experimental.pallas import tpu as pltpu


def _layer_norm(v, g, b, eps=1e-6):
    mu = jnp.mean(v, axis=-1, keepdims=True)
    d = v - mu
    var = jnp.mean(d * d, axis=-1, keepdims=True)
    return d * lax.rsqrt(var + eps) * g + b


def block_kernel(x_ref,
                 g1_ref, be1_ref,
                 wqkv_ref, bqkv_ref,
                 wproj_ref, bproj_ref,
                 g2_ref, be2_ref,
                 w1_ref, bb1_ref,
                 w2_ref, bb2_ref,
                 o_ref,
                 attn_ref,
                 *, n_heads, head_dim):
    bb, n, d = x_ref.shape
    m = bb * n
    f32, bf16 = jnp.float32, jnp.bfloat16

    # Hoist every parameter read once (no repeated ref[...] loads / broadcasts).
    g1, be1 = g1_ref[...], be1_ref[...]
    g2, be2 = g2_ref[...], be2_ref[...]
    wqkv, bqkv = wqkv_ref[...], bqkv_ref[...]
    wproj, bproj = wproj_ref[...], bproj_ref[...]
    w1, bb1 = w1_ref[...], bb1_ref[...]
    w2, bb2 = w2_ref[...], bb2_ref[...]

    x = x_ref[...].astype(f32)                     # (BB, N, D)
    x2d = x.reshape(m, d)                          # layout-free merge of leading dims

    # ---- Attention branch ---------------------------------------------------
    xn = _layer_norm(x2d, g1, be1)                 # f32 VPU math
    # Fused QKV GEMM: bf16 MXU inputs, f32 accumulation. The attention scale is
    # already folded into the Q columns of wqkv / bqkv by the wrapper.
    qkv = jnp.dot(xn.astype(bf16), wqkv,
                  preferred_element_type=f32) + bqkv              # (M, 3D) f32

    # Split Q/K/V once at the 128-lane-aligned thirds (D is a multiple of 128);
    # only cheap per-head views are taken inside the head loop.
    q_all = qkv[:, 0 * d:1 * d].astype(bf16).reshape(bb, n, d)
    k_all = qkv[:, 1 * d:2 * d].astype(bf16).reshape(bb, n, d)
    v_all = qkv[:, 2 * d:3 * d].astype(bf16).reshape(bb, n, d)

    for h in range(n_heads):                       # static, small head count
        lo = h * head_dim
        hi = lo + head_dim
        q_h = q_all[:, :, lo:hi]                   # (BB, N, hd) bf16 (pre-scaled)
        k_h = k_all[:, :, lo:hi]
        v_h = v_all[:, :, lo:hi]

        s = jnp.einsum('bnd,bmd->bnm', q_h, k_h,
                       preferred_element_type=f32)                # (BB, N, N) f32
        s = s - jnp.max(s, axis=-1, keepdims=True)
        e = jnp.exp(s)
        p = e * pl.reciprocal(jnp.sum(e, axis=-1, keepdims=True), approx=True)
        w_h = jnp.einsum('bnm,bmd->bnd', p.astype(bf16), v_h,
                         preferred_element_type=f32)              # (BB, N, hd) f32

        # Stage this head's output at its lane offset (cheap masked sub-vreg store).
        attn_ref[:, :, lo:hi] = w_h.astype(bf16)

    # Single full-width output projection: one (M, D) @ (D, D) GEMM with K = D
    # (full MXU K utilization), bias added once.
    proj = jnp.dot(attn_ref[...].reshape(m, d), wproj,
                   preferred_element_type=f32) + bproj
    x1 = x2d + proj                                # residual 1, (M, D) f32

    # ---- MLP branch ----------------------------------------------------------
    x2n = _layer_norm(x1, g2, be2)
    h1 = jnp.dot(x2n.astype(bf16), w1, preferred_element_type=f32) + bb1   # (M, 4D)
    # exact (erf) GELU, matching torch.nn.GELU default
    h1 = 0.5 * h1 * (1.0 + lax.erf(h1 * (1.0 / math.sqrt(2.0))))
    h2 = jnp.dot(h1.astype(bf16), w2, preferred_element_type=f32) + bb2    # (M, D)

    o_ref[...] = (x1 + h2).reshape(bb, n, d).astype(o_ref.dtype)  # residual 2


def _pick_block_b(batch, n_tokens):
    """Largest divisor of `batch` with block_b * N <= 512 rows per grid step,
    while keeping >= 2 grid steps when batch > 1 (both v7x TensorCores busy)."""
    if batch <= 1:
        return 1
    cap = max(1, batch // 2)
    for cand in range(cap, 0, -1):
        if batch % cand == 0 and cand * n_tokens <= 512:
            return cand
    return 1


def _vmem_limit_bytes():
    """VMEM limit below physical capacity, leaving headroom for Mosaic internal
    scratch (v5e/v6e 128 MiB -> 100 MiB; v7x 64 MiB -> 48 MiB)."""
    mib = 1024 * 1024
    try:
        cap = pltpu.get_tpu_info().vmem_capacity_bytes
    except Exception:
        cap = 64 * mib          # conservative: safe on every generation
    return int(min(max(cap - 16 * mib, 32 * mib), 100 * mib))


def vit_block(x, params, n_heads, *, block_b=None):
    B, N, D = x.shape
    assert D % n_heads == 0
    head_dim = D // n_heads
    scale = head_dim ** (-0.5)

    if block_b is None:
        block_b = _pick_block_b(B, N)
    assert B % block_b == 0

    f32, bf16 = jnp.float32, jnp.bfloat16

    # Fold the attention scale into the Q third of the QKV projection (free).
    wqkv = params["wqkv"].astype(f32).at[:, :D].multiply(scale)
    bqkv = params["bqkv"].astype(f32).at[:, :D].multiply(scale)

    # Pre-cast matmul weights to bf16 (half DMA / VMEM, MXU-native inputs);
    # biases and LayerNorm params stay f32 (added to f32 accumulators).
    prepared = (
        params["g1"].astype(f32), params["be1"].astype(f32),
        wqkv.astype(bf16), bqkv,
        params["wproj"].astype(bf16), params["bproj"].astype(f32),
        params["g2"].astype(f32), params["be2"].astype(f32),
        params["w1"].astype(bf16), params["bb1"].astype(f32),
        params["w2"].astype(bf16), params["bb2"].astype(f32),
    )

    kernel = functools.partial(block_kernel, n_heads=n_heads, head_dim=head_dim)

    def param_spec(a, single_buffer):
        index_map = lambda b: (0,) * a.ndim        # constant block: resident weights
        if single_buffer:
            # Constant-index blocks are never re-DMA'd; don't double-buffer them.
            return pl.BlockSpec(a.shape, index_map, pipeline_mode=pl.Buffered(1))
        return pl.BlockSpec(a.shape, index_map)

    def run(single_buffer_params):
        in_specs = ([pl.BlockSpec((block_b, N, D), lambda b: (b, 0, 0))]
                    + [param_spec(a, single_buffer_params) for a in prepared])
        return pl.pallas_call(
            kernel,
            out_shape=jax.ShapeDtypeStruct((B, N, D), x.dtype),
            grid=(B // block_b,),
            in_specs=in_specs,
            out_specs=pl.BlockSpec((block_b, N, D), lambda b: (b, 0, 0)),
            scratch_shapes=[pltpu.VMEM((block_b, N, D), bf16)],   # attn staging buffer
            compiler_params=pltpu.CompilerParams(
                dimension_semantics=("parallel",),
                vmem_limit_bytes=_vmem_limit_bytes()),
        )(x, *prepared)

    try:
        return run(True)
    except Exception:
        # Graceful fallback for jax versions without BlockSpec(pipeline_mode=...):
        # identical math, default (double-buffered) parameter blocks.
        return run(False)


def reference_block(x, params, n_heads):
    """Pure-JAX f32 reference mirroring the PyTorch forward (eval mode)."""
    B, N, D = x.shape
    hd = D // n_heads
    scale = hd ** (-0.5)

    def ln(v, g, b):
        mu = jnp.mean(v, -1, keepdims=True)
        var = jnp.mean((v - mu) ** 2, -1, keepdims=True)
        return (v - mu) / jnp.sqrt(var + 1e-6) * g + b

    xn = ln(x, params["g1"][0], params["be1"][0])
    qkv = xn @ params["wqkv"] + params["bqkv"][0]
    qkv = qkv.reshape(B, N, 3, n_heads, hd).transpose(2, 0, 3, 1, 4)
    q, k, v = qkv[0], qkv[1], qkv[2]
    dp = jnp.einsum("bhnd,bhmd->bhnm", q, k) * scale
    attn = jax.nn.softmax(dp, axis=-1)
    wa = jnp.einsum("bhnm,bhmd->bhnd", attn, v)
    wa = wa.transpose(0, 2, 1, 3).reshape(B, N, D)
    x = x + (wa @ params["wproj"] + params["bproj"][0])

    x2 = ln(x, params["g2"][0], params["be2"][0])
    h = x2 @ params["w1"] + params["bb1"][0]
    h = 0.5 * h * (1.0 + lax.erf(h / math.sqrt(2.0)))
    x = x + (h @ params["w2"] + params["bb2"][0])
    return x


if __name__ == "__main__":
    B, N, D = 2, 16, 128          # small, lane-dense (D multiple of 128)
    n_heads = 4
    H = int(D * 4.0)

    key = jax.random.PRNGKey(0)
    keys = jax.random.split(key, 9)

    params = {
        "g1":    jnp.ones((1, D), jnp.float32),
        "be1":   jnp.zeros((1, D), jnp.float32),
        "wqkv":  0.02 * jax.random.normal(keys[0], (D, 3 * D), jnp.float32),
        "bqkv":  0.01 * jax.random.normal(keys[1], (1, 3 * D), jnp.float32),
        "wproj": 0.02 * jax.random.normal(keys[2], (D, D), jnp.float32),
        "bproj": 0.01 * jax.random.normal(keys[3], (1, D), jnp.float32),
        "g2":    jnp.ones((1, D), jnp.float32),
        "be2":   jnp.zeros((1, D), jnp.float32),
        "w1":    0.02 * jax.random.normal(keys[4], (D, H), jnp.float32),
        "bb1":   0.01 * jax.random.normal(keys[5], (1, H), jnp.float32),
        "w2":    0.02 * jax.random.normal(keys[6], (H, D), jnp.float32),
        "bb2":   0.01 * jax.random.normal(keys[7], (1, D), jnp.float32),
    }

    x = jax.random.normal(keys[8], (B, N, D), jnp.float32)

    out = vit_block(x, params, n_heads)
    out = jax.block_until_ready(out)

    ref = reference_block(x, params, n_heads)
    assert out.shape == (B, N, D)
    # bf16 matmul inputs + approx softmax reciprocal → loosened tolerance vs f32 ref.
    assert jnp.allclose(out, ref, atol=2e-2, rtol=2e-2), "mismatch vs reference"

    print("KERNEL_OK")
</pallas_src>

<mosaic_0001>
module attributes {stable_mosaic.version = 11 : i64} {
  func.func @block_kernel(%arg0: i32, %arg1: memref<1x16x128xf32, #tpu.memory_space<vmem>>, %arg2: memref<1x128xf32, #tpu.memory_space<vmem>>, %arg3: memref<1x128xf32, #tpu.memory_space<vmem>>, %arg4: memref<128x384xbf16, #tpu.memory_space<vmem>>, %arg5: memref<1x384xf32, #tpu.memory_space<vmem>>, %arg6: memref<128x128xbf16, #tpu.memory_space<vmem>>, %arg7: memref<1x128xf32, #tpu.memory_space<vmem>>, %arg8: memref<1x128xf32, #tpu.memory_space<vmem>>, %arg9: memref<1x128xf32, #tpu.memory_space<vmem>>, %arg10: memref<128x512xbf16, #tpu.memory_space<vmem>>, %arg11: memref<1x512xf32, #tpu.memory_space<vmem>>, %arg12: memref<512x128xbf16, #tpu.memory_space<vmem>>, %arg13: memref<1x128xf32, #tpu.memory_space<vmem>>, %arg14: memref<1x16x128xf32, #tpu.memory_space<vmem>>, %arg15: memref<1x16x128xbf16, #tpu.memory_space<vmem>>) attributes {dimension_semantics = [#tpu.dimension_semantics<parallel>], iteration_bounds = array<i64: 2>, scalar_prefetch = 0 : i64, scratch_operands = 1 : i64, tpu.core_type = #tpu.core_type<tc>, window_params = [{transform_indices = @transform_0, window_bounds = array<i64: 1, 16, 128>}, {pipeline_mode = #tpu.pipeline_mode<synchronous>, transform_indices = @transform_1, window_bounds = array<i64: 1, 128>}, {pipeline_mode = #tpu.pipeline_mode<synchronous>, transform_indices = @transform_2, window_bounds = array<i64: 1, 128>}, {pipeline_mode = #tpu.pipeline_mode<synchronous>, transform_indices = @transform_3, window_bounds = array<i64: 128, 384>}, {pipeline_mode = #tpu.pipeline_mode<synchronous>, transform_indices = @transform_4, window_bounds = array<i64: 1, 384>}, {pipeline_mode = #tpu.pipeline_mode<synchronous>, transform_indices = @transform_5, window_bounds = array<i64: 128, 128>}, {pipeline_mode = #tpu.pipeline_mode<synchronous>, transform_indices = @transform_6, window_bounds = array<i64: 1, 128>}, {pipeline_mode = #tpu.pipeline_mode<synchronous>, transform_indices = @transform_7, window_bounds = array<i64: 1, 128>}, {pipeline_mode = #tpu.pipeline_mode<synchronous>, transform_indices = @transform_8, window_bounds = array<i64: 1, 128>}, {pipeline_mode = #tpu.pipeline_mode<synchronous>, transform_indices = @transform_9, window_bounds = array<i64: 128, 512>}, {pipeline_mode = #tpu.pipeline_mode<synchronous>, transform_indices = @transform_10, window_bounds = array<i64: 1, 512>}, {pipeline_mode = #tpu.pipeline_mode<synchronous>, transform_indices = @transform_11, window_bounds = array<i64: 512, 128>}, {pipeline_mode = #tpu.pipeline_mode<synchronous>, transform_indices = @transform_12, window_bounds = array<i64: 1, 128>}, {transform_indices = @transform_13, window_bounds = array<i64: 1, 16, 128>}]} {
    %c0 = arith.constant 0 : index
    %c0_0 = arith.constant 0 : index
    %0 = vector.load %arg2[%c0, %c0_0] : memref<1x128xf32, #tpu.memory_space<vmem>>, vector<1x128xf32>
    %c0_1 = arith.constant 0 : index
    %c0_2 = arith.constant 0 : index
    %1 = vector.load %arg3[%c0_1, %c0_2] : memref<1x128xf32, #tpu.memory_space<vmem>>, vector<1x128xf32>
    %c0_3 = arith.constant 0 : index
    %c0_4 = arith.constant 0 : index
    %2 = vector.load %arg8[%c0_3, %c0_4] : memref<1x128xf32, #tpu.memory_space<vmem>>, vector<1x128xf32>
    %c0_5 = arith.constant 0 : index
    %c0_6 = arith.constant 0 : index
    %3 = vector.load %arg9[%c0_5, %c0_6] : memref<1x128xf32, #tpu.memory_space<vmem>>, vector<1x128xf32>
    %c0_7 = arith.constant 0 : index
    %c0_8 = arith.constant 0 : index
    %4 = vector.load %arg4[%c0_7, %c0_8] : memref<128x384xbf16, #tpu.memory_space<vmem>>, vector<128x384xbf16>
    %c0_9 = arith.constant 0 : index
    %c0_10 = arith.constant 0 : index
    %5 = vector.load %arg5[%c0_9, %c0_10] : memref<1x384xf32, #tpu.memory_space<vmem>>, vector<1x384xf32>
    %c0_11 = arith.constant 0 : index
    %c0_12 = arith.constant 0 : index
    %6 = vector.load %arg6[%c0_11, %c0_12] : memref<128x128xbf16, #tpu.memory_space<vmem>>, vector<128x128xbf16>
    %c0_13 = arith.constant 0 : index
    %c0_14 = arith.constant 0 : index
    %7 = vector.load %arg7[%c0_13, %c0_14] : memref<1x128xf32, #tpu.memory_space<vmem>>, vector<1x128xf32>
    %c0_15 = arith.constant 0 : index
    %c0_16 = arith.constant 0 : index
    %8 = vector.load %arg10[%c0_15, %c0_16] : memref<128x512xbf16, #tpu.memory_space<vmem>>, vector<128x512xbf16>
    %c0_17 = arith.constant 0 : index
    %c0_18 = arith.constant 0 : index
    %9 = vector.load %arg11[%c0_17, %c0_18] : memref<1x512xf32, #tpu.memory_space<vmem>>, vector<1x512xf32>
    %c0_19 = arith.constant 0 : index
    %c0_20 = arith.constant 0 : index
    %10 = vector.load %arg12[%c0_19, %c0_20] : memref<512x128xbf16, #tpu.memory_space<vmem>>, vector<512x128xbf16>
    %c0_21 = arith.constant 0 : index
    %c0_22 = arith.constant 0 : index
    %11 = vector.load %arg13[%c0_21, %c0_22] : memref<1x128xf32, #tpu.memory_space<vmem>>, vector<1x128xf32>
    %c0_23 = arith.constant 0 : index
    %c0_24 = arith.constant 0 : index
    %c0_25 = arith.constant 0 : index
    %12 = vector.load %arg1[%c0_23, %c0_24, %c0_25] : memref<1x16x128xf32, #tpu.memory_space<vmem>>, vector<1x16x128xf32>
    %13 = vector.shape_cast %12 : vector<1x16x128xf32> to vector<16x128xf32>
    %cst = arith.constant dense<0.000000e+00> : vector<16xf32>
    %14 = vector.multi_reduction <add>, %13, %cst [1] : vector<16x128xf32> to vector<16xf32>
    %15 = vector.shape_cast %14 : vector<16xf32> to vector<16x1xf32>
    %cst_26 = arith.constant 1.280000e+02 : f32
    %16 = vector.broadcast %cst_26 : f32 to vector<16x1xf32>
    %17 = arith.divf %15, %16 : vector<16x1xf32>
    %18 = vector.broadcast %17 : vector<16x1xf32> to vector<16x128xf32>
    %19 = arith.subf %13, %18 : vector<16x128xf32>
    %20 = arith.mulf %19, %19 : vector<16x128xf32>
    %cst_27 = arith.constant dense<0.000000e+00> : vector<16xf32>
    %21 = vector.multi_reduction <add>, %20, %cst_27 [1] : vector<16x128xf32> to vector<16xf32>
    %22 = vector.shape_cast %21 : vector<16xf32> to vector<16x1xf32>
    %cst_28 = arith.constant 1.280000e+02 : f32
    %23 = vector.broadcast %cst_28 : f32 to vector<16x1xf32>
    %24 = arith.divf %22, %23 : vector<16x1xf32>
    %cst_29 = arith.constant 9.99999997E-7 : f32
    %25 = vector.broadcast %cst_29 : f32 to vector<16x1xf32>
    %26 = arith.addf %24, %25 : vector<16x1xf32>
    %27 = math.rsqrt %26 : vector<16x1xf32>
    %28 = vector.broadcast %27 : vector<16x1xf32> to vector<16x128xf32>
    %29 = arith.mulf %19, %28 : vector<16x128xf32>
    %30 = vector.broadcast %0 : vector<1x128xf32> to vector<16x128xf32>
    %31 = arith.mulf %29, %30 : vector<16x128xf32>
    %32 = vector.broadcast %1 : vector<1x128xf32> to vector<16x128xf32>
    %33 = arith.addf %31, %32 : vector<16x128xf32>
    %34 = arith.truncf %33 : vector<16x128xf32> to vector<16x128xbf16>
    %cst_30 = arith.constant dense<0.000000e+00> : vector<16x384xf32>
    %35 = tpu.matmul %34, %4, %cst_30 {dimension_numbers = #tpu.dot_dimension_numbers<[1], [0], [0], [1], [0, 0, 1, 1], [], []>} : vector<16x128xbf16>, vector<128x384xbf16>, vector<16x384xf32> -> vector<16x384xf32>
    %36 = vector.broadcast %5 : vector<1x384xf32> to vector<16x384xf32>
    %37 = arith.addf %35, %36 : vector<16x384xf32>
    %38 = vector.extract_strided_slice %37 {offsets = [0, 0], sizes = [16, 128], strides = [1, 1]} : vector<16x384xf32> to vector<16x128xf32>
    %39 = arith.truncf %38 : vector<16x128xf32> to vector<16x128xbf16>
    %40 = vector.shape_cast %39 : vector<16x128xbf16> to vector<1x16x128xbf16>
    %41 = vector.extract_strided_slice %37 {offsets = [0, 128], sizes = [16, 128], strides = [1, 1]} : vector<16x384xf32> to vector<16x128xf32>
    %42 = arith.truncf %41 : vector<16x128xf32> to vector<16x128xbf16>
    %43 = vector.shape_cast %42 : vector<16x128xbf16> to vector<1x16x128xbf16>
    %44 = vector.extract_strided_slice %37 {offsets = [0, 256], sizes = [16, 128], strides = [1, 1]} : vector<16x384xf32> to vector<16x128xf32>
    %45 = arith.truncf %44 : vector<16x128xf32> to vector<16x128xbf16>
    %46 = vector.shape_cast %45 : vector<16x128xbf16> to vector<1x16x128xbf16>
    %47 = vector.extract_strided_slice %40 {offsets = [0, 0, 0], sizes = [1, 16, 32], strides = [1, 1, 1]} : vector<1x16x128xbf16> to vector<1x16x32xbf16>
    %48 = vector.extract_strided_slice %43 {offsets = [0, 0, 0], sizes = [1, 16, 32], strides = [1, 1, 1]} : vector<1x16x128xbf16> to vector<1x16x32xbf16>
    %49 = vector.extract_strided_slice %46 {offsets = [0, 0, 0], sizes = [1, 16, 32], strides = [1, 1, 1]} : vector<1x16x128xbf16> to vector<1x16x32xbf16>
    "tpu.trace_start"() <{level = 10 : i32, message = "bnd,bmd->bnm"}> : () -> ()
    %cst_31 = arith.constant dense<0.000000e+00> : vector<1x16x16xf32>
    %50 = tpu.matmul %47, %48, %cst_31 {dimension_numbers = #tpu.dot_dimension_numbers<[2], [2], [1], [1], [0, 0, 0, 1, 1, 1], [0], [0]>} : vector<1x16x32xbf16>, vector<1x16x32xbf16>, vector<1x16x16xf32> -> vector<1x16x16xf32>
    "tpu.trace_stop"() : () -> ()
    %cst_32 = arith.constant dense<0xFF800000> : vector<1x16xf32>
    %51 = vector.multi_reduction <maximumf>, %50, %cst_32 [2] : vector<1x16x16xf32> to vector<1x16xf32>
    %52 = vector.shape_cast %51 : vector<1x16xf32> to vector<1x16x1xf32>
    %53 = vector.broadcast %52 : vector<1x16x1xf32> to vector<1x16x16xf32>
    %54 = arith.subf %50, %53 : vector<1x16x16xf32>
    %55 = math.exp %54 : vector<1x16x16xf32>
    %cst_33 = arith.constant dense<0.000000e+00> : vector<1x16xf32>
    %56 = vector.multi_reduction <add>, %55, %cst_33 [2] : vector<1x16x16xf32> to vector<1x16xf32>
    %57 = vector.shape_cast %56 : vector<1x16xf32> to vector<1x16x1xf32>
    %58 = tpu.reciprocal %57 {approx = true} : vector<1x16x1xf32> -> vector<1x16x1xf32>
    %59 = vector.broadcast %58 : vector<1x16x1xf32> to vector<1x16x16xf32>
    %60 = arith.mulf %55, %59 : vector<1x16x16xf32>
    %61 = arith.truncf %60 : vector<1x16x16xf32> to vector<1x16x16xbf16>
    "tpu.trace_start"() <{level = 10 : i32, message = "bnm,bmd->bnd"}> : () -> ()
    %cst_34 = arith.constant dense<0.000000e+00> : vector<1x16x32xf32>
    %62 = tpu.matmul %61, %49, %cst_34 {dimension_numbers = #tpu.dot_dimension_numbers<[2], [1], [1], [2], [0, 0, 0, 1, 1, 2], [0], [0]>} : vector<1x16x16xbf16>, vector<1x16x32xbf16>, vector<1x16x32xf32> -> vector<1x16x32xf32>
    "tpu.trace_stop"() : () -> ()
    %63 = arith.truncf %62 : vector<1x16x32xf32> to vector<1x16x32xbf16>
    %c0_35 = arith.constant 0 : index
    %c0_36 = arith.constant 0 : index
    %c0_37 = arith.constant 0 : index
    %64 = vector.load %arg15[%c0_35, %c0_36, %c0_37] : memref<1x16x128xbf16, #tpu.memory_space<vmem>>, vector<1x16x32xbf16>
    tpu.vector_store %arg15[%c0_35, %c0_36, %c0_37], %63 {strides = array<i32>} : memref<1x16x128xbf16, #tpu.memory_space<vmem>>, vector<1x16x32xbf16>,
    %65 = vector.extract_strided_slice %40 {offsets = [0, 0, 32], sizes = [1, 16, 32], strides = [1, 1, 1]} : vector<1x16x128xbf16> to vector<1x16x32xbf16>
    %66 = vector.extract_strided_slice %43 {offsets = [0, 0, 32], sizes = [1, 16, 32], strides = [1, 1, 1]} : vector<1x16x128xbf16> to vector<1x16x32xbf16>
    %67 = vector.extract_strided_slice %46 {offsets = [0, 0, 32], sizes = [1, 16, 32], strides = [1, 1, 1]} : vector<1x16x128xbf16> to vector<1x16x32xbf16>
    "tpu.trace_start"() <{level = 10 : i32, message = "bnd,bmd->bnm"}> : () -> ()
    %cst_38 = arith.constant dense<0.000000e+00> : vector<1x16x16xf32>
    %68 = tpu.matmul %65, %66, %cst_38 {dimension_numbers = #tpu.dot_dimension_numbers<[2], [2], [1], [1], [0, 0, 0, 1, 1, 1], [0], [0]>} : vector<1x16x32xbf16>, vector<1x16x32xbf16>, vector<1x16x16xf32> -> vector<1x16x16xf32>
    "tpu.trace_stop"() : () -> ()
    %cst_39 = arith.constant dense<0xFF800000> : vector<1x16xf32>
    %69 = vector.multi_reduction <maximumf>, %68, %cst_39 [2] : vector<1x16x16xf32> to vector<1x16xf32>
    %70 = vector.shape_cast %69 : vector<1x16xf32> to vector<1x16x1xf32>
    %71 = vector.broadcast %70 : vector<1x16x1xf32> to vector<1x16x16xf32>
    %72 = arith.subf %68, %71 : vector<1x16x16xf32>
    %73 = math.exp %72 : vector<1x16x16xf32>
    %cst_40 = arith.constant dense<0.000000e+00> : vector<1x16xf32>
    %74 = vector.multi_reduction <add>, %73, %cst_40 [2] : vector<1x16x16xf32> to vector<1x16xf32>
    %75 = vector.shape_cast %74 : vector<1x16xf32> to vector<1x16x1xf32>
    %76 = tpu.reciprocal %75 {approx = true} : vector<1x16x1xf32> -> vector<1x16x1xf32>
    %77 = vector.broadcast %76 : vector<1x16x1xf32> to vector<1x16x16xf32>
    %78 = arith.mulf %73, %77 : vector<1x16x16xf32>
    %79 = arith.truncf %78 : vector<1x16x16xf32> to vector<1x16x16xbf16>
    "tpu.trace_start"() <{level = 10 : i32, message = "bnm,bmd->bnd"}> : () -> ()
    %cst_41 = arith.constant dense<0.000000e+00> : vector<1x16x32xf32>
    %80 = tpu.matmul %79, %67, %cst_41 {dimension_numbers = #tpu.dot_dimension_numbers<[2], [1], [1], [2], [0, 0, 0, 1, 1, 2], [0], [0]>} : vector<1x16x16xbf16>, vector<1x16x32xbf16>, vector<1x16x32xf32> -> vector<1x16x32xf32>
    "tpu.trace_stop"() : () -> ()
    %81 = arith.truncf %80 : vector<1x16x32xf32> to vector<1x16x32xbf16>
    %c0_42 = arith.constant 0 : index
    %c0_43 = arith.constant 0 : index
    %c32 = arith.constant 32 : index
    %82 = vector.load %arg15[%c0_42, %c0_43, %c32] : memref<1x16x128xbf16, #tpu.memory_space<vmem>>, vector<1x16x32xbf16>
    tpu.vector_store %arg15[%c0_42, %c0_43, %c32], %81 {strides = array<i32>} : memref<1x16x128xbf16, #tpu.memory_space<vmem>>, vector<1x16x32xbf16>,
    %83 = vector.extract_strided_slice %40 {offsets = [0, 0, 64], sizes = [1, 16, 32], strides = [1, 1, 1]} : vector<1x16x128xbf16> to vector<1x16x32xbf16>
    %84 = vector.extract_strided_slice %43 {offsets = [0, 0, 64], sizes = [1, 16, 32], strides = [1, 1, 1]} : vector<1x16x128xbf16> to vector<1x16x32xbf16>
    %85 = vector.extract_strided_slice %46 {offsets = [0, 0, 64], sizes = [1, 16, 32], strides = [1, 1, 1]} : vector<1x16x128xbf16> to vector<1x16x32xbf16>
    "tpu.trace_start"() <{level = 10 : i32, message = "bnd,bmd->bnm"}> : () -> ()
    %cst_44 = arith.constant dense<0.000000e+00> : vector<1x16x16xf32>
    %86 = tpu.matmul %83, %84, %cst_44 {dimension_numbers = #tpu.dot_dimension_numbers<[2], [2], [1], [1], [0, 0, 0, 1, 1, 1], [0], [0]>} : vector<1x16x32xbf16>, vector<1x16x32xbf16>, vector<1x16x16xf32> -> vector<1x16x16xf32>
    "tpu.trace_stop"() : () -> ()
    %cst_45 = arith.constant dense<0xFF800000> : vector<1x16xf32>
    %87 = vector.multi_reduction <maximumf>, %86, %cst_45 [2] : vector<1x16x16xf32> to vector<1x16xf32>
    %88 = vector.shape_cast %87 : vector<1x16xf32> to vector<1x16x1xf32>
    %89 = vector.broadcast %88 : vector<1x16x1xf32> to vector<1x16x16xf32>
    %90 = arith.subf %86, %89 : vector<1x16x16xf32>
    %91 = math.exp %90 : vector<1x16x16xf32>
    %cst_46 = arith.constant dense<0.000000e+00> : vector<1x16xf32>
    %92 = vector.multi_reduction <add>, %91, %cst_46 [2] : vector<1x16x16xf32> to vector<1x16xf32>
    %93 = vector.shape_cast %92 : vector<1x16xf32> to vector<1x16x1xf32>
    %94 = tpu.reciprocal %93 {approx = true} : vector<1x16x1xf32> -> vector<1x16x1xf32>
    %95 = vector.broadcast %94 : vector<1x16x1xf32> to vector<1x16x16xf32>
    %96 = arith.mulf %91, %95 : vector<1x16x16xf32>
    %97 = arith.truncf %96 : vector<1x16x16xf32> to vector<1x16x16xbf16>
    "tpu.trace_start"() <{level = 10 : i32, message = "bnm,bmd->bnd"}> : () -> ()
    %cst_47 = arith.constant dense<0.000000e+00> : vector<1x16x32xf32>
    %98 = tpu.matmul %97, %85, %cst_47 {dimension_numbers = #tpu.dot_dimension_numbers<[2], [1], [1], [2], [0, 0, 0, 1, 1, 2], [0], [0]>} : vector<1x16x16xbf16>, vector<1x16x32xbf16>, vector<1x16x32xf32> -> vector<1x16x32xf32>
    "tpu.trace_stop"() : () -> ()
    %99 = arith.truncf %98 : vector<1x16x32xf32> to vector<1x16x32xbf16>
    %c0_48 = arith.constant 0 : index
    %c0_49 = arith.constant 0 : index
    %c64 = arith.constant 64 : index
    %100 = vector.load %arg15[%c0_48, %c0_49, %c64] : memref<1x16x128xbf16, #tpu.memory_space<vmem>>, vector<1x16x32xbf16>
    tpu.vector_store %arg15[%c0_48, %c0_49, %c64], %99 {strides = array<i32>} : memref<1x16x128xbf16, #tpu.memory_space<vmem>>, vector<1x16x32xbf16>,
    %101 = vector.extract_strided_slice %40 {offsets = [0, 0, 96], sizes = [1, 16, 32], strides = [1, 1, 1]} : vector<1x16x128xbf16> to vector<1x16x32xbf16>
    %102 = vector.extract_strided_slice %43 {offsets = [0, 0, 96], sizes = [1, 16, 32], strides = [1, 1, 1]} : vector<1x16x128xbf16> to vector<1x16x32xbf16>
    %103 = vector.extract_strided_slice %46 {offsets = [0, 0, 96], sizes = [1, 16, 32], strides = [1, 1, 1]} : vector<1x16x128xbf16> to vector<1x16x32xbf16>
    "tpu.trace_start"() <{level = 10 : i32, message = "bnd,bmd->bnm"}> : () -> ()
    %cst_50 = arith.constant dense<0.000000e+00> : vector<1x16x16xf32>
    %104 = tpu.matmul %101, %102, %cst_50 {dimension_numbers = #tpu.dot_dimension_numbers<[2], [2], [1], [1], [0, 0, 0, 1, 1, 1], [0], [0]>} : vector<1x16x32xbf16>, vector<1x16x32xbf16>, vector<1x16x16xf32> -> vector<1x16x16xf32>
    "tpu.trace_stop"() : () -> ()
    %cst_51 = arith.constant dense<0xFF800000> : vector<1x16xf32>
    %105 = vector.multi_reduction <maximumf>, %104, %cst_51 [2] : vector<1x16x16xf32> to vector<1x16xf32>
    %106 = vector.shape_cast %105 : vector<1x16xf32> to vector<1x16x1xf32>
    %107 = vector.broadcast %106 : vector<1x16x1xf32> to vector<1x16x16xf32>
    %108 = arith.subf %104, %107 : vector<1x16x16xf32>
    %109 = math.exp %108 : vector<1x16x16xf32>
    %cst_52 = arith.constant dense<0.000000e+00> : vector<1x16xf32>
    %110 = vector.multi_reduction <add>, %109, %cst_52 [2] : vector<1x16x16xf32> to vector<1x16xf32>
    %111 = vector.shape_cast %110 : vector<1x16xf32> to vector<1x16x1xf32>
    %112 = tpu.reciprocal %111 {approx = true} : vector<1x16x1xf32> -> vector<1x16x1xf32>
    %113 = vector.broadcast %112 : vector<1x16x1xf32> to vector<1x16x16xf32>
    %114 = arith.mulf %109, %113 : vector<1x16x16xf32>
    %115 = arith.truncf %114 : vector<1x16x16xf32> to vector<1x16x16xbf16>
    "tpu.trace_start"() <{level = 10 : i32, message = "bnm,bmd->bnd"}> : () -> ()
    %cst_53 = arith.constant dense<0.000000e+00> : vector<1x16x32xf32>
    %116 = tpu.matmul %115, %103, %cst_53 {dimension_numbers = #tpu.dot_dimension_numbers<[2], [1], [1], [2], [0, 0, 0, 1, 1, 2], [0], [0]>} : vector<1x16x16xbf16>, vector<1x16x32xbf16>, vector<1x16x32xf32> -> vector<1x16x32xf32>
    "tpu.trace_stop"() : () -> ()
    %117 = arith.truncf %116 : vector<1x16x32xf32> to vector<1x16x32xbf16>
    %c0_54 = arith.constant 0 : index
    %c0_55 = arith.constant 0 : index
    %c96 = arith.constant 96 : index
    %118 = vector.load %arg15[%c0_54, %c0_55, %c96] : memref<1x16x128xbf16, #tpu.memory_space<vmem>>, vector<1x16x32xbf16>
    tpu.vector_store %arg15[%c0_54, %c0_55, %c96], %117 {strides = array<i32>} : memref<1x16x128xbf16, #tpu.memory_space<vmem>>, vector<1x16x32xbf16>,
    %c0_56 = arith.constant 0 : index
    %c0_57 = arith.constant 0 : index
    %c0_58 = arith.constant 0 : index
    %119 = vector.load %arg15[%c0_56, %c0_57, %c0_58] : memref<1x16x128xbf16, #tpu.memory_space<vmem>>, vector<1x16x128xbf16>
    %120 = vector.shape_cast %119 : vector<1x16x128xbf16> to vector<16x128xbf16>
    %cst_59 = arith.constant dense<0.000000e+00> : vector<16x128xf32>
    %121 = tpu.matmul %120, %6, %cst_59 {dimension_numbers = #tpu.dot_dimension_numbers<[1], [0], [0], [1], [0, 0, 1, 1], [], []>} : vector<16x128xbf16>, vector<128x128xbf16>, vector<16x128xf32> -> vector<16x128xf32>
    %122 = vector.broadcast %7 : vector<1x128xf32> to vector<16x128xf32>
    %123 = arith.addf %121, %122 : vector<16x128xf32>
    %124 = arith.addf %13, %123 : vector<16x128xf32>
    %cst_60 = arith.constant dense<0.000000e+00> : vector<16xf32>
    %125 = vector.multi_reduction <add>, %124, %cst_60 [1] : vector<16x128xf32> to vector<16xf32>
    %126 = vector.shape_cast %125 : vector<16xf32> to vector<16x1xf32>
    %cst_61 = arith.constant 1.280000e+02 : f32
    %127 = vector.broadcast %cst_61 : f32 to vector<16x1xf32>
    %128 = arith.divf %126, %127 : vector<16x1xf32>
    %129 = vector.broadcast %128 : vector<16x1xf32> to vector<16x128xf32>
    %130 = arith.subf %124, %129 : vector<16x128xf32>
    %131 = arith.mulf %130, %130 : vector<16x128xf32>
    %cst_62 = arith.constant dense<0.000000e+00> : vector<16xf32>
    %132 = vector.multi_reduction <add>, %131, %cst_62 [1] : vector<16x128xf32> to vector<16xf32>
    %133 = vector.shape_cast %132 : vector<16xf32> to vector<16x1xf32>
    %cst_63 = arith.constant 1.280000e+02 : f32
    %134 = vector.broadcast %cst_63 : f32 to vector<16x1xf32>
    %135 = arith.divf %133, %134 : vector<16x1xf32>
    %cst_64 = arith.constant 9.99999997E-7 : f32
    %136 = vector.broadcast %cst_64 : f32 to vector<16x1xf32>
    %137 = arith.addf %135, %136 : vector<16x1xf32>
    %138 = math.rsqrt %137 : vector<16x1xf32>
    %139 = vector.broadcast %138 : vector<16x1xf32> to vector<16x128xf32>
    %140 = arith.mulf %130, %139 : vector<16x128xf32>
    %141 = vector.broadcast %2 : vector<1x128xf32> to vector<16x128xf32>
    %142 = arith.mulf %140, %141 : vector<16x128xf32>
    %143 = vector.broadcast %3 : vector<1x128xf32> to vector<16x128xf32>
    %144 = arith.addf %142, %143 : vector<16x128xf32>
    %145 = arith.truncf %144 : vector<16x128xf32> to vector<16x128xbf16>
    %cst_65 = arith.constant dense<0.000000e+00> : vector<16x512xf32>
    %146 = tpu.matmul %145, %8, %cst_65 {dimension_numbers = #tpu.dot_dimension_numbers<[1], [0], [0], [1], [0, 0, 1, 1], [], []>} : vector<16x128xbf16>, vector<128x512xbf16>, vector<16x512xf32> -> vector<16x512xf32>
    %147 = vector.broadcast %9 : vector<1x512xf32> to vector<16x512xf32>
    %148 = arith.addf %146, %147 : vector<16x512xf32>
    %cst_66 = arith.constant 5.000000e-01 : f32
    %149 = vector.broadcast %cst_66 : f32 to vector<16x512xf32>
    %150 = arith.mulf %149, %148 : vector<16x512xf32>
    %cst_67 = arith.constant 0.707106769 : f32
    %151 = vector.broadcast %cst_67 : f32 to vector<16x512xf32>
    %152 = arith.mulf %148, %151 : vector<16x512xf32>
    %153 = math.erf %152 : vector<16x512xf32>
    %cst_68 = arith.constant 1.000000e+00 : f32
    %154 = vector.broadcast %cst_68 : f32 to vector<16x512xf32>
    %155 = arith.addf %154, %153 : vector<16x512xf32>
    %156 = arith.mulf %150, %155 : vector<16x512xf32>
    %157 = arith.truncf %156 : vector<16x512xf32> to vector<16x512xbf16>
    %cst_69 = arith.constant dense<0.000000e+00> : vector<16x128xf32>
    %158 = tpu.matmul %157, %10, %cst_69 {dimension_numbers = #tpu.dot_dimension_numbers<[1], [0], [0], [1], [0, 0, 1, 1], [], []>} : vector<16x512xbf16>, vector<512x128xbf16>, vector<16x128xf32> -> vector<16x128xf32>
    %159 = vector.broadcast %11 : vector<1x128xf32> to vector<16x128xf32>
    %160 = arith.addf %158, %159 : vector<16x128xf32>
    %161 = arith.addf %124, %160 : vector<16x128xf32>
    %162 = vector.shape_cast %161 : vector<16x128xf32> to vector<1x16x128xf32>
    %c0_70 = arith.constant 0 : index
    %c0_71 = arith.constant 0 : index
    %c0_72 = arith.constant 0 : index
    %163 = vector.load %arg14[%c0_70, %c0_71, %c0_72] : memref<1x16x128xf32, #tpu.memory_space<vmem>>, vector<1x16x128xf32>
    tpu.vector_store %arg14[%c0_70, %c0_71, %c0_72], %162 {strides = array<i32>} : memref<1x16x128xf32, #tpu.memory_space<vmem>>, vector<1x16x128xf32>,
    return
  }
  func.func @transform_0(%arg0: i32) -> (i32, i32, i32) {
    %c0_i32 = arith.constant 0 : i32
    %c0_i32_0 = arith.constant 0 : i32
    %c0_i32_1 = arith.constant 0 : i32
    return %arg0, %c0_i32, %c0_i32_0 : i32, i32, i32
  }
  func.func @transform_1(%arg0: i32) -> (i32, i32) {
    %c0_i32 = arith.constant 0 : i32
    %c0_i32_0 = arith.constant 0 : i32
    %c0_i32_1 = arith.constant 0 : i32
    return %c0_i32, %c0_i32_0 : i32, i32
  }
  func.func @transform_2(%arg0: i32) -> (i32, i32) {
    %c0_i32 = arith.constant 0 : i32
    %c0_i32_0 = arith.constant 0 : i32
    %c0_i32_1 = arith.constant 0 : i32
    return %c0_i32, %c0_i32_0 : i32, i32
  }
  func.func @transform_3(%arg0: i32) -> (i32, i32) {
    %c0_i32 = arith.constant 0 : i32
    %c0_i32_0 = arith.constant 0 : i32
    %c0_i32_1 = arith.constant 0 : i32
    return %c0_i32, %c0_i32_0 : i32, i32
  }
  func.func @transform_4(%arg0: i32) -> (i32, i32) {
    %c0_i32 = arith.constant 0 : i32
    %c0_i32_0 = arith.constant 0 : i32
    %c0_i32_1 = arith.constant 0 : i32
    return %c0_i32, %c0_i32_0 : i32, i32
  }
  func.func @transform_5(%arg0: i32) -> (i32, i32) {
    %c0_i32 = arith.constant 0 : i32
    %c0_i32_0 = arith.constant 0 : i32
    %c0_i32_1 = arith.constant 0 : i32
    return %c0_i32, %c0_i32_0 : i32, i32
  }
  func.func @transform_6(%arg0: i32) -> (i32, i32) {
    %c0_i32 = arith.constant 0 : i32
    %c0_i32_0 = arith.constant 0 : i32
    %c0_i32_1 = arith.constant 0 : i32
    return %c0_i32, %c0_i32_0 : i32, i32
  }
  func.func @transform_7(%arg0: i32) -> (i32, i32) {
    %c0_i32 = arith.constant 0 : i32
    %c0_i32_0 = arith.constant 0 : i32
    %c0_i32_1 = arith.constant 0 : i32
    return %c0_i32, %c0_i32_0 : i32, i32
  }
  func.func @transform_8(%arg0: i32) -> (i32, i32) {
    %c0_i32 = arith.constant 0 : i32
    %c0_i32_0 = arith.constant 0 : i32
    %c0_i32_1 = arith.constant 0 : i32
    return %c0_i32, %c0_i32_0 : i32, i32
  }
  func.func @transform_9(%arg0: i32) -> (i32, i32) {
    %c0_i32 = arith.constant 0 : i32
    %c0_i32_0 = arith.constant 0 : i32
    %c0_i32_1 = arith.constant 0 : i32
    return %c0_i32, %c0_i32_0 : i32, i32
  }
  func.func @transform_10(%arg0: i32) -> (i32, i32) {
    %c0_i32 = arith.constant 0 : i32
    %c0_i32_0 = arith.constant 0 : i32
    %c0_i32_1 = arith.constant 0 : i32
    return %c0_i32, %c0_i32_0 : i32, i32
  }
  func.func @transform_11(%arg0: i32) -> (i32, i32) {
    %c0_i32 = arith.constant 0 : i32
    %c0_i32_0 = arith.constant 0 : i32
    %c0_i32_1 = arith.constant 0 : i32
    return %c0_i32, %c0_i32_0 : i32, i32
  }
  func.func @transform_12(%arg0: i32) -> (i32, i32) {
    %c0_i32 = arith.constant 0 : i32
    %c0_i32_0 = arith.constant 0 : i32
    %c0_i32_1 = arith.constant 0 : i32
    return %c0_i32, %c0_i32_0 : i32, i32
  }
  func.func @transform_13(%arg0: i32) -> (i32, i32, i32) {
    %c0_i32 = arith.constant 0 : i32
    %c0_i32_0 = arith.constant 0 : i32
    %c0_i32_1 = arith.constant 0 : i32
    return %arg0, %c0_i32, %c0_i32_0 : i32, i32, i32
  }
}

module attributes {stable_mosaic.version = 11 : i64} {
  func.func @block_kernel(%arg0: i32, %arg1: memref<1x16x128xf32, #tpu.memory_space<vmem>>, %arg2: memref<1x128xf32, #tpu.memory_space<vmem>>, %arg3: memref<1x128xf32, #tpu.memory_space<vmem>>, %arg4: memref<128x384xbf16, #tpu.memory_space<vmem>>, %arg5: memref<1x384xf32, #tpu.memory_space<vmem>>, %arg6: memref<128x128xbf16, #tpu.memory_space<vmem>>, %arg7: memref<1x128xf32, #tpu.memory_space<vmem>>, %arg8: memref<1x128xf32, #tpu.memory_space<vmem>>, %arg9: memref<1x128xf32, #tpu.memory_space<vmem>>, %arg10: memref<128x512xbf16, #tpu.memory_space<vmem>>, %arg11: memref<1x512xf32, #tpu.memory_space<vmem>>, %arg12: memref<512x128xbf16, #tpu.memory_space<vmem>>, %arg13: memref<1x128xf32, #tpu.memory_space<vmem>>, %arg14: memref<1x16x128xf32, #tpu.memory_space<vmem>>, %arg15: memref<1x16x128xbf16, #tpu.memory_space<vmem>>) attributes {dimension_semantics = [#tpu.dimension_semantics<parallel>], iteration_bounds = array<i64: 2>, scalar_prefetch = 0 : i64, scratch_operands = 1 : i64, tpu.core_type = #tpu.core_type<tc>, window_params = [{transform_indices = @transform_0, window_bounds = array<i64: 1, 16, 128>}, {pipeline_mode = #tpu.pipeline_mode<synchronous>, transform_indices = @transform_1, window_bounds = array<i64: 1, 128>}, {pipeline_mode = #tpu.pipeline_mode<synchronous>, transform_indices = @transform_2, window_bounds = array<i64: 1, 128>}, {pipeline_mode = #tpu.pipeline_mode<synchronous>, transform_indices = @transform_3, window_bounds = array<i64: 128, 384>}, {pipeline_mode = #tpu.pipeline_mode<synchronous>, transform_indices = @transform_4, window_bounds = array<i64: 1, 384>}, {pipeline_mode = #tpu.pipeline_mode<synchronous>, transform_indices = @transform_5, window_bounds = array<i64: 128, 128>}, {pipeline_mode = #tpu.pipeline_mode<synchronous>, transform_indices = @transform_6, window_bounds = array<i64: 1, 128>}, {pipeline_mode = #tpu.pipeline_mode<synchronous>, transform_indices = @transform_7, window_bounds = array<i64: 1, 128>}, {pipeline_mode = #tpu.pipeline_mode<synchronous>, transform_indices = @transform_8, window_bounds = array<i64: 1, 128>}, {pipeline_mode = #tpu.pipeline_mode<synchronous>, transform_indices = @transform_9, window_bounds = array<i64: 128, 512>}, {pipeline_mode = #tpu.pipeline_mode<synchronous>, transform_indices = @transform_10, window_bounds = array<i64: 1, 512>}, {pipeline_mode = #tpu.pipeline_mode<synchronous>, transform_indices = @transform_11, window_bounds = array<i64: 512, 128>}, {pipeline_mode = #tpu.pipeline_mode<synchronous>, transform_indices = @transform_12, window_bounds = array<i64: 1, 128>}, {transform_indices = @transform_13, window_bounds = array<i64: 1, 16, 128>}]} {
    %c0 = arith.constant 0 : index
    %c0_0 = arith.constant 0 : index
    %0 = vector.load %arg2[%c0, %c0_0] : memref<1x128xf32, #tpu.memory_space<vmem>>, vector<1x128xf32>
    %c0_1 = arith.constant 0 : index
    %c0_2 = arith.constant 0 : index
    %1 = vector.load %arg3[%c0_1, %c0_2] : memref<1x128xf32, #tpu.memory_space<vmem>>, vector<1x128xf32>
    %c0_3 = arith.constant 0 : index
    %c0_4 = arith.constant 0 : index
    %2 = vector.load %arg8[%c0_3, %c0_4] : memref<1x128xf32, #tpu.memory_space<vmem>>, vector<1x128xf32>
    %c0_5 = arith.constant 0 : index
    %c0_6 = arith.constant 0 : index
    %3 = vector.load %arg9[%c0_5, %c0_6] : memref<1x128xf32, #tpu.memory_space<vmem>>, vector<1x128xf32>
    %c0_7 = arith.constant 0 : index
    %c0_8 = arith.constant 0 : index
    %4 = vector.load %arg4[%c0_7, %c0_8] : memref<128x384xbf16, #tpu.memory_space<vmem>>, vector<128x384xbf16>
    %c0_9 = arith.constant 0 : index
    %c0_10 = arith.constant 0 : index
    %5 = vector.load %arg5[%c0_9, %c0_10] : memref<1x384xf32, #tpu.memory_space<vmem>>, vector<1x384xf32>
    %c0_11 = arith.constant 0 : index
    %c0_12 = arith.constant 0 : index
    %6 = vector.load %arg6[%c0_11, %c0_12] : memref<128x128xbf16, #tpu.memory_space<vmem>>, vector<128x128xbf16>
    %c0_13 = arith.constant 0 : index
    %c0_14 = arith.constant 0 : index
    %7 = vector.load %arg7[%c0_13, %c0_14] : memref<1x128xf32, #tpu.memory_space<vmem>>, vector<1x128xf32>
    %c0_15 = arith.constant 0 : index
    %c0_16 = arith.constant 0 : index
    %8 = vector.load %arg10[%c0_15, %c0_16] : memref<128x512xbf16, #tpu.memory_space<vmem>>, vector<128x512xbf16>
    %c0_17 = arith.constant 0 : index
    %c0_18 = arith.constant 0 : index
    %9 = vector.load %arg11[%c0_17, %c0_18] : memref<1x512xf32, #tpu.memory_space<vmem>>, vector<1x512xf32>
    %c0_19 = arith.constant 0 : index
    %c0_20 = arith.constant 0 : index
    %10 = vector.load %arg12[%c0_19, %c0_20] : memref<512x128xbf16, #tpu.memory_space<vmem>>, vector<512x128xbf16>
    %c0_21 = arith.constant 0 : index
    %c0_22 = arith.constant 0 : index
    %11 = vector.load %arg13[%c0_21, %c0_22] : memref<1x128xf32, #tpu.memory_space<vmem>>, vector<1x128xf32>
    %c0_23 = arith.constant 0 : index
    %c0_24 = arith.constant 0 : index
    %c0_25 = arith.constant 0 : index
    %12 = vector.load %arg1[%c0_23, %c0_24, %c0_25] : memref<1x16x128xf32, #tpu.memory_space<vmem>>, vector<1x16x128xf32>
    %13 = vector.shape_cast %12 : vector<1x16x128xf32> to vector<16x128xf32>
    %cst = arith.constant dense<0.000000e+00> : vector<16xf32>
    %14 = vector.multi_reduction <add>, %13, %cst [1] : vector<16x128xf32> to vector<16xf32>
    %15 = vector.shape_cast %14 : vector<16xf32> to vector<16x1xf32>
    %cst_26 = arith.constant 1.280000e+02 : f32
    %16 = vector.broadcast %cst_26 : f32 to vector<16x1xf32>
    %17 = arith.divf %15, %16 : vector<16x1xf32>
    %18 = vector.broadcast %17 : vector<16x1xf32> to vector<16x128xf32>
    %19 = arith.subf %13, %18 : vector<16x128xf32>
    %20 = arith.mulf %19, %19 : vector<16x128xf32>
    %cst_27 = arith.constant dense<0.000000e+00> : vector<16xf32>
    %21 = vector.multi_reduction <add>, %20, %cst_27 [1] : vector<16x128xf32> to vector<16xf32>
    %22 = vector.shape_cast %21 : vector<16xf32> to vector<16x1xf32>
    %cst_28 = arith.constant 1.280000e+02 : f32
    %23 = vector.broadcast %cst_28 : f32 to vector<16x1xf32>
    %24 = arith.divf %22, %23 : vector<16x1xf32>
    %cst_29 = arith.constant 9.99999997E-7 : f32
    %25 = vector.broadcast %cst_29 : f32 to vector<16x1xf32>
    %26 = arith.addf %24, %25 : vector<16x1xf32>
    %27 = math.rsqrt %26 : vector<16x1xf32>
    %28 = vector.broadcast %27 : vector<16x1xf32> to vector<16x128xf32>
    %29 = arith.mulf %19, %28 : vector<16x128xf32>
    %30 = vector.broadcast %0 : vector<1x128xf32> to vector<16x128xf32>
    %31 = arith.mulf %29, %30 : vector<16x128xf32>
    %32 = vector.broadcast %1 : vector<1x128xf32> to vector<16x128xf32>
    %33 = arith.addf %31, %32 : vector<16x128xf32>
    %34 = arith.truncf %33 : vector<16x128xf32> to vector<16x128xbf16>
    %cst_30 = arith.constant dense<0.000000e+00> : vector<16x384xf32>
    %35 = tpu.matmul %34, %4, %cst_30 {dimension_numbers = #tpu.dot_dimension_numbers<[1], [0], [0], [1], [0, 0, 1, 1], [], []>} : vector<16x128xbf16>, vector<128x384xbf16>, vector<16x384xf32> -> vector<16x384xf32>
    %36 = vector.broadcast %5 : vector<1x384xf32> to vector<16x384xf32>
    %37 = arith.addf %35, %36 : vector<16x384xf32>
    %38 = vector.extract_strided_slice %37 {offsets = [0, 0], sizes = [16, 128], strides = [1, 1]} : vector<16x384xf32> to vector<16x128xf32>
    %39 = arith.truncf %38 : vector<16x128xf32> to vector<16x128xbf16>
    %40 = vector.shape_cast %39 : vector<16x128xbf16> to vector<1x16x128xbf16>
    %41 = vector.extract_strided_slice %37 {offsets = [0, 128], sizes = [16, 128], strides = [1, 1]} : vector<16x384xf32> to vector<16x128xf32>
    %42 = arith.truncf %41 : vector<16x128xf32> to vector<16x128xbf16>
    %43 = vector.shape_cast %42 : vector<16x128xbf16> to vector<1x16x128xbf16>
    %44 = vector.extract_strided_slice %37 {offsets = [0, 256], sizes = [16, 128], strides = [1, 1]} : vector<16x384xf32> to vector<16x128xf32>
    %45 = arith.truncf %44 : vector<16x128xf32> to vector<16x128xbf16>
    %46 = vector.shape_cast %45 : vector<16x128xbf16> to vector<1x16x128xbf16>
    %47 = vector.extract_strided_slice %40 {offsets = [0, 0, 0], sizes = [1, 16, 32], strides = [1, 1, 1]} : vector<1x16x128xbf16> to vector<1x16x32xbf16>
    %48 = vector.extract_strided_slice %43 {offsets = [0, 0, 0], sizes = [1, 16, 32], strides = [1, 1, 1]} : vector<1x16x128xbf16> to vector<1x16x32xbf16>
    %49 = vector.extract_strided_slice %46 {offsets = [0, 0, 0], sizes = [1, 16, 32], strides = [1, 1, 1]} : vector<1x16x128xbf16> to vector<1x16x32xbf16>
    "tpu.trace_start"() <{level = 10 : i32, message = "bnd,bmd->bnm"}> : () -> ()
    %cst_31 = arith.constant dense<0.000000e+00> : vector<1x16x16xf32>
    %50 = tpu.matmul %47, %48, %cst_31 {dimension_numbers = #tpu.dot_dimension_numbers<[2], [2], [1], [1], [0, 0, 0, 1, 1, 1], [0], [0]>} : vector<1x16x32xbf16>, vector<1x16x32xbf16>, vector<1x16x16xf32> -> vector<1x16x16xf32>
    "tpu.trace_stop"() : () -> ()
    %cst_32 = arith.constant dense<0xFF800000> : vector<1x16xf32>
    %51 = vector.multi_reduction <maximumf>, %50, %cst_32 [2] : vector<1x16x16xf32> to vector<1x16xf32>
    %52 = vector.shape_cast %51 : vector<1x16xf32> to vector<1x16x1xf32>
    %53 = vector.broadcast %52 : vector<1x16x1xf32> to vector<1x16x16xf32>
    %54 = arith.subf %50, %53 : vector<1x16x16xf32>
    %55 = math.exp %54 : vector<1x16x16xf32>
    %cst_33 = arith.constant dense<0.000000e+00> : vector<1x16xf32>
    %56 = vector.multi_reduction <add>, %55, %cst_33 [2] : vector<1x16x16xf32> to vector<1x16xf32>
    %57 = vector.shape_cast %56 : vector<1x16xf32> to vector<1x16x1xf32>
    %58 = tpu.reciprocal %57 {approx = true} : vector<1x16x1xf32> -> vector<1x16x1xf32>
    %59 = vector.broadcast %58 : vector<1x16x1xf32> to vector<1x16x16xf32>
    %60 = arith.mulf %55, %59 : vector<1x16x16xf32>
    %61 = arith.truncf %60 : vector<1x16x16xf32> to vector<1x16x16xbf16>
    "tpu.trace_start"() <{level = 10 : i32, message = "bnm,bmd->bnd"}> : () -> ()
    %cst_34 = arith.constant dense<0.000000e+00> : vector<1x16x32xf32>
    %62 = tpu.matmul %61, %49, %cst_34 {dimension_numbers = #tpu.dot_dimension_numbers<[2], [1], [1], [2], [0, 0, 0, 1, 1, 2], [0], [0]>} : vector<1x16x16xbf16>, vector<1x16x32xbf16>, vector<1x16x32xf32> -> vector<1x16x32xf32>
    "tpu.trace_stop"() : () -> ()
    %63 = arith.truncf %62 : vector<1x16x32xf32> to vector<1x16x32xbf16>
    %c0_35 = arith.constant 0 : index
    %c0_36 = arith.constant 0 : index
    %c0_37 = arith.constant 0 : index
    %64 = vector.load %arg15[%c0_35, %c0_36, %c0_37] : memref<1x16x128xbf16, #tpu.memory_space<vmem>>, vector<1x16x32xbf16>
    tpu.vector_store %arg15[%c0_35, %c0_36, %c0_37], %63 {strides = array<i32>} : memref<1x16x128xbf16, #tpu.memory_space<vmem>>, vector<1x16x32xbf16>,
    %65 = vector.extract_strided_slice %40 {offsets = [0, 0, 32], sizes = [1, 16, 32], strides = [1, 1, 1]} : vector<1x16x128xbf16> to vector<1x16x32xbf16>
    %66 = vector.extract_strided_slice %43 {offsets = [0, 0, 32], sizes = [1, 16, 32], strides = [1, 1, 1]} : vector<1x16x128xbf16> to vector<1x16x32xbf16>
    %67 = vector.extract_strided_slice %46 {offsets = [0, 0, 32], sizes = [1, 16, 32], strides = [1, 1, 1]} : vector<1x16x128xbf16> to vector<1x16x32xbf16>
    "tpu.trace_start"() <{level = 10 : i32, message = "bnd,bmd->bnm"}> : () -> ()
    %cst_38 = arith.constant dense<0.000000e+00> : vector<1x16x16xf32>
    %68 = tpu.matmul %65, %66, %cst_38 {dimension_numbers = #tpu.dot_dimension_numbers<[2], [2], [1], [1], [0, 0, 0, 1, 1, 1], [0], [0]>} : vector<1x16x32xbf16>, vector<1x16x32xbf16>, vector<1x16x16xf32> -> vector<1x16x16xf32>
    "tpu.trace_stop"() : () -> ()
    %cst_39 = arith.constant dense<0xFF800000> : vector<1x16xf32>
    %69 = vector.multi_reduction <maximumf>, %68, %cst_39 [2] : vector<1x16x16xf32> to vector<1x16xf32>
    %70 = vector.shape_cast %69 : vector<1x16xf32> to vector<1x16x1xf32>
    %71 = vector.broadcast %70 : vector<1x16x1xf32> to vector<1x16x16xf32>
    %72 = arith.subf %68, %71 : vector<1x16x16xf32>
    %73 = math.exp %72 : vector<1x16x16xf32>
    %cst_40 = arith.constant dense<0.000000e+00> : vector<1x16xf32>
    %74 = vector.multi_reduction <add>, %73, %cst_40 [2] : vector<1x16x16xf32> to vector<1x16xf32>
    %75 = vector.shape_cast %74 : vector<1x16xf32> to vector<1x16x1xf32>
    %76 = tpu.reciprocal %75 {approx = true} : vector<1x16x1xf32> -> vector<1x16x1xf32>
    %77 = vector.broadcast %76 : vector<1x16x1xf32> to vector<1x16x16xf32>
    %78 = arith.mulf %73, %77 : vector<1x16x16xf32>
    %79 = arith.truncf %78 : vector<1x16x16xf32> to vector<1x16x16xbf16>
    "tpu.trace_start"() <{level = 10 : i32, message = "bnm,bmd->bnd"}> : () -> ()
    %cst_41 = arith.constant dense<0.000000e+00> : vector<1x16x32xf32>
    %80 = tpu.matmul %79, %67, %cst_41 {dimension_numbers = #tpu.dot_dimension_numbers<[2], [1], [1], [2], [0, 0, 0, 1, 1, 2], [0], [0]>} : vector<1x16x16xbf16>, vector<1x16x32xbf16>, vector<1x16x32xf32> -> vector<1x16x32xf32>
    "tpu.trace_stop"() : () -> ()
    %81 = arith.truncf %80 : vector<1x16x32xf32> to vector<1x16x32xbf16>
    %c0_42 = arith.constant 0 : index
    %c0_43 = arith.constant 0 : index
    %c32 = arith.constant 32 : index
    %82 = vector.load %arg15[%c0_42, %c0_43, %c32] : memref<1x16x128xbf16, #tpu.memory_space<vmem>>, vector<1x16x32xbf16>
    tpu.vector_store %arg15[%c0_42, %c0_43, %c32], %81 {strides = array<i32>} : memref<1x16x128xbf16, #tpu.memory_space<vmem>>, vector<1x16x32xbf16>,
    %83 = vector.extract_strided_slice %40 {offsets = [0, 0, 64], sizes = [1, 16, 32], strides = [1, 1, 1]} : vector<1x16x128xbf16> to vector<1x16x32xbf16>
    %84 = vector.extract_strided_slice %43 {offsets = [0, 0, 64], sizes = [1, 16, 32], strides = [1, 1, 1]} : vector<1x16x128xbf16> to vector<1x16x32xbf16>
    %85 = vector.extract_strided_slice %46 {offsets = [0, 0, 64], sizes = [1, 16, 32], strides = [1, 1, 1]} : vector<1x16x128xbf16> to vector<1x16x32xbf16>
    "tpu.trace_start"() <{level = 10 : i32, message = "bnd,bmd->bnm"}> : () -> ()
    %cst_44 = arith.constant dense<0.000000e+00> : vector<1x16x16xf32>
    %86 = tpu.matmul %83, %84, %cst_44 {dimension_numbers = #tpu.dot_dimension_numbers<[2], [2], [1], [1], [0, 0, 0, 1, 1, 1], [0], [0]>} : vector<1x16x32xbf16>, vector<1x16x32xbf16>, vector<1x16x16xf32> -> vector<1x16x16xf32>
    "tpu.trace_stop"() : () -> ()
    %cst_45 = arith.constant dense<0xFF800000> : vector<1x16xf32>
    %87 = vector.multi_reduction <maximumf>, %86, %cst_45 [2] : vector<1x16x16xf32> to vector<1x16xf32>
    %88 = vector.shape_cast %87 : vector<1x16xf32> to vector<1x16x1xf32>
    %89 = vector.broadcast %88 : vector<1x16x1xf32> to vector<1x16x16xf32>
    %90 = arith.subf %86, %89 : vector<1x16x16xf32>
    %91 = math.exp %90 : vector<1x16x16xf32>
    %cst_46 = arith.constant dense<0.000000e+00> : vector<1x16xf32>
    %92 = vector.multi_reduction <add>, %91, %cst_46 [2] : vector<1x16x16xf32> to vector<1x16xf32>
    %93 = vector.shape_cast %92 : vector<1x16xf32> to vector<1x16x1xf32>
    %94 = tpu.reciprocal %93 {approx = true} : vector<1x16x1xf32> -> vector<1x16x1xf32>
    %95 = vector.broadcast %94 : vector<1x16x1xf32> to vector<1x16x16xf32>
    %96 = arith.mulf %91, %95 : vector<1x16x16xf32>
    %97 = arith.truncf %96 : vector<1x16x16xf32> to vector<1x16x16xbf16>
    "tpu.trace_start"() <{level = 10 : i32, message = "bnm,bmd->bnd"}> : () -> ()
    %cst_47 = arith.constant dense<0.000000e+00> : vector<1x16x32xf32>
    %98 = tpu.matmul %97, %85, %cst_47 {dimension_numbers = #tpu.dot_dimension_numbers<[2], [1], [1], [2], [0, 0, 0, 1, 1, 2], [0], [0]>} : vector<1x16x16xbf16>, vector<1x16x32xbf16>, vector<1x16x32xf32> -> vector<1x16x32xf32>
    "tpu.trace_stop"() : () -> ()
    %99 = arith.truncf %98 : vector<1x16x32xf32> to vector<1x16x32xbf16>
    %c0_48 = arith.constant 0 : index
    %c0_49 = arith.constant 0 : index
    %c64 = arith.constant 64 : index
    %100 = vector.load %arg15[%c0_48, %c0_49, %c64] : memref<1x16x128xbf16, #tpu.memory_space<vmem>>, vector<1x16x32xbf16>
    tpu.vector_store %arg15[%c0_48, %c0_49, %c64], %99 {strides = array<i32>} : memref<1x16x128xbf16, #tpu.memory_space<vmem>>, vector<1x16x32xbf16>,
    %101 = vector.extract_strided_slice %40 {offsets = [0, 0, 96], sizes = [1, 16, 32], strides = [1, 1, 1]} : vector<1x16x128xbf16> to vector<1x16x32xbf16>
    %102 = vector.extract_strided_slice %43 {offsets = [0, 0, 96], sizes = [1, 16, 32], strides = [1, 1, 1]} : vector<1x16x128xbf16> to vector<1x16x32xbf16>
    %103 = vector.extract_strided_slice %46 {offsets = [0, 0, 96], sizes = [1, 16, 32], strides = [1, 1, 1]} : vector<1x16x128xbf16> to vector<1x16x32xbf16>
    "tpu.trace_start"() <{level = 10 : i32, message = "bnd,bmd->bnm"}> : () -> ()
    %cst_50 = arith.constant dense<0.000000e+00> : vector<1x16x16xf32>
    %104 = tpu.matmul %101, %102, %cst_50 {dimension_numbers = #tpu.dot_dimension_numbers<[2], [2], [1], [1], [0, 0, 0, 1, 1, 1], [0], [0]>} : vector<1x16x32xbf16>, vector<1x16x32xbf16>, vector<1x16x16xf32> -> vector<1x16x16xf32>
    "tpu.trace_stop"() : () -> ()
    %cst_51 = arith.constant dense<0xFF800000> : vector<1x16xf32>
    %105 = vector.multi_reduction <maximumf>, %104, %cst_51 [2] : vector<1x16x16xf32> to vector<1x16xf32>
    %106 = vector.shape_cast %105 : vector<1x16xf32> to vector<1x16x1xf32>
    %107 = vector.broadcast %106 : vector<1x16x1xf32> to vector<1x16x16xf32>
    %108 = arith.subf %104, %107 : vector<1x16x16xf32>
    %109 = math.exp %108 : vector<1x16x16xf32>
    %cst_52 = arith.constant dense<0.000000e+00> : vector<1x16xf32>
    %110 = vector.multi_reduction <add>, %109, %cst_52 [2] : vector<1x16x16xf32> to vector<1x16xf32>
    %111 = vector.shape_cast %110 : vector<1x16xf32> to vector<1x16x1xf32>
    %112 = tpu.reciprocal %111 {approx = true} : vector<1x16x1xf32> -> vector<1x16x1xf32>
    %113 = vector.broadcast %112 : vector<1x16x1xf32> to vector<1x16x16xf32>
    %114 = arith.mulf %109, %113 : vector<1x16x16xf32>
    %115 = arith.truncf %114 : vector<1x16x16xf32> to vector<1x16x16xbf16>
    "tpu.trace_start"() <{level = 10 : i32, message = "bnm,bmd->bnd"}> : () -> ()
    %cst_53 = arith.constant dense<0.000000e+00> : vector<1x16x32xf32>
    %116 = tpu.matmul %115, %103, %cst_53 {dimension_numbers = #tpu.dot_dimension_numbers<[2], [1], [1], [2], [0, 0, 0, 1, 1, 2], [0], [0]>} : vector<1x16x16xbf16>, vector<1x16x32xbf16>, vector<1x16x32xf32> -> vector<1x16x32xf32>
    "tpu.trace_stop"() : () -> ()
    %117 = arith.truncf %116 : vector<1x16x32xf32> to vector<1x16x32xbf16>
    %c0_54 = arith.constant 0 : index
    %c0_55 = arith.constant 0 : index
    %c96 = arith.constant 96 : index
    %118 = vector.load %arg15[%c0_54, %c0_55, %c96] : memref<1x16x128xbf16, #tpu.memory_space<vmem>>, vector<1x16x32xbf16>
    tpu.vector_store %arg15[%c0_54, %c0_55, %c96], %117 {strides = array<i32>} : memref<1x16x128xbf16, #tpu.memory_space<vmem>>, vector<1x16x32xbf16>,
    %c0_56 = arith.constant 0 : index
    %c0_57 = arith.constant 0 : index
    %c0_58 = arith.constant 0 : index
    %119 = vector.load %arg15[%c0_56, %c0_57, %c0_58] : memref<1x16x128xbf16, #tpu.memory_space<vmem>>, vector<1x16x128xbf16>
    %120 = vector.shape_cast %119 : vector<1x16x128xbf16> to vector<16x128xbf16>
    %cst_59 = arith.constant dense<0.000000e+00> : vector<16x128xf32>
    %121 = tpu.matmul %120, %6, %cst_59 {dimension_numbers = #tpu.dot_dimension_numbers<[1], [0], [0], [1], [0, 0, 1, 1], [], []>} : vector<16x128xbf16>, vector<128x128xbf16>, vector<16x128xf32> -> vector<16x128xf32>
    %122 = vector.broadcast %7 : vector<1x128xf32> to vector<16x128xf32>
    %123 = arith.addf %121, %122 : vector<16x128xf32>
    %124 = arith.addf %13, %123 : vector<16x128xf32>
    %cst_60 = arith.constant dense<0.000000e+00> : vector<16xf32>
    %125 = vector.multi_reduction <add>, %124, %cst_60 [1] : vector<16x128xf32> to vector<16xf32>
    %126 = vector.shape_cast %125 : vector<16xf32> to vector<16x1xf32>
    %cst_61 = arith.constant 1.280000e+02 : f32
    %127 = vector.broadcast %cst_61 : f32 to vector<16x1xf32>
    %128 = arith.divf %126, %127 : vector<16x1xf32>
    %129 = vector.broadcast %128 : vector<16x1xf32> to vector<16x128xf32>
    %130 = arith.subf %124, %129 : vector<16x128xf32>
    %131 = arith.mulf %130, %130 : vector<16x128xf32>
    %cst_62 = arith.constant dense<0.000000e+00> : vector<16xf32>
    %132 = vector.multi_reduction <add>, %131, %cst_62 [1] : vector<16x128xf32> to vector<16xf32>
    %133 = vector.shape_cast %132 : vector<16xf32> to vector<16x1xf32>
    %cst_63 = arith.constant 1.280000e+02 : f32
    %134 = vector.broadcast %cst_63 : f32 to vector<16x1xf32>
    %135 = arith.divf %133, %134 : vector<16x1xf32>
    %cst_64 = arith.constant 9.99999997E-7 : f32
    %136 = vector.broadcast %cst_64 : f32 to vector<16x1xf32>
    %137 = arith.addf %135, %136 : vector<16x1xf32>
    %138 = math.rsqrt %137 : vector<16x1xf32>
    %139 = vector.broadcast %138 : vector<16x1xf32> to vector<16x128xf32>
    %140 = arith.mulf %130, %139 : vector<16x128xf32>
    %141 = vector.broadcast %2 : vector<1x128xf32> to vector<16x128xf32>
    %142 = arith.mulf %140, %141 : vector<16x128xf32>
    %143 = vector.broadcast %3 : vector<1x128xf32> to vector<16x128xf32>
    %144 = arith.addf %142, %143 : vector<16x128xf32>
    %145 = arith.truncf %144 : vector<16x128xf32> to vector<16x128xbf16>
    %cst_65 = arith.constant dense<0.000000e+00> : vector<16x512xf32>
    %146 = tpu.matmul %145, %8, %cst_65 {dimension_numbers = #tpu.dot_dimension_numbers<[1], [0], [0], [1], [0, 0, 1, 1], [], []>} : vector<16x128xbf16>, vector<128x512xbf16>, vector<16x512xf32> -> vector<16x512xf32>
    %147 = vector.broadcast %9 : vector<1x512xf32> to vector<16x512xf32>
    %148 = arith.addf %146, %147 : vector<16x512xf32>
    %cst_66 = arith.constant 5.000000e-01 : f32
    %149 = vector.broadcast %cst_66 : f32 to vector<16x512xf32>
    %150 = arith.mulf %149, %148 : vector<16x512xf32>
    %cst_67 = arith.constant 0.707106769 : f32
    %151 = vector.broadcast %cst_67 : f32 to vector<16x512xf32>
    %152 = arith.mulf %148, %151 : vector<16x512xf32>
    %153 = math.erf %152 : vector<16x512xf32>
    %cst_68 = arith.constant 1.000000e+00 : f32
    %154 = vector.broadcast %cst_68 : f32 to vector<16x512xf32>
    %155 = arith.addf %154, %153 : vector<16x512xf32>
    %156 = arith.mulf %150, %155 : vector<16x512xf32>
    %157 = arith.truncf %156 : vector<16x512xf32> to vector<16x512xbf16>
    %cst_69 = arith.constant dense<0.000000e+00> : vector<16x128xf32>
    %158 = tpu.matmul %157, %10, %cst_69 {dimension_numbers = #tpu.dot_dimension_numbers<[1], [0], [0], [1], [0, 0, 1, 1], [], []>} : vector<16x512xbf16>, vector<512x128xbf16>, vector<16x128xf32> -> vector<16x128xf32>
    %159 = vector.broadcast %11 : vector<1x128xf32> to vector<16x128xf32>
    %160 = arith.addf %158, %159 : vector<16x128xf32>
    %161 = arith.addf %124, %160 : vector<16x128xf32>
    %162 = vector.shape_cast %161 : vector<16x128xf32> to vector<1x16x128xf32>
    %c0_70 = arith.constant 0 : index
    %c0_71 = arith.constant 0 : index
    %c0_72 = arith.constant 0 : index
    %163 = vector.load %arg14[%c0_70, %c0_71, %c0_72] : memref<1x16x128xf32, #tpu.memory_space<vmem>>, vector<1x16x128xf32>
    tpu.vector_store %arg14[%c0_70, %c0_71, %c0_72], %162 {strides = array<i32>} : memref<1x16x128xf32, #tpu.memory_space<vmem>>, vector<1x16x128xf32>,
    return
  }
  func.func @transform_0(%arg0: i32) -> (i32, i32, i32) {
    %c0_i32 = arith.constant 0 : i32
    %c0_i32_0 = arith.constant 0 : i32
    %c0_i32_1 = arith.constant 0 : i32
    return %arg0, %c0_i32, %c0_i32_0 : i32, i32, i32
  }
  func.func @transform_1(%arg0: i32) -> (i32, i32) {
    %c0_i32 = arith.constant 0 : i32
    %c0_i32_0 = arith.constant 0 : i32
    %c0_i32_1 = arith.constant 0 : i32
    return %c0_i32, %c0_i32_0 : i32, i32
  }
  func.func @transform_2(%arg0: i32) -> (i32, i32) {
    %c0_i32 = arith.constant 0 : i32
    %c0_i32_0 = arith.constant 0 : i32
    %c0_i32_1 = arith.constant 0 : i32
    return %c0_i32, %c0_i32_0 : i32, i32
  }
  func.func @transform_3(%arg0: i32) -> (i32, i32) {
    %c0_i32 = arith.constant 0 : i32
    %c0_i32_0 = arith.constant 0 : i32
    %c0_i32_1 = arith.constant 0 : i32
    return %c0_i32, %c0_i32_0 : i32, i32
  }
  func.func @transform_4(%arg0: i32) -> (i32, i32) {
    %c0_i32 = arith.constant 0 : i32
    %c0_i32_0 = arith.constant 0 : i32
    %c0_i32_1 = arith.constant 0 : i32
    return %c0_i32, %c0_i32_0 : i32, i32
  }
  func.func @transform_5(%arg0: i32) -> (i32, i32) {
    %c0_i32 = arith.constant 0 : i32
    %c0_i32_0 = arith.constant 0 : i32
    %c0_i32_1 = arith.constant 0 : i32
    return %c0_i32, %c0_i32_0 : i32, i32
  }
  func.func @transform_6(%arg0: i32) -> (i32, i32) {
    %c0_i32 = arith.constant 0 : i32
    %c0_i32_0 = arith.constant 0 : i32
    %c0_i32_1 = arith.constant 0 : i32
    return %c0_i32, %c0_i32_0 : i32, i32
  }
  func.func @transform_7(%arg0: i32) -> (i32, i32) {
    %c0_i32 = arith.constant 0 : i32
    %c0_i32_0 = arith.constant 0 : i32
    %c0_i32_1 = arith.constant 0 : i32
    return %c0_i32, %c0_i32_0 : i32, i32
  }
  func.func @transform_8(%arg0: i32) -> (i32, i32) {
    %c0_i32 = arith.constant 0 : i32
    %c0_i32_0 = arith.constant 0 : i32
    %c0_i32_1 = arith.constant 0 : i32
    return %c0_i32, %c0_i32_0 : i32, i32
  }
  func.func @transform_9(%arg0: i32) -> (i32, i32) {
    %c0_i32 = arith.constant 0 : i32
    %c0_i32_0 = arith.constant 0 : i32
    %c0_i32_1 = arith.constant 0 : i32
    return %c0_i32, %c0_i32_0 : i32, i32
  }
  func.func @transform_10(%arg0: i32) -> (i32, i32) {
    %c0_i32 = arith.constant 0 : i32
    %c0_i32_0 = arith.constant 0 : i32
    %c0_i32_1 = arith.constant 0 : i32
    return %c0_i32, %c0_i32_0 : i32, i32
  }
  func.func @transform_11(%arg0: i32) -> (i32, i32) {
    %c0_i32 = arith.constant 0 : i32
    %c0_i32_0 = arith.constant 0 : i32
    %c0_i32_1 = arith.constant 0 : i32
    return %c0_i32, %c0_i32_0 : i32, i32
  }
  func.func @transform_12(%arg0: i32) -> (i32, i32) {
    %c0_i32 = arith.constant 0 : i32
    %c0_i32_0 = arith.constant 0 : i32
    %c0_i32_1 = arith.constant 0 : i32
    return %c0_i32, %c0_i32_0 : i32, i32
  }
  func.func @transform_13(%arg0: i32) -> (i32, i32, i32) {
    %c0_i32 = arith.constant 0 : i32
    %c0_i32_0 = arith.constant 0 : i32
    %c0_i32_1 = arith.constant 0 : i32
    return %arg0, %c0_i32, %c0_i32_0 : i32, i32, i32
  }
}

</mosaic_0001>

<llo_original>
// kernel: tpu_custom_call.1
$region0: #{tpu_custom_call.1}
  #allocation0 [shape = 'u32[]', space=smem, size = 0x4, offset = 0x4, fixed_abs, tag = 'smem constant byte address 0x4 - core index']
  #allocation1 [shape = 'u32[72,128]{1,0:T(1,128)}', space=vmem, size = 0x9000, scoped, tag = 'internal scratch']
  #allocation2 [shape = 'bf16[1,16,128]{2,1,0:T(8,128)(2,1)}', space=vmem, size = 0x1000, scoped, tag = 'scratch operand']
  %s0 = inlined_call_operand.hbm [shape: f32[2,16,128], index: 0, kind: input, shape index: {}]
  %s1 = inlined_call_operand.hbm [shape: f32[1,128], index: 1, kind: input, shape index: {}]
  %s2 = inlined_call_operand.hbm [shape: f32[1,128], index: 2, kind: input, shape index: {}]
  %s3 = inlined_call_operand.hbm [shape: bf16[128,384], index: 3, kind: input, shape index: {}]
  %s4 = inlined_call_operand.vmem [shape: f32[1,384], index: 4, kind: input, shape index: {}]
  %s5 = inlined_call_operand.hbm [shape: bf16[128,128], index: 5, kind: input, shape index: {}]
  %s6 = inlined_call_operand.hbm [shape: f32[1,128], index: 6, kind: input, shape index: {}]
  %s7 = inlined_call_operand.hbm [shape: f32[1,128], index: 7, kind: input, shape index: {}]
  %s8 = inlined_call_operand.hbm [shape: f32[1,128], index: 8, kind: input, shape index: {}]
  %s9 = inlined_call_operand.hbm [shape: bf16[128,512], index: 9, kind: input, shape index: {}]
  %s10 = inlined_call_operand.vmem [shape: f32[1,512], index: 10, kind: input, shape index: {}]
  %s11 = inlined_call_operand.hbm [shape: bf16[512,128], index: 11, kind: input, shape index: {}]
  %s12 = inlined_call_operand.vmem [shape: f32[1,128], index: 12, kind: input, shape index: {}]
  %s13 = inlined_call_operand.hbm [shape: f32[2,16,128], index: 13, kind: output, shape index: {}]
  %s14 = sld [smem:[#allocation0]]
  $region125: #{tpu_custom_call.1} parent=0
    _
  %s16 = ssub.s32 1, %s14
  %s17 = scalar_select 0, %s16, %s14
  $region1: #{tpu_custom_call.1} parent=0
    #allocation3 [shape = 'u8[16384]{0}', space=vmem, size = 0x4000, scoped, tag = 'input window, operand 0']
    #allocation4 [shape = 's32[2]{0}', space=sflag, size = 0x8, scoped, tag = 'scoped memory for tpu_custom_call.1']
    #allocation5 [shape = 's32[2]{0}', space=sflag, size = 0x8, scoped, tag = 'scoped memory for tpu_custom_call.1']
    #allocation6 [shape = 'u8[512]{0}', space=vmem, size = 0x400, scoped, tag = 'input window, operand 1, single buffered']
    #allocation7 [shape = 's32[1]{0}', space=sflag, size = 0x4, scoped, tag = 'scoped memory for tpu_custom_call.1']
    #allocation8 [shape = 'u8[512]{0}', space=vmem, size = 0x400, scoped, tag = 'input window, operand 2, single buffered']
    #allocation9 [shape = 'u8[98304]{0}', space=vmem, size = 0x18000, scoped, tag = 'input window, operand 3, single buffered']
    #allocation10 [shape = 's32[1]{0}', space=sflag, size = 0x4, scoped, tag = 'scoped memory for tpu_custom_call.1']
    #allocation11 [shape = 'u8[32768]{0}', space=vmem, size = 0x8000, scoped, tag = 'input window, operand 5, single buffered']
    #allocation12 [shape = 'u8[512]{0}', space=vmem, size = 0x400, scoped, tag = 'input window, operand 6, single buffered']
    #allocation13 [shape = 's32[1]{0}', space=sflag, size = 0x4, scoped, tag = 'scoped memory for tpu_custom_call.1']
    #allocation14 [shape = 'u8[512]{0}', space=vmem, size = 0x400, scoped, tag = 'input window, operand 7, single buffered']
    #allocation15 [shape = 'u8[512]{0}', space=vmem, size = 0x400, scoped, tag = 'input window, operand 8, single buffered']
    #allocation16 [shape = 's32[1]{0}', space=sflag, size = 0x4, scoped, tag = 'scoped memory for tpu_custom_call.1']
    #allocation17 [shape = 'u8[131072]{0}', space=vmem, size = 0x20000, scoped, tag = 'input window, operand 9, single buffered']
    #allocation18 [shape = 'u8[131072]{0}', space=vmem, size = 0x20000, scoped, tag = 'input window, operand 11, single buffered']
    #allocation19 [shape = 's32[1]{0}', space=sflag, size = 0x4, scoped, tag = 'scoped memory for tpu_custom_call.1']
    #allocation20 [shape = 'u8[16384]{0}', space=vmem, size = 0x4000, scoped, tag = 'output window, operand 0']
    %18 = vsyncpa [#allocation4], 0
    %s19 = scalar_lea.sflag [#allocation4], 1
    %20 = vsyncpa %s19, 0
    %21 = vsyncpa [#allocation7], 0
    %22 = vsyncpa [#allocation10], 0
    %23 = vsyncpa [#allocation13], 0
    %24 = vsyncpa [#allocation16], 0
    %25 = vsyncpa [#allocation19], 0
    %26 = vsyncpa [#allocation5], 0
    %s27 = scalar_lea.sflag [#allocation5], 1
    %28 = vsyncpa %s27, 0
    loop: start=0, step=1, limit=4
    $region2: #{tpu_custom_call.1} parent=1 // loop_pre_header
      _
    $region3: #{tpu_custom_call.1} parent=1 // loop_header
      %s30 = sphi 0, %s34
      %p31 = scmp.ge.s32.totalorder %s30, 4
      %s40 = sphi 0, %s42
      %s43 = sphi 0, %s40
      %s44 = sphi 0, %s43
      %s60 = sphi 0, %s44
      %s64 = sphi 0, %s64
      %s66 = sphi 0, %s64
      %s67 = sphi 0, %s66
      %s81 = sphi 0, %s67
      %s85 = sphi 0, %s85
      %s87 = sphi 0, %s85
      %s88 = sphi 0, %s87
      %s102 = sphi 0, %s88
      %s106 = sphi 0, %s106
      %s108 = sphi 0, %s106
      %s109 = sphi 0, %s108
      %s123 = sphi 0, %s109
      %s127 = sphi 0, %s127
      %s129 = sphi 0, %s127
      %s130 = sphi 0, %s129
      %s144 = sphi 0, %s130
      %s148 = sphi 0, %s148
      %s150 = sphi 0, %s148
      %s151 = sphi 0, %s150
      %s165 = sphi 0, %s151
      %s169 = sphi 0, %s169
      %s171 = sphi 0, %s169
      %s172 = sphi 0, %s171
      %s186 = sphi 0, %s172
      %s190 = sphi 0, %s190
      %s192 = sphi 0, %s190
      %s193 = sphi 0, %s192
      %s207 = sphi 0, %s193
      %s211 = sphi 0, %s211
      %s213 = sphi 0, %s211
      %s214 = sphi 0, %s213
      %s228 = sphi 0, %s214
      %s232 = sphi 0, %s232
      %s234 = sphi 0, %s232
      %s235 = sphi 0, %s234
      %s249 = sphi 0, %s235
      %s253 = sphi 0, %s253
      %s255 = sphi 0, %s253
      %s256 = sphi 0, %s255
      %s270 = sphi 0, %s256
      %s274 = sphi 0, %s274
      %s276 = sphi 0, %s274
      %s277 = sphi 0, %s276
      %s291 = sphi 0, %s277
      %s295 = sphi 0, %s295
      %s297 = sphi 0, %s295
      %s298 = sphi 0, %s297
      %s312 = sphi 0, %s298
      %s318 = sphi 0, %s320
      %s321 = sphi 0, %s318
      %s322 = sphi 0, %s321
      %s338 = sphi 0, %s322
    $region4: #{tpu_custom_call.1} parent=1 // loop_header_branch
      %33 = sbr.rel (%p31) target = $region8
    $region5: #{tpu_custom_call.1} parent=1 // loop_body
      %s35 = ssub.s32 %s30, 1
      %s36 = ssub.s32 %s30, 2
      %s37 = sadd.s32 %s30, 1
      %s38 = ssub.s32 %s30, %s37
      %p39 = scmp.eq.s32.totalorder %s38, 0
      %s41 = sadd.s32 %s40, 1
      %s42 = scalar_select %p39, %s40, %s41
      %p45 = pneg %p39
      %p46 = scmp.eq.s32.totalorder %s30, 1
      %p47 = por %p45, %p46
      %p48 = scmp.ne.s32.totalorder %s40, %s43
      %p49 = scmp.eq.s32.totalorder %s30, 0
      %p50 = por %p48, %p49
      %p51 = scmp.ne.s32.totalorder %s40, %s43
      %p52 = scmp.eq.s32.totalorder %s35, 1
      %p53 = por %p51, %p52
      %p54 = scmp.ne.s32.totalorder %s43, %s44
      %p55 = scmp.eq.s32.totalorder %s35, 0
      %p56 = por %p54, %p55
      %p57 = scmp.ne.s32.totalorder %s43, %s44
      %p58 = scmp.eq.s32.totalorder %s36, 1
      %p59 = por %p57, %p58
      %p61 = scmp.ne.s32.totalorder %s44, %s60
      %p62 = scmp.eq.s32.totalorder %s36, 0
      %p63 = por %p61, %p62
      %s65 = sadd.s32 %s64, 1
      %p68 = scmp.eq.s32.totalorder %s30, 1
      %p69 = scmp.ne.s32.totalorder %s64, %s66
      %p70 = scmp.eq.s32.totalorder %s30, 0
      %p71 = por %p69, %p70
      %p72 = scmp.ne.s32.totalorder %s64, %s66
      %p73 = scmp.eq.s32.totalorder %s35, 1
      %p74 = por %p72, %p73
      %p75 = scmp.ne.s32.totalorder %s66, %s67
      %p76 = scmp.eq.s32.totalorder %s35, 0
      %p77 = por %p75, %p76
      %p78 = scmp.ne.s32.totalorder %s66, %s67
      %p79 = scmp.eq.s32.totalorder %s36, 1
      %p80 = por %p78, %p79
      %p82 = scmp.ne.s32.totalorder %s67, %s81
      %p83 = scmp.eq.s32.totalorder %s36, 0
      %p84 = por %p82, %p83
      %s86 = sadd.s32 %s85, 1
      %p89 = scmp.eq.s32.totalorder %s30, 1
      %p90 = scmp.ne.s32.totalorder %s85, %s87
      %p91 = scmp.eq.s32.totalorder %s30, 0
      %p92 = por %p90, %p91
      %p93 = scmp.ne.s32.totalorder %s85, %s87
      %p94 = scmp.eq.s32.totalorder %s35, 1
      %p95 = por %p93, %p94
      %p96 = scmp.ne.s32.totalorder %s87, %s88
      %p97 = scmp.eq.s32.totalorder %s35, 0
      %p98 = por %p96, %p97
      %p99 = scmp.ne.s32.totalorder %s87, %s88
      %p100 = scmp.eq.s32.totalorder %s36, 1
      %p101 = por %p99, %p100
      %p103 = scmp.ne.s32.totalorder %s88, %s102
      %p104 = scmp.eq.s32.totalorder %s36, 0
      %p105 = por %p103, %p104
      %s107 = sadd.s32 %s106, 1
      %p110 = scmp.eq.s32.totalorder %s30, 1
      %p111 = scmp.ne.s32.totalorder %s106, %s108
      %p112 = scmp.eq.s32.totalorder %s30, 0
      %p113 = por %p111, %p112
      %p114 = scmp.ne.s32.totalorder %s106, %s108
      %p115 = scmp.eq.s32.totalorder %s35, 1
      %p116 = por %p114, %p115
      %p117 = scmp.ne.s32.totalorder %s108, %s109
      %p118 = scmp.eq.s32.totalorder %s35, 0
      %p119 = por %p117, %p118
      %p120 = scmp.ne.s32.totalorder %s108, %s109
      %p121 = scmp.eq.s32.totalorder %s36, 1
      %p122 = por %p120, %p121
      %p124 = scmp.ne.s32.totalorder %s109, %s123
      %p125 = scmp.eq.s32.totalorder %s36, 0
      %p126 = por %p124, %p125
      %s128 = sadd.s32 %s127, 1
      %p131 = scmp.eq.s32.totalorder %s30, 1
      %p132 = scmp.ne.s32.totalorder %s127, %s129
      %p133 = scmp.eq.s32.totalorder %s30, 0
      %p134 = por %p132, %p133
      %p135 = scmp.ne.s32.totalorder %s127, %s129
      %p136 = scmp.eq.s32.totalorder %s35, 1
      %p137 = por %p135, %p136
      %p138 = scmp.ne.s32.totalorder %s129, %s130
      %p139 = scmp.eq.s32.totalorder %s35, 0
      %p140 = por %p138, %p139
      %p141 = scmp.ne.s32.totalorder %s129, %s130
      %p142 = scmp.eq.s32.totalorder %s36, 1
      %p143 = por %p141, %p142
      %p145 = scmp.ne.s32.totalorder %s130, %s144
      %p146 = scmp.eq.s32.totalorder %s36, 0
      %p147 = por %p145, %p146
      %s149 = sadd.s32 %s148, 1
      %p152 = scmp.eq.s32.totalorder %s30, 1
      %p153 = scmp.ne.s32.totalorder %s148, %s150
      %p154 = scmp.eq.s32.totalorder %s30, 0
      %p155 = por %p153, %p154
      %p156 = scmp.ne.s32.totalorder %s148, %s150
      %p157 = scmp.eq.s32.totalorder %s35, 1
      %p158 = por %p156, %p157
      %p159 = scmp.ne.s32.totalorder %s150, %s151
      %p160 = scmp.eq.s32.totalorder %s35, 0
      %p161 = por %p159, %p160
      %p162 = scmp.ne.s32.totalorder %s150, %s151
      %p163 = scmp.eq.s32.totalorder %s36, 1
      %p164 = por %p162, %p163
      %p166 = scmp.ne.s32.totalorder %s151, %s165
      %p167 = scmp.eq.s32.totalorder %s36, 0
      %p168 = por %p166, %p167
      %s170 = sadd.s32 %s169, 1
      %p173 = scmp.eq.s32.totalorder %s30, 1
      %p174 = scmp.ne.s32.totalorder %s169, %s171
      %p175 = scmp.eq.s32.totalorder %s30, 0
      %p176 = por %p174, %p175
      %p177 = scmp.ne.s32.totalorder %s169, %s171
      %p178 = scmp.eq.s32.totalorder %s35, 1
      %p179 = por %p177, %p178
      %p180 = scmp.ne.s32.totalorder %s171, %s172
      %p181 = scmp.eq.s32.totalorder %s35, 0
      %p182 = por %p180, %p181
      %p183 = scmp.ne.s32.totalorder %s171, %s172
      %p184 = scmp.eq.s32.totalorder %s36, 1
      %p185 = por %p183, %p184
      %p187 = scmp.ne.s32.totalorder %s172, %s186
      %p188 = scmp.eq.s32.totalorder %s36, 0
      %p189 = por %p187, %p188
      %s191 = sadd.s32 %s190, 1
      %p194 = scmp.eq.s32.totalorder %s30, 1
      %p195 = scmp.ne.s32.totalorder %s190, %s192
      %p196 = scmp.eq.s32.totalorder %s30, 0
      %p197 = por %p195, %p196
      %p198 = scmp.ne.s32.totalorder %s190, %s192
      %p199 = scmp.eq.s32.totalorder %s35, 1
      %p200 = por %p198, %p199
      %p201 = scmp.ne.s32.totalorder %s192, %s193
      %p202 = scmp.eq.s32.totalorder %s35, 0
      %p203 = por %p201, %p202
      %p204 = scmp.ne.s32.totalorder %s192, %s193
      %p205 = scmp.eq.s32.totalorder %s36, 1
      %p206 = por %p204, %p205
      %p208 = scmp.ne.s32.totalorder %s193, %s207
      %p209 = scmp.eq.s32.totalorder %s36, 0
      %p210 = por %p208, %p209
      %s212 = sadd.s32 %s211, 1
      %p215 = scmp.eq.s32.totalorder %s30, 1
      %p216 = scmp.ne.s32.totalorder %s211, %s213
      %p217 = scmp.eq.s32.totalorder %s30, 0
      %p218 = por %p216, %p217
      %p219 = scmp.ne.s32.totalorder %s211, %s213
      %p220 = scmp.eq.s32.totalorder %s35, 1
      %p221 = por %p219, %p220
      %p222 = scmp.ne.s32.totalorder %s213, %s214
      %p223 = scmp.eq.s32.totalorder %s35, 0
      %p224 = por %p222, %p223
      %p225 = scmp.ne.s32.totalorder %s213, %s214
      %p226 = scmp.eq.s32.totalorder %s36, 1
      %p227 = por %p225, %p226
      %p229 = scmp.ne.s32.totalorder %s214, %s228
      %p230 = scmp.eq.s32.totalorder %s36, 0
      %p231 = por %p229, %p230
      %s233 = sadd.s32 %s232, 1
      %p236 = scmp.eq.s32.totalorder %s30, 1
      %p237 = scmp.ne.s32.totalorder %s232, %s234
      %p238 = scmp.eq.s32.totalorder %s30, 0
      %p239 = por %p237, %p238
      %p240 = scmp.ne.s32.totalorder %s232, %s234
      %p241 = scmp.eq.s32.totalorder %s35, 1
      %p242 = por %p240, %p241
      %p243 = scmp.ne.s32.totalorder %s234, %s235
      %p244 = scmp.eq.s32.totalorder %s35, 0
      %p245 = por %p243, %p244
      %p246 = scmp.ne.s32.totalorder %s234, %s235
      %p247 = scmp.eq.s32.totalorder %s36, 1
      %p248 = por %p246, %p247
      %p250 = scmp.ne.s32.totalorder %s235, %s249
      %p251 = scmp.eq.s32.totalorder %s36, 0
      %p252 = por %p250, %p251
      %s254 = sadd.s32 %s253, 1
      %p257 = scmp.eq.s32.totalorder %s30, 1
      %p258 = scmp.ne.s32.totalorder %s253, %s255
      %p259 = scmp.eq.s32.totalorder %s30, 0
      %p260 = por %p258, %p259
      %p261 = scmp.ne.s32.totalorder %s253, %s255
      %p262 = scmp.eq.s32.totalorder %s35, 1
      %p263 = por %p261, %p262
      %p264 = scmp.ne.s32.totalorder %s255, %s256
      %p265 = scmp.eq.s32.totalorder %s35, 0
      %p266 = por %p264, %p265
      %p267 = scmp.ne.s32.totalorder %s255, %s256
      %p268 = scmp.eq.s32.totalorder %s36, 1
      %p269 = por %p267, %p268
      %p271 = scmp.ne.s32.totalorder %s256, %s270
      %p272 = scmp.eq.s32.totalorder %s36, 0
      %p273 = por %p271, %p272
      %s275 = sadd.s32 %s274, 1
      %p278 = scmp.eq.s32.totalorder %s30, 1
      %p279 = scmp.ne.s32.totalorder %s274, %s276
      %p280 = scmp.eq.s32.totalorder %s30, 0
      %p281 = por %p279, %p280
      %p282 = scmp.ne.s32.totalorder %s274, %s276
      %p283 = scmp.eq.s32.totalorder %s35, 1
      %p284 = por %p282, %p283
      %p285 = scmp.ne.s32.totalorder %s276, %s277
      %p286 = scmp.eq.s32.totalorder %s35, 0
      %p287 = por %p285, %p286
      %p288 = scmp.ne.s32.totalorder %s276, %s277
      %p289 = scmp.eq.s32.totalorder %s36, 1
      %p290 = por %p288, %p289
      %p292 = scmp.ne.s32.totalorder %s277, %s291
      %p293 = scmp.eq.s32.totalorder %s36, 0
      %p294 = por %p292, %p293
      %s296 = sadd.s32 %s295, 1
      %p299 = scmp.eq.s32.totalorder %s30, 1
      %p300 = scmp.ne.s32.totalorder %s295, %s297
      %p301 = scmp.eq.s32.totalorder %s30, 0
      %p302 = por %p300, %p301
      %p303 = scmp.ne.s32.totalorder %s295, %s297
      %p304 = scmp.eq.s32.totalorder %s35, 1
      %p305 = por %p303, %p304
      %p306 = scmp.ne.s32.totalorder %s297, %s298
      %p307 = scmp.eq.s32.totalorder %s35, 0
      %p308 = por %p306, %p307
      %p309 = scmp.ne.s32.totalorder %s297, %s298
      %p310 = scmp.eq.s32.totalorder %s36, 1
      %p311 = por %p309, %p310
      %p313 = scmp.ne.s32.totalorder %s298, %s312
      %p314 = scmp.eq.s32.totalorder %s36, 0
      %p315 = por %p313, %p314
      %s316 = ssub.s32 %s30, %s37
      %p317 = scmp.eq.s32.totalorder %s316, 0
      %s319 = sadd.s32 %s318, 1
      %s320 = scalar_select %p317, %s318, %s319
      %p323 = pneg %p317
      %p324 = scmp.eq.s32.totalorder %s30, 1
      %p325 = por %p323, %p324
      %p326 = scmp.ne.s32.totalorder %s318, %s321
      %p327 = scmp.eq.s32.totalorder %s30, 0
      %p328 = por %p326, %p327
      %p329 = scmp.ne.s32.totalorder %s318, %s321
      %p330 = scmp.eq.s32.totalorder %s35, 1
      %p331 = por %p329, %p330
      %p332 = scmp.ne.s32.totalorder %s321, %s322
      %p333 = scmp.eq.s32.totalorder %s35, 0
      %p334 = por %p332, %p333
      %p335 = scmp.ne.s32.totalorder %s321, %s322
      %p336 = scmp.eq.s32.totalorder %s36, 1
      %p337 = por %p335, %p336
      %p339 = scmp.ne.s32.totalorder %s322, %s338
      %p340 = scmp.eq.s32.totalorder %s36, 0
      %p341 = por %p339, %p340
      %p342 = scmp.le.s32.totalorder 1, %s30
      %p343 = scmp.lt.s32.totalorder %s30, 3
      %p344 = pnand %p342, %p343
      %p345 = pneg %p344
      // Predicated region
      $region9: #{tpu_custom_call.1} parent=5 // pred_check
        _
      $region10: #{tpu_custom_call.1} parent=5 // pred_check_branch
        %347 = sbr.rel (%p344) target = $region12
      $region11: #{tpu_custom_call.1} parent=5 // pred_region
        %s348 = ssub.s32 %s30, 1
        // Predicated region
        $region13: #{tpu_custom_call.1} parent=11 // pred_check
          %p349 = pneg %p77
        $region14: #{tpu_custom_call.1} parent=11 // pred_check_branch
          %351 = sbr.rel (%p349) target = $region16
        $region15: #{tpu_custom_call.1} parent=11 // pred_region
          %353 = vsyncadd [#allocation7], 0
          %s355 = sshll.u32 %s1, 4
          %s356 = int_to_ptr.hbm [resolvable:$true] %s355
          %s357 = sshll.u32 [#allocation6], 4
          %s358 = int_to_ptr.vmem [resolvable:$true] %s357
          %360 = dma.hbm_to_vmem [thread:$0]  %s356, 16, %s358, [#allocation7]
        $region16: #{tpu_custom_call.1} parent=11 // pred_fallthru
          _
        // Predicated region
        $region17: #{tpu_custom_call.1} parent=11 // pred_check
          %p361 = pneg %p98
        $region18: #{tpu_custom_call.1} parent=11 // pred_check_branch
          %363 = sbr.rel (%p361) target = $region20
        $region19: #{tpu_custom_call.1} parent=11 // pred_region
          %365 = vsyncadd [#allocation7], 0
          %s367 = sshll.u32 %s2, 4
          %s368 = int_to_ptr.hbm [resolvable:$true] %s367
          %s369 = sshll.u32 [#allocation8], 4
          %s370 = int_to_ptr.vmem [resolvable:$true] %s369
          %372 = dma.hbm_to_vmem [thread:$0]  %s368, 16, %s370, [#allocation7]
        $region20: #{tpu_custom_call.1} parent=11 // pred_fallthru
          _
        // Predicated region
        $region21: #{tpu_custom_call.1} parent=11 // pred_check
          %p373 = pneg %p119
        $region22: #{tpu_custom_call.1} parent=11 // pred_check_branch
          %375 = sbr.rel (%p373) target = $region24
        $region23: #{tpu_custom_call.1} parent=11 // pred_region
          %377 = vsyncadd [#allocation10], 0
          %s378 = sshll.u32 %s3, 4
          %s379 = int_to_ptr.hbm [resolvable:$true] %s378
          %s380 = sshll.u32 [#allocation9], 4
          %s381 = int_to_ptr.vmem [resolvable:$true] %s380
          %386 = dma.hbm_to_vmem [thread:$0]  %s379, 3072, %s381, [#allocation10], 192, 192, 12
        $region24: #{tpu_custom_call.1} parent=11 // pred_fallthru
          _
        // Predicated region
        $region25: #{tpu_custom_call.1} parent=11 // pred_check
          %p387 = pneg %p140
        $region26: #{tpu_custom_call.1} parent=11 // pred_check_branch
          %389 = sbr.rel (%p387) target = $region28
        $region27: #{tpu_custom_call.1} parent=11 // pred_region
          _
        $region28: #{tpu_custom_call.1} parent=11 // pred_fallthru
          _
        // Predicated region
        $region29: #{tpu_custom_call.1} parent=11 // pred_check
          %p390 = pneg %p161
        $region30: #{tpu_custom_call.1} parent=11 // pred_check_branch
          %392 = sbr.rel (%p390) target = $region32
        $region31: #{tpu_custom_call.1} parent=11 // pred_region
          %394 = vsyncadd [#allocation10], 0
          %s395 = sshll.u32 %s5, 4
          %s396 = int_to_ptr.hbm [resolvable:$true] %s395
          %s397 = sshll.u32 [#allocation11], 4
          %s398 = int_to_ptr.vmem [resolvable:$true] %s397
          %403 = dma.hbm_to_vmem [thread:$0]  %s396, 1024, %s398, [#allocation10], 64, 64, 4
        $region32: #{tpu_custom_call.1} parent=11 // pred_fallthru
          _
        // Predicated region
        $region33: #{tpu_custom_call.1} parent=11 // pred_check
          %p404 = pneg %p182
        $region34: #{tpu_custom_call.1} parent=11 // pred_check_branch
          %406 = sbr.rel (%p404) target = $region36
        $region35: #{tpu_custom_call.1} parent=11 // pred_region
          %408 = vsyncadd [#allocation13], 0
          %s410 = sshll.u32 %s6, 4
          %s411 = int_to_ptr.hbm [resolvable:$true] %s410
          %s412 = sshll.u32 [#allocation12], 4
          %s413 = int_to_ptr.vmem [resolvable:$true] %s412
          %415 = dma.hbm_to_vmem [thread:$0]  %s411, 16, %s413, [#allocation13]
        $region36: #{tpu_custom_call.1} parent=11 // pred_fallthru
          _
        // Predicated region
        $region37: #{tpu_custom_call.1} parent=11 // pred_check
          %p416 = pneg %p203
        $region38: #{tpu_custom_call.1} parent=11 // pred_check_branch
          %418 = sbr.rel (%p416) target = $region40
        $region39: #{tpu_custom_call.1} parent=11 // pred_region
          %420 = vsyncadd [#allocation13], 0
          %s422 = sshll.u32 %s7, 4
          %s423 = int_to_ptr.hbm [resolvable:$true] %s422
          %s424 = sshll.u32 [#allocation14], 4
          %s425 = int_to_ptr.vmem [resolvable:$true] %s424
          %427 = dma.hbm_to_vmem [thread:$0]  %s423, 16, %s425, [#allocation13]
        $region40: #{tpu_custom_call.1} parent=11 // pred_fallthru
          _
        // Predicated region
        $region41: #{tpu_custom_call.1} parent=11 // pred_check
          %p428 = pneg %p224
        $region42: #{tpu_custom_call.1} parent=11 // pred_check_branch
          %430 = sbr.rel (%p428) target = $region44
        $region43: #{tpu_custom_call.1} parent=11 // pred_region
          %432 = vsyncadd [#allocation16], 0
          %s434 = sshll.u32 %s8, 4
          %s435 = int_to_ptr.hbm [resolvable:$true] %s434
          %s436 = sshll.u32 [#allocation15], 4
          %s437 = int_to_ptr.vmem [resolvable:$true] %s436
          %439 = dma.hbm_to_vmem [thread:$0]  %s435, 16, %s437, [#allocation16]
        $region44: #{tpu_custom_call.1} parent=11 // pred_fallthru
          _
        // Predicated region
        $region45: #{tpu_custom_call.1} parent=11 // pred_check
          %p440 = pneg %p245
        $region46: #{tpu_custom_call.1} parent=11 // pred_check_branch
          %442 = sbr.rel (%p440) target = $region48
        $region47: #{tpu_custom_call.1} parent=11 // pred_region
          %444 = vsyncadd [#allocation16], 0
          %s445 = sshll.u32 %s9, 4
          %s446 = int_to_ptr.hbm [resolvable:$true] %s445
          %s447 = sshll.u32 [#allocation17], 4
          %s448 = int_to_ptr.vmem [resolvable:$true] %s447
          %453 = dma.hbm_to_vmem [thread:$0]  %s446, 4096, %s448, [#allocation16], 256, 256, 16
        $region48: #{tpu_custom_call.1} parent=11 // pred_fallthru
          _
        // Predicated region
        $region49: #{tpu_custom_call.1} parent=11 // pred_check
          %p454 = pneg %p266
        $region50: #{tpu_custom_call.1} parent=11 // pred_check_branch
          %456 = sbr.rel (%p454) target = $region52
        $region51: #{tpu_custom_call.1} parent=11 // pred_region
          _
        $region52: #{tpu_custom_call.1} parent=11 // pred_fallthru
          _
        // Predicated region
        $region53: #{tpu_custom_call.1} parent=11 // pred_check
          %p457 = pneg %p287
        $region54: #{tpu_custom_call.1} parent=11 // pred_check_branch
          %459 = sbr.rel (%p457) target = $region56
        $region55: #{tpu_custom_call.1} parent=11 // pred_region
          %461 = vsyncadd [#allocation19], 0
          %s462 = sshll.u32 %s11, 4
          %s463 = int_to_ptr.hbm [resolvable:$true] %s462
          %s464 = sshll.u32 [#allocation18], 4
          %s465 = int_to_ptr.vmem [resolvable:$true] %s464
          %470 = dma.hbm_to_vmem [thread:$0]  %s463, 4096, %s465, [#allocation19], 64, 64, 4
        $region56: #{tpu_custom_call.1} parent=11 // pred_fallthru
          _
        // Predicated region
        $region57: #{tpu_custom_call.1} parent=11 // pred_check
          %p471 = pneg %p308
        $region58: #{tpu_custom_call.1} parent=11 // pred_check_branch
          %473 = sbr.rel (%p471) target = $region60
        $region59: #{tpu_custom_call.1} parent=11 // pred_region
          _
        $region60: #{tpu_custom_call.1} parent=11 // pred_fallthru
          _
      $region12: #{tpu_custom_call.1} parent=5 // pred_fallthru
        _
      %p474 = scmp.lt.s32.totalorder %s30, 2
      // Predicated region
      $region61: #{tpu_custom_call.1} parent=5 // pred_check
        %p475 = pneg %p474
      $region62: #{tpu_custom_call.1} parent=5 // pred_check_branch
        %477 = sbr.rel (%p475) target = $region64
      $region63: #{tpu_custom_call.1} parent=5 // pred_region
        // Predicated region
        $region65: #{tpu_custom_call.1} parent=63 // pred_check
          %p478 = pneg %p50
        $region66: #{tpu_custom_call.1} parent=63 // pred_check_branch
          %480 = sbr.rel (%p478) target = $region68
        $region67: #{tpu_custom_call.1} parent=63 // pred_region
          %s481 = sand.u32 %s40, 1
          %s482 = scalar_lea.sflag [#allocation4], %s481
          %s483 = sand.u32 %s40, 1
          %s484 = smul.addr %s483, 16
          %s485 = scalar_lea.vmem [#allocation3], %s484
          %487 = vsyncadd %s482, 0
          %s488 = smul.addr %s30, 2
          %s489 = smul.addr %s488, 8
          %s490 = scalar_lea.hbm %s0, %s489
          %s491 = sshll.u32 %s490, 4
          %s492 = int_to_ptr.hbm [resolvable:$true] %s491
          %s493 = sshll.u32 %s485, 4
          %s494 = int_to_ptr.vmem [resolvable:$true] %s493
          %499 = dma.hbm_to_vmem [thread:$0]  %s492, 256, %s494, %s482, 128, 128, 8
        $region68: #{tpu_custom_call.1} parent=63 // pred_fallthru
          _
      $region64: #{tpu_custom_call.1} parent=5 // pred_fallthru
        _
      %p500 = scmp.le.s32.totalorder 1, %s30
      %p501 = scmp.lt.s32.totalorder %s30, 3
      %p502 = pnand %p500, %p501
      %p503 = pneg %p502
      // Predicated region
      $region69: #{tpu_custom_call.1} parent=5 // pred_check
        _
      $region70: #{tpu_custom_call.1} parent=5 // pred_check_branch
        %505 = sbr.rel (%p502) target = $region72
      $region71: #{tpu_custom_call.1} parent=5 // pred_region
        %s506 = ssub.s32 %s30, 1
        %s507 = sand.u32 %s43, 1
        %s508 = scalar_lea.sflag [#allocation4], %s507
        %s509 = sand.u32 %s43, 1
        %s510 = smul.addr %s509, 16
        %s511 = scalar_lea.vmem [#allocation3], %s510
        // Predicated region
        $region73: #{tpu_custom_call.1} parent=71 // pred_check
          %p512 = pneg %p56
        $region74: #{tpu_custom_call.1} parent=71 // pred_check_branch
          %514 = sbr.rel (%p512) target = $region76
        $region75: #{tpu_custom_call.1} parent=71 // pred_region
          %516 = dma.done %s508, 256
        $region76: #{tpu_custom_call.1} parent=71 // pred_fallthru
          _
        // Predicated region
        $region77: #{tpu_custom_call.1} parent=71 // pred_check
          %p517 = pneg %p77
        $region78: #{tpu_custom_call.1} parent=71 // pred_check_branch
          %519 = sbr.rel (%p517) target = $region80
        $region79: #{tpu_custom_call.1} parent=71 // pred_region
          %521 = dma.done [#allocation7], 16
        $region80: #{tpu_custom_call.1} parent=71 // pred_fallthru
          _
        // Predicated region
        $region81: #{tpu_custom_call.1} parent=71 // pred_check
          %p522 = pneg %p98
        $region82: #{tpu_custom_call.1} parent=71 // pred_check_branch
          %524 = sbr.rel (%p522) target = $region84
        $region83: #{tpu_custom_call.1} parent=71 // pred_region
          %526 = dma.done [#allocation7], 16
        $region84: #{tpu_custom_call.1} parent=71 // pred_fallthru
          _
        // Predicated region
        $region85: #{tpu_custom_call.1} parent=71 // pred_check
          %p527 = pneg %p119
        $region86: #{tpu_custom_call.1} parent=71 // pred_check_branch
          %529 = sbr.rel (%p527) target = $region88
        $region87: #{tpu_custom_call.1} parent=71 // pred_region
          %531 = dma.done [#allocation10], 3072
        $region88: #{tpu_custom_call.1} parent=71 // pred_fallthru
          _
        // Predicated region
        $region89: #{tpu_custom_call.1} parent=71 // pred_check
          %p532 = pneg %p161
        $region90: #{tpu_custom_call.1} parent=71 // pred_check_branch
          %534 = sbr.rel (%p532) target = $region92
        $region91: #{tpu_custom_call.1} parent=71 // pred_region
          %536 = dma.done [#allocation10], 1024
        $region92: #{tpu_custom_call.1} parent=71 // pred_fallthru
          _
        // Predicated region
        $region93: #{tpu_custom_call.1} parent=71 // pred_check
          %p537 = pneg %p182
        $region94: #{tpu_custom_call.1} parent=71 // pred_check_branch
          %539 = sbr.rel (%p537) target = $region96
        $region95: #{tpu_custom_call.1} parent=71 // pred_region
          %541 = dma.done [#allocation13], 16
        $region96: #{tpu_custom_call.1} parent=71 // pred_fallthru
          _
        // Predicated region
        $region97: #{tpu_custom_call.1} parent=71 // pred_check
          %p542 = pneg %p203
        $region98: #{tpu_custom_call.1} parent=71 // pred_check_branch
          %544 = sbr.rel (%p542) target = $region100
        $region99: #{tpu_custom_call.1} parent=71 // pred_region
          %546 = dma.done [#allocation13], 16
        $region100: #{tpu_custom_call.1} parent=71 // pred_fallthru
          _
        // Predicated region
        $region101: #{tpu_custom_call.1} parent=71 // pred_check
          %p547 = pneg %p224
        $region102: #{tpu_custom_call.1} parent=71 // pred_check_branch
          %549 = sbr.rel (%p547) target = $region104
        $region103: #{tpu_custom_call.1} parent=71 // pred_region
          %551 = dma.done [#allocation16], 16
        $region104: #{tpu_custom_call.1} parent=71 // pred_fallthru
          _
        // Predicated region
        $region105: #{tpu_custom_call.1} parent=71 // pred_check
          %p552 = pneg %p245
        $region106: #{tpu_custom_call.1} parent=71 // pred_check_branch
          %554 = sbr.rel (%p552) target = $region108
        $region107: #{tpu_custom_call.1} parent=71 // pred_region
          %556 = dma.done [#allocation16], 4096
        $region108: #{tpu_custom_call.1} parent=71 // pred_fallthru
          _
        // Predicated region
        $region109: #{tpu_custom_call.1} parent=71 // pred_check
          %p557 = pneg %p287
        $region110: #{tpu_custom_call.1} parent=71 // pred_check_branch
          %559 = sbr.rel (%p557) target = $region112
        $region111: #{tpu_custom_call.1} parent=71 // pred_region
          %561 = dma.done [#allocation19], 4096
        $region112: #{tpu_custom_call.1} parent=71 // pred_fallthru
          _
        %s562 = sand.u32 %s43, 1
        %s563 = scalar_lea.sflag [#allocation4], %s562
        %s564 = sand.u32 %s43, 1
        %s565 = smul.addr %s564, 16
        %s566 = scalar_lea.vmem [#allocation3], %s565
        %p567 = pneg %p56
        %p568 = pneg %p53
        %p569 = pneg %p77
        %p570 = pneg %p74
        %p571 = pneg %p98
        %p572 = pneg %p95
        %p573 = pneg %p119
        %p574 = pneg %p116
        %p575 = pneg %p140
        %p576 = pneg %p137
        %p577 = pneg %p161
        %p578 = pneg %p158
        %p579 = pneg %p182
        %p580 = pneg %p179
        %p581 = pneg %p203
        %p582 = pneg %p200
        %p583 = pneg %p224
        %p584 = pneg %p221
        %p585 = pneg %p245
        %p586 = pneg %p242
        %p587 = pneg %p266
        %p588 = pneg %p263
        %p589 = pneg %p287
        %p590 = pneg %p284
        %p591 = pneg %p308
        %p592 = pneg %p305
        %p593 = pneg %p334
        %p594 = pneg %p331
        %s595 = sand.u32 %s321, 1
        %s596 = scalar_lea.sflag [#allocation5], %s595
        %s597 = sand.u32 %s321, 1
        %s598 = smul.addr %s597, 16
        %s599 = scalar_lea.vmem [#allocation20], %s598
        %v601 = vld [vmem:[#allocation6] sm:$0x1]
        %v602 = vld [vmem:[#allocation8] sm:$0x1]
        %v603 = vld [vmem:[#allocation14] sm:$0x1]
        %v604 = vld [vmem:[#allocation15] sm:$0x1]
        %v605 = vld [vmem:[#allocation9] sm:$0xff]
        %v606 = vld [vmem:[#allocation9 + $0x8] sm:$0xf]
        %v607 = vld [vmem:[#allocation9 + $0xc] sm:$0xff]
        %v608 = vld [vmem:[#allocation9 + $0x14] sm:$0xf]
        %v609 = vld [vmem:[#allocation9 + $0x18] sm:$0xff]
        %v610 = vld [vmem:[#allocation9 + $0x20] sm:$0xf]
        %v611 = vld [vmem:[#allocation9 + $0x24] sm:$0xff]
        %v612 = vld [vmem:[#allocation9 + $0x2c] sm:$0xf]
        %v613 = vld [vmem:[#allocation9 + $0x30] sm:$0xff]
        %v614 = vld [vmem:[#allocation9 + $0x38] sm:$0xf]
        %v615 = vld [vmem:[#allocation9 + $0x3c] sm:$0xff]
        %v616 = vld [vmem:[#allocation9 + $0x44] sm:$0xf]
        %v617 = vld [vmem:[#allocation9 + $0x48] sm:$0xff]
        %v618 = vld [vmem:[#allocation9 + $0x50] sm:$0xf]
        %v619 = vld [vmem:[#allocation9 + $0x54] sm:$0xff]
        %v620 = vld [vmem:[#allocation9 + $0x5c] sm:$0xf]
        %v621 = vld [vmem:[#allocation9 + $0x60] sm:$0xff]
        %v622 = vld [vmem:[#allocation9 + $0x68] sm:$0xf]
        %v623 = vld [vmem:[#allocation9 + $0x6c] sm:$0xff]
        %v624 = vld [vmem:[#allocation9 + $0x74] sm:$0xf]
        %v625 = vld [vmem:[#allocation9 + $0x78] sm:$0xff]
        %v626 = vld [vmem:[#allocation9 + $0x80] sm:$0xf]
        %v627 = vld [vmem:[#allocation9 + $0x84] sm:$0xff]
        %v628 = vld [vmem:[#allocation9 + $0x8c] sm:$0xf]
        %v629 = vld [vmem:[#allocation9 + $0x90] sm:$0xff]
        %v630 = vld [vmem:[#allocation9 + $0x98] sm:$0xf]
        %v631 = vld [vmem:[#allocation9 + $0x9c] sm:$0xff]
        %v632 = vld [vmem:[#allocation9 + $0xa4] sm:$0xf]
        %v633 = vld [vmem:[#allocation9 + $0xa8] sm:$0xff]
        %v634 = vld [vmem:[#allocation9 + $0xb0] sm:$0xf]
        %v635 = vld [vmem:[#allocation9 + $0xb4] sm:$0xff]
        %v636 = vld [vmem:[#allocation9 + $0xbc] sm:$0xf]
        %v637 = vld [vmem:[%s4] sm:$0x7]
        %v638 = vld [vmem:[#allocation11] sm:$0xf]
        %v639 = vld [vmem:[#allocation11 + $0x4] sm:$0xf]
        %v640 = vld [vmem:[#allocation11 + $0x8] sm:$0xf]
        %v641 = vld [vmem:[#allocation11 + $0xc] sm:$0xf]
        %v642 = vld [vmem:[#allocation11 + $0x10] sm:$0xf]
        %v643 = vld [vmem:[#allocation11 + $0x14] sm:$0xf]
        %v644 = vld [vmem:[#allocation11 + $0x18] sm:$0xf]
        %v645 = vld [vmem:[#allocation11 + $0x1c] sm:$0xf]
        %v646 = vld [vmem:[#allocation11 + $0x20] sm:$0xf]
        %v647 = vld [vmem:[#allocation11 + $0x24] sm:$0xf]
        %v648 = vld [vmem:[#allocation11 + $0x28] sm:$0xf]
        %v649 = vld [vmem:[#allocation11 + $0x2c] sm:$0xf]
        %v650 = vld [vmem:[#allocation11 + $0x30] sm:$0xf]
        %v651 = vld [vmem:[#allocation11 + $0x34] sm:$0xf]
        %v652 = vld [vmem:[#allocation11 + $0x38] sm:$0xf]
        %v653 = vld [vmem:[#allocation11 + $0x3c] sm:$0xf]
        %v654 = vld [vmem:[#allocation12] sm:$0x1]
        %v655 = vld [vmem:[#allocation17] sm:$0xff]
        %v656 = vld [vmem:[#allocation17 + $0x8] sm:$0xff]
        %v657 = vld [vmem:[#allocation17 + $0x10] sm:$0xff]
        %v658 = vld [vmem:[#allocation17 + $0x18] sm:$0xff]
        %v659 = vld [vmem:[#allocation17 + $0x20] sm:$0xff]
        %v660 = vld [vmem:[#allocation17 + $0x28] sm:$0xff]
        %v661 = vld [vmem:[#allocation17 + $0x30] sm:$0xff]
        %v662 = vld [vmem:[#allocation17 + $0x38] sm:$0xff]
        %v663 = vld [vmem:[#allocation17 + $0x40] sm:$0xff]
        %v664 = vld [vmem:[#allocation17 + $0x48] sm:$0xff]
        %v665 = vld [vmem:[#allocation17 + $0x50] sm:$0xff]
        %v666 = vld [vmem:[#allocation17 + $0x58] sm:$0xff]
        %v667 = vld [vmem:[#allocation17 + $0x60] sm:$0xff]
        %v668 = vld [vmem:[#allocation17 + $0x68] sm:$0xff]
        %v669 = vld [vmem:[#allocation17 + $0x70] sm:$0xff]
        %v670 = vld [vmem:[#allocation17 + $0x78] sm:$0xff]
        %v671 = vld [vmem:[#allocation17 + $0x80] sm:$0xff]
        %v672 = vld [vmem:[#allocation17 + $0x88] sm:$0xff]
        %v673 = vld [vmem:[#allocation17 + $0x90] sm:$0xff]
        %v674 = vld [vmem:[#allocation17 + $0x98] sm:$0xff]
        %v675 = vld [vmem:[#allocation17 + $0xa0] sm:$0xff]
        %v676 = vld [vmem:[#allocation17 + $0xa8] sm:$0xff]
        %v677 = vld [vmem:[#allocation17 + $0xb0] sm:$0xff]
        %v678 = vld [vmem:[#allocation17 + $0xb8] sm:$0xff]
        %v679 = vld [vmem:[#allocation17 + $0xc0] sm:$0xff]
        %v680 = vld [vmem:[#allocation17 + $0xc8] sm:$0xff]
        %v681 = vld [vmem:[#allocation17 + $0xd0] sm:$0xff]
        %v682 = vld [vmem:[#allocation17 + $0xd8] sm:$0xff]
        %v683 = vld [vmem:[#allocation17 + $0xe0] sm:$0xff]
        %v684 = vld [vmem:[#allocation17 + $0xe8] sm:$0xff]
        %v685 = vld [vmem:[#allocation17 + $0xf0] sm:$0xff]
        %v686 = vld [vmem:[#allocation17 + $0xf8] sm:$0xff]
        %v687 = vld [vmem:[%s10] sm:$0xf]
        %v688 = vld [vmem:[#allocation18] sm:$0xf]
        %v689 = vld [vmem:[#allocation18 + $0x4] sm:$0xf]
        %v690 = vld [vmem:[#allocation18 + $0x8] sm:$0xf]
        %v691 = vld [vmem:[#allocation18 + $0xc] sm:$0xf]
        %v692 = vld [vmem:[#allocation18 + $0x10] sm:$0xf]
        %v693 = vld [vmem:[#allocation18 + $0x14] sm:$0xf]
        %v694 = vld [vmem:[#allocation18 + $0x18] sm:$0xf]
        %v695 = vld [vmem:[#allocation18 + $0x1c] sm:$0xf]
        %v696 = vld [vmem:[#allocation18 + $0x20] sm:$0xf]
        %v697 = vld [vmem:[#allocation18 + $0x24] sm:$0xf]
        %v698 = vld [vmem:[#allocation18 + $0x28] sm:$0xf]
        %v699 = vld [vmem:[#allocation18 + $0x2c] sm:$0xf]
        %v700 = vld [vmem:[#allocation18 + $0x30] sm:$0xf]
        %v701 = vld [vmem:[#allocation18 + $0x34] sm:$0xf]
        %v702 = vld [vmem:[#allocation18 + $0x38] sm:$0xf]
        %v703 = vld [vmem:[#allocation18 + $0x3c] sm:$0xf]
        %v704 = vld [vmem:[#allocation18 + $0x40] sm:$0xf]
        %v705 = vld [vmem:[#allocation18 + $0x44] sm:$0xf]
        %v706 = vld [vmem:[#allocation18 + $0x48] sm:$0xf]
        %v707 = vld [vmem:[#allocation18 + $0x4c] sm:$0xf]
        %v708 = vld [vmem:[#allocation18 + $0x50] sm:$0xf]
        %v709 = vld [vmem:[#allocation18 + $0x54] sm:$0xf]
        %v710 = vld [vmem:[#allocation18 + $0x58] sm:$0xf]
        %v711 = vld [vmem:[#allocation18 + $0x5c] sm:$0xf]
        %v712 = vld [vmem:[#allocation18 + $0x60] sm:$0xf]
        %v713 = vld [vmem:[#allocation18 + $0x64] sm:$0xf]
        %v714 = vld [vmem:[#allocation18 + $0x68] sm:$0xf]
        %v715 = vld [vmem:[#allocation18 + $0x6c] sm:$0xf]
        %v716 = vld [vmem:[#allocation18 + $0x70] sm:$0xf]
        %v717 = vld [vmem:[#allocation18 + $0x74] sm:$0xf]
        %v718 = vld [vmem:[#allocation18 + $0x78] sm:$0xf]
        %v719 = vld [vmem:[#allocation18 + $0x7c] sm:$0xf]
        %v720 = vld [vmem:[#allocation18 + $0x80] sm:$0xf]
        %v721 = vld [vmem:[#allocation18 + $0x84] sm:$0xf]
        %v722 = vld [vmem:[#allocation18 + $0x88] sm:$0xf]
        %v723 = vld [vmem:[#allocation18 + $0x8c] sm:$0xf]
        %v724 = vld [vmem:[#allocation18 + $0x90] sm:$0xf]
        %v725 = vld [vmem:[#allocation18 + $0x94] sm:$0xf]
        %v726 = vld [vmem:[#allocation18 + $0x98] sm:$0xf]
        %v727 = vld [vmem:[#allocation18 + $0x9c] sm:$0xf]
        %v728 = vld [vmem:[#allocation18 + $0xa0] sm:$0xf]
        %v729 = vld [vmem:[#allocation18 + $0xa4] sm:$0xf]
        %v730 = vld [vmem:[#allocation18 + $0xa8] sm:$0xf]
        %v731 = vld [vmem:[#allocation18 + $0xac] sm:$0xf]
        %v732 = vld [vmem:[#allocation18 + $0xb0] sm:$0xf]
        %v733 = vld [vmem:[#allocation18 + $0xb4] sm:$0xf]
        %v734 = vld [vmem:[#allocation18 + $0xb8] sm:$0xf]
        %v735 = vld [vmem:[#allocation18 + $0xbc] sm:$0xf]
        %v736 = vld [vmem:[#allocation18 + $0xc0] sm:$0xf]
        %v737 = vld [vmem:[#allocation18 + $0xc4] sm:$0xf]
        %v738 = vld [vmem:[#allocation18 + $0xc8] sm:$0xf]
        %v739 = vld [vmem:[#allocation18 + $0xcc] sm:$0xf]
        %v740 = vld [vmem:[#allocation18 + $0xd0] sm:$0xf]
        %v741 = vld [vmem:[#allocation18 + $0xd4] sm:$0xf]
        %v742 = vld [vmem:[#allocation18 + $0xd8] sm:$0xf]
        %v743 = vld [vmem:[#allocation18 + $0xdc] sm:$0xf]
        %v744 = vld [vmem:[#allocation18 + $0xe0] sm:$0xf]
        %v745 = vld [vmem:[#allocation18 + $0xe4] sm:$0xf]
        %v746 = vld [vmem:[#allocation18 + $0xe8] sm:$0xf]
        %v747 = vld [vmem:[#allocation18 + $0xec] sm:$0xf]
        %v748 = vld [vmem:[#allocation18 + $0xf0] sm:$0xf]
        %v749 = vld [vmem:[#allocation18 + $0xf4] sm:$0xf]
        %v750 = vld [vmem:[#allocation18 + $0xf8] sm:$0xf]
        %v751 = vld [vmem:[#allocation18 + $0xfc] sm:$0xf]
        %v752 = vld [vmem:[%s12] sm:$0x1]
        %v753 = vld [vmem:[%s511] sm:$0xff]
        %v754 = vld [vmem:[%s511 + $0x8] sm:$0xff]
        %755 = vadd.xlane.f32.xlu0 %v753
        %v756 = vpop.xlane.xlu0 %755
        %757 = vadd.xlane.f32.xlu0 %v754
        %v758 = vpop.xlane.xlu0 %757
        %v759 = vrcp.pop 128.0
        %v760 = vmul.f32 128.0, %v759
        %v761 = vsub.f32 1.0, %v760
        %v762 = vmul.f32 %v759, %v761
        %v763 = vadd.f32 %v759, %v762
        %vm764 = vweird.f32 %v759
        %v765 = vsel %vm764, %v759, %v763
        %v766 = vmul.f32 %v756, %v765
        %v767 = vmul.f32 %v758, %v765
        %v768 = vsub.f32 %v753, %v766
        %v769 = vsub.f32 %v754, %v767
        %v770 = vmul.f32 %v768, %v768
        %v771 = vmul.f32 %v769, %v769
        %772 = vadd.xlane.f32.xlu0 %v770
        %v773 = vpop.xlane.xlu0 %772
        %774 = vadd.xlane.f32.xlu0 %v771
        %v775 = vpop.xlane.xlu0 %774
        %v776 = vmul.f32 %v773, %v765
        %v777 = vmul.f32 %v775, %v765
        %v778 = vadd.f32 %v776, 1e-06
        %v779 = vadd.f32 %v777, 1e-06
        %v780 = vrsqrt.pop %v778
        %v781 = vmul.f32 %v780, %v778
        %v782 = vmul.f32 %v781, %v780
        %v783 = vmul.f32 0.5, %v782
        %v784 = vsub.f32 1.5, %v783
        %v785 = vmul.f32 %v780, %v784
        %vm786 = vweird.f32 %v778
        %vm787 = vweird.f32 %v780
        %vm788 = vmor %vm786, %vm787
        %v789 = vsel %vm788, %v780, %v785
        %v790 = vrsqrt.pop %v779
        %v791 = vmul.f32 %v790, %v779
        %v792 = vmul.f32 %v791, %v790
        %v793 = vmul.f32 0.5, %v792
        %v794 = vsub.f32 1.5, %v793
        %v795 = vmul.f32 %v790, %v794
        %vm796 = vweird.f32 %v779
        %vm797 = vweird.f32 %v790
        %vm798 = vmor %vm796, %vm797
        %v799 = vsel %vm798, %v790, %v795
        %v800 = vmul.f32 %v768, %v789
        %v801 = vmul.f32 %v769, %v799
        %v803 = vperm.slane %v601, 0
        %v805 = vmul.f32 %v800, %v803
        %v806 = vmul.f32 %v801, %v803
        %v808 = vperm.slane %v602, 0
        %v810 = vadd.f32 %v805, %v808
        %v811 = vadd.f32 %v806, %v808
        %v812 = vpack.c.bf16 %v811, %v810
        %v814 = vperm.slane %v637, 0
        %v815 = vperm.slane %v637, 1
        %v816 = vperm.slane %v637, 2
        %v852 = vunpack.c.l.b16 %v605
        %v853 = vunpack.c.h.b16 %v605
        %v854 = vunpack.c.l.b16 %v606
        %v855 = vunpack.c.l.b16 %v607
        %v856 = vunpack.c.h.b16 %v607
        %v857 = vunpack.c.l.b16 %v608
        %v858 = vunpack.c.l.b16 %v609
        %v859 = vunpack.c.h.b16 %v609
        %v860 = vunpack.c.l.b16 %v610
        %v861 = vunpack.c.l.b16 %v611
        %v862 = vunpack.c.h.b16 %v611
        %v863 = vunpack.c.l.b16 %v612
        %v864 = vunpack.c.l.b16 %v613
        %v865 = vunpack.c.h.b16 %v613
        %v866 = vunpack.c.l.b16 %v614
        %v867 = vunpack.c.l.b16 %v615
        %v868 = vunpack.c.h.b16 %v615
        %v869 = vunpack.c.l.b16 %v616
        %v870 = vunpack.c.l.b16 %v617
        %v871 = vunpack.c.h.b16 %v617
        %v872 = vunpack.c.l.b16 %v618
        %v873 = vunpack.c.l.b16 %v619
        %v874 = vunpack.c.h.b16 %v619
        %v875 = vunpack.c.l.b16 %v620
        %v876 = vunpack.c.l.b16 %v621
        %v877 = vunpack.c.h.b16 %v621
        %v878 = vunpack.c.l.b16 %v622
        %v879 = vunpack.c.l.b16 %v623
        %v880 = vunpack.c.h.b16 %v623
        %v881 = vunpack.c.l.b16 %v624
        %v882 = vunpack.c.l.b16 %v625
        %v883 = vunpack.c.h.b16 %v625
        %v884 = vunpack.c.l.b16 %v626
        %v885 = vunpack.c.l.b16 %v627
        %v886 = vunpack.c.h.b16 %v627
        %v887 = vunpack.c.l.b16 %v628
        %v888 = vunpack.c.l.b16 %v629
        %v889 = vunpack.c.h.b16 %v629
        %v890 = vunpack.c.l.b16 %v630
        %v891 = vunpack.c.l.b16 %v631
        %v892 = vunpack.c.h.b16 %v631
        %v893 = vunpack.c.l.b16 %v632
        %v894 = vunpack.c.l.b16 %v633
        %v895 = vunpack.c.h.b16 %v633
        %v896 = vunpack.c.l.b16 %v634
        %v897 = vunpack.c.l.b16 %v635
        %v898 = vunpack.c.h.b16 %v635
        %v899 = vunpack.c.l.b16 %v636
        %v900 = vpack.c.b16 %v855, %v852
        %v901 = vpack.c.b16 %v856, %v853
        %v902 = vpack.c.b16 %v857, %v854
        %v903 = vpack.c.b16 %v861, %v858
        %v904 = vpack.c.b16 %v862, %v859
        %v905 = vpack.c.b16 %v863, %v860
        %v906 = vpack.c.b16 %v867, %v864
        %v907 = vpack.c.b16 %v868, %v865
        %v908 = vpack.c.b16 %v869, %v866
        %v909 = vpack.c.b16 %v873, %v870
        %v910 = vpack.c.b16 %v874, %v871
        %v911 = vpack.c.b16 %v875, %v872
        %v912 = vpack.c.b16 %v879, %v876
        %v913 = vpack.c.b16 %v880, %v877
        %v914 = vpack.c.b16 %v881, %v878
        %v915 = vpack.c.b16 %v885, %v882
        %v916 = vpack.c.b16 %v886, %v883
        %v917 = vpack.c.b16 %v887, %v884
        %v918 = vpack.c.b16 %v891, %v888
        %v919 = vpack.c.b16 %v892, %v889
        %v920 = vpack.c.b16 %v893, %v890
        %v921 = vpack.c.b16 %v897, %v894
        %v922 = vpack.c.b16 %v898, %v895
        %v923 = vpack.c.b16 %v899, %v896
        %948 = vmatpush.bf16.msra.mxu0 %v921
        %949 = vmatpush.bf16.msra.mxu0 %v918
        %950 = vmatpush.bf16.msra.mxu0 %v915
        %951 = vmatpush.bf16.msra.mxu0 %v912
        %952 = vmatpush.bf16.msra.mxu0 %v909
        %953 = vmatpush.bf16.msra.mxu0 %v906
        %954 = vmatpush.bf16.msra.mxu0 %v903
        %955 = vmatpush.bf16.msra.mxu0 %v900
        %956 = vmatmul.bf16.gmra.mxu0 %v812
        %v957 = vpop.f32.mrf.mxu0
        %v958 = vadd.f32 %v814, %v957
        %v959 = vpop.f32.mrf.mxu0
        %v960 = vadd.f32 %v814, %v959
        %961 = vdwg.mxu0
        %962 = vmatpush.bf16.msra.mxu0 %v922
        %963 = vmatpush.bf16.msra.mxu0 %v919
        %964 = vmatpush.bf16.msra.mxu0 %v916
        %965 = vmatpush.bf16.msra.mxu0 %v913
        %966 = vmatpush.bf16.msra.mxu0 %v910
        %967 = vmatpush.bf16.msra.mxu0 %v907
        %968 = vmatpush.bf16.msra.mxu0 %v904
        %969 = vmatpush.bf16.msra.mxu0 %v901
        %970 = vmatmul.bf16.gmra.mxu0 %v812
        %v971 = vpop.f32.mrf.mxu0
        %v972 = vadd.f32 %v815, %v971
        %v973 = vpop.f32.mrf.mxu0
        %v974 = vadd.f32 %v815, %v973
        %975 = vdwg.mxu0
        %976 = vmatpush.bf16.msra.mxu0 %v923
        %977 = vmatpush.bf16.msra.mxu0 %v920
        %978 = vmatpush.bf16.msra.mxu0 %v917
        %979 = vmatpush.bf16.msra.mxu0 %v914
        %980 = vmatpush.bf16.msra.mxu0 %v911
        %981 = vmatpush.bf16.msra.mxu0 %v908
        %982 = vmatpush.bf16.msra.mxu0 %v905
        %983 = vmatpush.bf16.msra.mxu0 %v902
        %984 = vmatmul.bf16.gmra.mxu0 %v812
        %v985 = vpop.f32.mrf.mxu0
        %v986 = vadd.f32 %v816, %v985
        %v987 = vpop.f32.mrf.mxu0
        %v988 = vadd.f32 %v816, %v987
        %989 = vdwg.mxu0
        %v990 = vpack.c.bf16 %v958, %v958
        %v991 = vpack.c.bf16 %v960, %v960
        %v992 = vpack.c.bf16 %v972, %v972
        %v993 = vpack.c.bf16 %v974, %v974
        %v994 = vpack.c.bf16 %v986, %v986
        %v995 = vpack.c.bf16 %v988, %v988
        %v998 = vunpack.c.l.b16 %v990
        %v999 = vunpack.c.l.b16 %v991
        %v1000 = vpack.c.b16 %v999, %v998
        %v1003 = vunpack.c.l.b16 %v992
        %v1004 = vunpack.c.l.b16 %v993
        %v1005 = vpack.c.b16 %v1004, %v1003
        %vm1006 = vcmask 261120
        %v1008 = vsel %vm1006, %v1000, 0
        %v1011 = vsel %vm1006, %v1005, 0
        %1013 = vmatpush.bf16.xpose.msra.mxu0 0
        %1014 = vmatpush.bf16.xpose.msra.mxu0 0
        %1015 = vmatpush.bf16.xpose.msra.mxu0 0
        %1016 = vmatpush.bf16.xpose.msra.mxu0 0
        %1017 = vmatpush.bf16.xpose.msra.mxu0 0
        %1018 = vmatpush.bf16.xpose.msra.mxu0 0
        %1019 = vmatpush.bf16.xpose.msra.mxu0 0
        %1020 = vmatpush.bf16.xpose.msra.mxu0 %v1011
        %1021 = vmatmul.bf16.gmra.mxu0 %v1008
        %v1022 = vpop.f32.mrf.mxu0
        %v1023 = vadd.f32 0.0, %v1022
        %v1024 = vpop.f32.mrf.mxu0
        %v1025 = vadd.f32 0.0, %v1024
        %1026 = vdwg.mxu0
        %vm1027 = vcmask 130048
        %v1028 = vsel %vm1027, %v1023, -inf
        %1029 = vmax.xlane.f32.xlu0 %v1028
        %v1030 = vpop.xlane.xlu0 %1029
        %v1031 = vsel %vm1027, %v1025, -inf
        %1032 = vmax.xlane.f32.xlu0 %v1031
        %v1033 = vpop.xlane.xlu0 %1032
        %v1034 = vsub.f32 %v1023, %v1030
        %v1035 = vsub.f32 %v1025, %v1033
        %v1036 = vmul.f32 %v1034, 1.442695
        %v1037 = vpow.pop %v1036
        %v1038 = vmul.f32 %v1035, 1.442695
        %v1039 = vpow.pop %v1038
        %v1040 = vsel %vm1027, %v1037, 0.0
        %1041 = vadd.xlane.f32.xlu0 %v1040
        %v1042 = vpop.xlane.xlu0 %1041
        %v1043 = vsel %vm1027, %v1039, 0.0
        %1044 = vadd.xlane.f32.xlu0 %v1043
        %v1045 = vpop.xlane.xlu0 %1044
        %v1046 = vrcp.pop %v1042
        %v1047 = vrcp.pop %v1045
        %v1048 = vmul.f32 %v1037, %v1046
        %v1049 = vmul.f32 %v1039, %v1047
        %v1050 = vpack.c.bf16 %v1048, %v1048
        %v1051 = vpack.c.bf16 %v1049, %v1049
        %v1054 = vunpack.c.l.b16 %v1050
        %v1055 = vunpack.c.l.b16 %v1051
        %v1056 = vpack.c.b16 %v1055, %v1054
        %v1059 = vunpack.c.l.b16 %v994
        %v1060 = vunpack.c.l.b16 %v995
        %v1061 = vpack.c.b16 %v1060, %v1059
        %v1064 = vsel %vm1027, %v1056, 0
        %1066 = vmatpush.bf16.msra.mxu0 0
        %1067 = vmatpush.bf16.msra.mxu0 0
        %1068 = vmatpush.bf16.msra.mxu0 0
        %1069 = vmatpush.bf16.msra.mxu0 0
        %1070 = vmatpush.bf16.msra.mxu0 0
        %1071 = vmatpush.bf16.msra.mxu0 0
        %1072 = vmatpush.bf16.msra.mxu0 0
        %1073 = vmatpush.bf16.msra.mxu0 %v1061
        %1074 = vmatmul.bf16.gmra.mxu0 %v1064
        %v1075 = vpop.f32.mrf.mxu0
        %v1076 = vadd.f32 0.0, %v1075
        %v1077 = vpop.f32.mrf.mxu0
        %v1078 = vadd.f32 0.0, %v1077
        %1079 = vdwg.mxu0
        %v1080 = vpack.c.bf16 %v1076, %v1076
        %v1081 = vpack.c.bf16 %v1078, %v1078
        %vm1082 = vcmask 257024
        %1083 = vst.msk [vmem:[#allocation2] sm:$0xf] %vm1082, %v1080
        %1084 = vst.msk [vmem:[#allocation2 + $0x4] sm:$0xf] %vm1082, %v1081
        %1085 = vrot.lane.b32.xlu0 %v1000, 96
        %v1086 = vpop.permute.xlu0 %1085
        %1087 = vrot.lane.b32.xlu0 %v1005, 96
        %v1088 = vpop.permute.xlu0 %1087
        %v1090 = vsel %vm1006, %v1086, 0
        %v1093 = vsel %vm1006, %v1088, 0
        %1095 = vmatpush.bf16.xpose.msra.mxu0 0
        %1096 = vmatpush.bf16.xpose.msra.mxu0 0
        %1097 = vmatpush.bf16.xpose.msra.mxu0 0
        %1098 = vmatpush.bf16.xpose.msra.mxu0 0
        %1099 = vmatpush.bf16.xpose.msra.mxu0 0
        %1100 = vmatpush.bf16.xpose.msra.mxu0 0
        %1101 = vmatpush.bf16.xpose.msra.mxu0 0
        %1102 = vmatpush.bf16.xpose.msra.mxu0 %v1093
        %1103 = vmatmul.bf16.gmra.mxu0 %v1090
        %v1104 = vpop.f32.mrf.mxu0
        %v1105 = vadd.f32 0.0, %v1104
        %v1106 = vpop.f32.mrf.mxu0
        %v1107 = vadd.f32 0.0, %v1106
        %1108 = vdwg.mxu0
        %v1109 = vsel %vm1027, %v1105, -inf
        %1110 = vmax.xlane.f32.xlu0 %v1109
        %v1111 = vpop.xlane.xlu0 %1110
        %v1112 = vsel %vm1027, %v1107, -inf
        %1113 = vmax.xlane.f32.xlu0 %v1112
        %v1114 = vpop.xlane.xlu0 %1113
        %v1115 = vsub.f32 %v1105, %v1111
        %v1116 = vsub.f32 %v1107, %v1114
        %v1117 = vmul.f32 %v1115, 1.442695
        %v1118 = vpow.pop %v1117
        %v1119 = vmul.f32 %v1116, 1.442695
        %v1120 = vpow.pop %v1119
        %v1121 = vsel %vm1027, %v1118, 0.0
        %1122 = vadd.xlane.f32.xlu0 %v1121
        %v1123 = vpop.xlane.xlu0 %1122
        %v1124 = vsel %vm1027, %v1120, 0.0
        %1125 = vadd.xlane.f32.xlu0 %v1124
        %v1126 = vpop.xlane.xlu0 %1125
        %v1127 = vrcp.pop %v1123
        %v1128 = vrcp.pop %v1126
        %v1129 = vmul.f32 %v1118, %v1127
        %v1130 = vmul.f32 %v1120, %v1128
        %v1131 = vpack.c.bf16 %v1129, %v1129
        %v1132 = vpack.c.bf16 %v1130, %v1130
        %v1135 = vunpack.c.l.b16 %v1131
        %v1136 = vunpack.c.l.b16 %v1132
        %v1137 = vpack.c.b16 %v1136, %v1135
        %1138 = vrot.lane.b32.xlu0 %v1061, 96
        %v1139 = vpop.permute.xlu0 %1138
        %v1142 = vsel %vm1027, %v1137, 0
        %1144 = vmatpush.bf16.msra.mxu0 0
        %1145 = vmatpush.bf16.msra.mxu0 0
        %1146 = vmatpush.bf16.msra.mxu0 0
        %1147 = vmatpush.bf16.msra.mxu0 0
        %1148 = vmatpush.bf16.msra.mxu0 0
        %1149 = vmatpush.bf16.msra.mxu0 0
        %1150 = vmatpush.bf16.msra.mxu0 0
        %1151 = vmatpush.bf16.msra.mxu0 %v1139
        %1152 = vmatmul.bf16.gmra.mxu0 %v1142
        %v1153 = vpop.f32.mrf.mxu0
        %v1154 = vadd.f32 0.0, %v1153
        %v1155 = vpop.f32.mrf.mxu0
        %v1156 = vadd.f32 0.0, %v1155
        %1157 = vdwg.mxu0
        %v1158 = vpack.c.bf16 %v1154, %v1154
        %v1159 = vpack.c.bf16 %v1156, %v1156
        %1162 = vrot.lane.b32.xlu0 %v1158, 32
        %v1163 = vpop.permute.xlu0 %1162
        %1164 = vrot.lane.b32.xlu0 %v1159, 32
        %v1165 = vpop.permute.xlu0 %1164
        %vm1168 = vcmask 519424
        %1169 = vst.msk [vmem:[#allocation2] sm:$0xf] %vm1168, %v1163
        %1170 = vst.msk [vmem:[#allocation2 + $0x4] sm:$0xf] %vm1168, %v1165
        %1171 = vrot.lane.b32.xlu0 %v1000, 64
        %v1172 = vpop.permute.xlu0 %1171
        %1173 = vrot.lane.b32.xlu0 %v1005, 64
        %v1174 = vpop.permute.xlu0 %1173
        %v1176 = vsel %vm1006, %v1172, 0
        %v1179 = vsel %vm1006, %v1174, 0
        %1181 = vmatpush.bf16.xpose.msra.mxu0 0
        %1182 = vmatpush.bf16.xpose.msra.mxu0 0
        %1183 = vmatpush.bf16.xpose.msra.mxu0 0
        %1184 = vmatpush.bf16.xpose.msra.mxu0 0
        %1185 = vmatpush.bf16.xpose.msra.mxu0 0
        %1186 = vmatpush.bf16.xpose.msra.mxu0 0
        %1187 = vmatpush.bf16.xpose.msra.mxu0 0
        %1188 = vmatpush.bf16.xpose.msra.mxu0 %v1179
        %1189 = vmatmul.bf16.gmra.mxu0 %v1176
        %v1190 = vpop.f32.mrf.mxu0
        %v1191 = vadd.f32 0.0, %v1190
        %v1192 = vpop.f32.mrf.mxu0
        %v1193 = vadd.f32 0.0, %v1192
        %1194 = vdwg.mxu0
        %v1195 = vsel %vm1027, %v1191, -inf
        %1196 = vmax.xlane.f32.xlu0 %v1195
        %v1197 = vpop.xlane.xlu0 %1196
        %v1198 = vsel %vm1027, %v1193, -inf
        %1199 = vmax.xlane.f32.xlu0 %v1198
        %v1200 = vpop.xlane.xlu0 %1199
        %v1201 = vsub.f32 %v1191, %v1197
        %v1202 = vsub.f32 %v1193, %v1200
        %v1203 = vmul.f32 %v1201, 1.442695
        %v1204 = vpow.pop %v1203
        %v1205 = vmul.f32 %v1202, 1.442695
        %v1206 = vpow.pop %v1205
        %v1207 = vsel %vm1027, %v1204, 0.0
        %1208 = vadd.xlane.f32.xlu0 %v1207
        %v1209 = vpop.xlane.xlu0 %1208
        %v1210 = vsel %vm1027, %v1206, 0.0
        %1211 = vadd.xlane.f32.xlu0 %v1210
        %v1212 = vpop.xlane.xlu0 %1211
        %v1213 = vrcp.pop %v1209
        %v1214 = vrcp.pop %v1212
        %v1215 = vmul.f32 %v1204, %v1213
        %v1216 = vmul.f32 %v1206, %v1214
        %v1217 = vpack.c.bf16 %v1215, %v1215
        %v1218 = vpack.c.bf16 %v1216, %v1216
        %v1221 = vunpack.c.l.b16 %v1217
        %v1222 = vunpack.c.l.b16 %v1218
        %v1223 = vpack.c.b16 %v1222, %v1221
        %1224 = vrot.lane.b32.xlu0 %v1061, 64
        %v1225 = vpop.permute.xlu0 %1224
        %v1228 = vsel %vm1027, %v1223, 0
        %1230 = vmatpush.bf16.msra.mxu0 0
        %1231 = vmatpush.bf16.msra.mxu0 0
        %1232 = vmatpush.bf16.msra.mxu0 0
        %1233 = vmatpush.bf16.msra.mxu0 0
        %1234 = vmatpush.bf16.msra.mxu0 0
        %1235 = vmatpush.bf16.msra.mxu0 0
        %1236 = vmatpush.bf16.msra.mxu0 0
        %1237 = vmatpush.bf16.msra.mxu0 %v1225
        %1238 = vmatmul.bf16.gmra.mxu0 %v1228
        %v1239 = vpop.f32.mrf.mxu0
        %v1240 = vadd.f32 0.0, %v1239
        %v1241 = vpop.f32.mrf.mxu0
        %v1242 = vadd.f32 0.0, %v1241
        %1243 = vdwg.mxu0
        %v1244 = vpack.c.bf16 %v1240, %v1240
        %v1245 = vpack.c.bf16 %v1242, %v1242
        %1248 = vrot.lane.b32.xlu0 %v1244, 64
        %v1249 = vpop.permute.xlu0 %1248
        %1250 = vrot.lane.b32.xlu0 %v1245, 64
        %v1251 = vpop.permute.xlu0 %1250
        %vm1254 = vcmask 781824
        %1255 = vst.msk [vmem:[#allocation2] sm:$0xf] %vm1254, %v1249
        %1256 = vst.msk [vmem:[#allocation2 + $0x4] sm:$0xf] %vm1254, %v1251
        %1257 = vrot.lane.b32.xlu0 %v1000, 32
        %v1258 = vpop.permute.xlu0 %1257
        %1259 = vrot.lane.b32.xlu0 %v1005, 32
        %v1260 = vpop.permute.xlu0 %1259
        %v1262 = vsel %vm1006, %v1258, 0
        %v1265 = vsel %vm1006, %v1260, 0
        %1267 = vmatpush.bf16.xpose.msra.mxu0 0
        %1268 = vmatpush.bf16.xpose.msra.mxu0 0
        %1269 = vmatpush.bf16.xpose.msra.mxu0 0
        %1270 = vmatpush.bf16.xpose.msra.mxu0 0
        %1271 = vmatpush.bf16.xpose.msra.mxu0 0
        %1272 = vmatpush.bf16.xpose.msra.mxu0 0
        %1273 = vmatpush.bf16.xpose.msra.mxu0 0
        %1274 = vmatpush.bf16.xpose.msra.mxu0 %v1265
        %1275 = vmatmul.bf16.gmra.mxu0 %v1262
        %v1276 = vpop.f32.mrf.mxu0
        %v1277 = vadd.f32 0.0, %v1276
        %v1278 = vpop.f32.mrf.mxu0
        %v1279 = vadd.f32 0.0, %v1278
        %1280 = vdwg.mxu0
        %v1281 = vsel %vm1027, %v1277, -inf
        %1282 = vmax.xlane.f32.xlu0 %v1281
        %v1283 = vpop.xlane.xlu0 %1282
        %v1284 = vsel %vm1027, %v1279, -inf
        %1285 = vmax.xlane.f32.xlu0 %v1284
        %v1286 = vpop.xlane.xlu0 %1285
        %v1287 = vsub.f32 %v1277, %v1283
        %v1288 = vsub.f32 %v1279, %v1286
        %v1289 = vmul.f32 %v1287, 1.442695
        %v1290 = vpow.pop %v1289
        %v1291 = vmul.f32 %v1288, 1.442695
        %v1292 = vpow.pop %v1291
        %v1293 = vsel %vm1027, %v1290, 0.0
        %1294 = vadd.xlane.f32.xlu0 %v1293
        %v1295 = vpop.xlane.xlu0 %1294
        %v1296 = vsel %vm1027, %v1292, 0.0
        %1297 = vadd.xlane.f32.xlu0 %v1296
        %v1298 = vpop.xlane.xlu0 %1297
        %v1299 = vrcp.pop %v1295
        %v1300 = vrcp.pop %v1298
        %v1301 = vmul.f32 %v1290, %v1299
        %v1302 = vmul.f32 %v1292, %v1300
        %v1303 = vpack.c.bf16 %v1301, %v1301
        %v1304 = vpack.c.bf16 %v1302, %v1302
        %v1307 = vunpack.c.l.b16 %v1303
        %v1308 = vunpack.c.l.b16 %v1304
        %v1309 = vpack.c.b16 %v1308, %v1307
        %1310 = vrot.lane.b32.xlu0 %v1061, 32
        %v1311 = vpop.permute.xlu0 %1310
        %v1314 = vsel %vm1027, %v1309, 0
        %1316 = vmatpush.bf16.msra.mxu0 0
        %1317 = vmatpush.bf16.msra.mxu0 0
        %1318 = vmatpush.bf16.msra.mxu0 0
        %1319 = vmatpush.bf16.msra.mxu0 0
        %1320 = vmatpush.bf16.msra.mxu0 0
        %1321 = vmatpush.bf16.msra.mxu0 0
        %1322 = vmatpush.bf16.msra.mxu0 0
        %1323 = vmatpush.bf16.msra.mxu0 %v1311
        %1324 = vmatmul.bf16.gmra.mxu0 %v1314
        %v1325 = vpop.f32.mrf.mxu0
        %v1326 = vadd.f32 0.0, %v1325
        %v1327 = vpop.f32.mrf.mxu0
        %v1328 = vadd.f32 0.0, %v1327
        %1329 = vdwg.mxu0
        %v1330 = vpack.c.bf16 %v1326, %v1326
        %v1331 = vpack.c.bf16 %v1328, %v1328
        %1334 = vrot.lane.b32.xlu0 %v1330, 96
        %v1335 = vpop.permute.xlu0 %1334
        %1336 = vrot.lane.b32.xlu0 %v1331, 96
        %v1337 = vpop.permute.xlu0 %1336
        %vm1340 = vcmask 1044224
        %1341 = vst.msk [vmem:[#allocation2] sm:$0xf] %vm1340, %v1335
        %1342 = vst.msk [vmem:[#allocation2 + $0x4] sm:$0xf] %vm1340, %v1337
        %v1343 = vld [vmem:[#allocation2] sm:$0xf]
        %v1344 = vld [vmem:[#allocation2 + $0x4] sm:$0xf]
        %v1346 = vperm.slane %v654, 0
        %v1350 = vunpack.c.l.b16 %v1343
        %v1351 = vunpack.c.l.b16 %v1344
        %v1352 = vpack.c.b16 %v1351, %v1350
        %v1370 = vunpack.c.l.b16 %v638
        %v1371 = vunpack.c.l.b16 %v639
        %v1372 = vunpack.c.l.b16 %v640
        %v1373 = vunpack.c.l.b16 %v641
        %v1374 = vunpack.c.l.b16 %v642
        %v1375 = vunpack.c.l.b16 %v643
        %v1376 = vunpack.c.l.b16 %v644
        %v1377 = vunpack.c.l.b16 %v645
        %v1378 = vunpack.c.l.b16 %v646
        %v1379 = vunpack.c.l.b16 %v647
        %v1380 = vunpack.c.l.b16 %v648
        %v1381 = vunpack.c.l.b16 %v649
        %v1382 = vunpack.c.l.b16 %v650
        %v1383 = vunpack.c.l.b16 %v651
        %v1384 = vunpack.c.l.b16 %v652
        %v1385 = vunpack.c.l.b16 %v653
        %v1386 = vpack.c.b16 %v1371, %v1370
        %v1387 = vpack.c.b16 %v1373, %v1372
        %v1388 = vpack.c.b16 %v1375, %v1374
        %v1389 = vpack.c.b16 %v1377, %v1376
        %v1390 = vpack.c.b16 %v1379, %v1378
        %v1391 = vpack.c.b16 %v1381, %v1380
        %v1392 = vpack.c.b16 %v1383, %v1382
        %v1393 = vpack.c.b16 %v1385, %v1384
        %1402 = vmatpush.bf16.msra.mxu0 %v1393
        %1403 = vmatpush.bf16.msra.mxu0 %v1392
        %1404 = vmatpush.bf16.msra.mxu0 %v1391
        %1405 = vmatpush.bf16.msra.mxu0 %v1390
        %1406 = vmatpush.bf16.msra.mxu0 %v1389
        %1407 = vmatpush.bf16.msra.mxu0 %v1388
        %1408 = vmatpush.bf16.msra.mxu0 %v1387
        %1409 = vmatpush.bf16.msra.mxu0 %v1386
        %1410 = vmatmul.bf16.gmra.mxu0 %v1352
        %v1411 = vpop.f32.mrf.mxu0
        %v1412 = vadd.f32 %v1346, %v1411
        %v1413 = vpop.f32.mrf.mxu0
        %v1414 = vadd.f32 %v1346, %v1413
        %1415 = vdwg.mxu0
        %v1416 = vadd.f32 %v753, %v1412
        %v1417 = vadd.f32 %v754, %v1414
        %1418 = vadd.xlane.f32.xlu0 %v1416
        %v1419 = vpop.xlane.xlu0 %1418
        %1420 = vadd.xlane.f32.xlu0 %v1417
        %v1421 = vpop.xlane.xlu0 %1420
        %v1422 = vmul.f32 %v1419, %v765
        %v1423 = vmul.f32 %v1421, %v765
        %v1424 = vsub.f32 %v1416, %v1422
        %v1425 = vsub.f32 %v1417, %v1423
        %v1426 = vmul.f32 %v1424, %v1424
        %v1427 = vmul.f32 %v1425, %v1425
        %1428 = vadd.xlane.f32.xlu0 %v1426
        %v1429 = vpop.xlane.xlu0 %1428
        %1430 = vadd.xlane.f32.xlu0 %v1427
        %v1431 = vpop.xlane.xlu0 %1430
        %v1432 = vmul.f32 %v1429, %v765
        %v1433 = vmul.f32 %v1431, %v765
        %v1434 = vadd.f32 %v1432, 1e-06
        %v1435 = vadd.f32 %v1433, 1e-06
        %v1436 = vrsqrt.pop %v1434
        %v1437 = vmul.f32 %v1436, %v1434
        %v1438 = vmul.f32 %v1437, %v1436
        %v1439 = vmul.f32 0.5, %v1438
        %v1440 = vsub.f32 1.5, %v1439
        %v1441 = vmul.f32 %v1436, %v1440
        %vm1442 = vweird.f32 %v1434
        %vm1443 = vweird.f32 %v1436
        %vm1444 = vmor %vm1442, %vm1443
        %v1445 = vsel %vm1444, %v1436, %v1441
        %v1446 = vrsqrt.pop %v1435
        %v1447 = vmul.f32 %v1446, %v1435
        %v1448 = vmul.f32 %v1447, %v1446
        %v1449 = vmul.f32 0.5, %v1448
        %v1450 = vsub.f32 1.5, %v1449
        %v1451 = vmul.f32 %v1446, %v1450
        %vm1452 = vweird.f32 %v1435
        %vm1453 = vweird.f32 %v1446
        %vm1454 = vmor %vm1452, %vm1453
        %v1455 = vsel %vm1454, %v1446, %v1451
        %v1456 = vmul.f32 %v1424, %v1445
        %v1457 = vmul.f32 %v1425, %v1455
        %v1459 = vperm.slane %v603, 0
        %v1461 = vmul.f32 %v1456, %v1459
        %v1462 = vmul.f32 %v1457, %v1459
        %v1464 = vperm.slane %v604, 0
        %v1466 = vadd.f32 %v1461, %v1464
        %v1467 = vadd.f32 %v1462, %v1464
        %v1468 = vpack.c.bf16 %v1467, %v1466
        %v1470 = vperm.slane %v687, 0
        %v1471 = vperm.slane %v687, 1
        %v1472 = vperm.slane %v687, 2
        %v1473 = vperm.slane %v687, 3
        %v1510 = vunpack.c.l.b16 %v655
        %v1511 = vunpack.c.h.b16 %v655
        %v1512 = vunpack.c.l.b16 %v656
        %v1513 = vunpack.c.h.b16 %v656
        %v1514 = vunpack.c.l.b16 %v657
        %v1515 = vunpack.c.h.b16 %v657
        %v1516 = vunpack.c.l.b16 %v658
        %v1517 = vunpack.c.h.b16 %v658
        %v1518 = vunpack.c.l.b16 %v659
        %v1519 = vunpack.c.h.b16 %v659
        %v1520 = vunpack.c.l.b16 %v660
        %v1521 = vunpack.c.h.b16 %v660
        %v1522 = vunpack.c.l.b16 %v661
        %v1523 = vunpack.c.h.b16 %v661
        %v1524 = vunpack.c.l.b16 %v662
        %v1525 = vunpack.c.h.b16 %v662
        %v1526 = vunpack.c.l.b16 %v663
        %v1527 = vunpack.c.h.b16 %v663
        %v1528 = vunpack.c.l.b16 %v664
        %v1529 = vunpack.c.h.b16 %v664
        %v1530 = vunpack.c.l.b16 %v665
        %v1531 = vunpack.c.h.b16 %v665
        %v1532 = vunpack.c.l.b16 %v666
        %v1533 = vunpack.c.h.b16 %v666
        %v1534 = vunpack.c.l.b16 %v667
        %v1535 = vunpack.c.h.b16 %v667
        %v1536 = vunpack.c.l.b16 %v668
        %v1537 = vunpack.c.h.b16 %v668
        %v1538 = vunpack.c.l.b16 %v669
        %v1539 = vunpack.c.h.b16 %v669
        %v1540 = vunpack.c.l.b16 %v670
        %v1541 = vunpack.c.h.b16 %v670
        %v1542 = vunpack.c.l.b16 %v671
        %v1543 = vunpack.c.h.b16 %v671
        %v1544 = vunpack.c.l.b16 %v672
        %v1545 = vunpack.c.h.b16 %v672
        %v1546 = vunpack.c.l.b16 %v673
        %v1547 = vunpack.c.h.b16 %v673
        %v1548 = vunpack.c.l.b16 %v674
        %v1549 = vunpack.c.h.b16 %v674
        %v1550 = vunpack.c.l.b16 %v675
        %v1551 = vunpack.c.h.b16 %v675
        %v1552 = vunpack.c.l.b16 %v676
        %v1553 = vunpack.c.h.b16 %v676
        %v1554 = vunpack.c.l.b16 %v677
        %v1555 = vunpack.c.h.b16 %v677
        %v1556 = vunpack.c.l.b16 %v678
        %v1557 = vunpack.c.h.b16 %v678
        %v1558 = vunpack.c.l.b16 %v679
        %v1559 = vunpack.c.h.b16 %v679
        %v1560 = vunpack.c.l.b16 %v680
        %v1561 = vunpack.c.h.b16 %v680
        %v1562 = vunpack.c.l.b16 %v681
        %v1563 = vunpack.c.h.b16 %v681
        %v1564 = vunpack.c.l.b16 %v682
        %v1565 = vunpack.c.h.b16 %v682
        %v1566 = vunpack.c.l.b16 %v683
        %v1567 = vunpack.c.h.b16 %v683
        %v1568 = vunpack.c.l.b16 %v684
        %v1569 = vunpack.c.h.b16 %v684
        %v1570 = vunpack.c.l.b16 %v685
        %v1571 = vunpack.c.h.b16 %v685
        %v1572 = vunpack.c.l.b16 %v686
        %v1573 = vunpack.c.h.b16 %v686
        %v1574 = vpack.c.b16 %v1514, %v1510
        %v1575 = vpack.c.b16 %v1515, %v1511
        %v1576 = vpack.c.b16 %v1516, %v1512
        %v1577 = vpack.c.b16 %v1517, %v1513
        %v1578 = vpack.c.b16 %v1522, %v1518
        %v1579 = vpack.c.b16 %v1523, %v1519
        %v1580 = vpack.c.b16 %v1524, %v1520
        %v1581 = vpack.c.b16 %v1525, %v1521
        %v1582 = vpack.c.b16 %v1530, %v1526
        %v1583 = vpack.c.b16 %v1531, %v1527
        %v1584 = vpack.c.b16 %v1532, %v1528
        %v1585 = vpack.c.b16 %v1533, %v1529
        %v1586 = vpack.c.b16 %v1538, %v1534
        %v1587 = vpack.c.b16 %v1539, %v1535
        %v1588 = vpack.c.b16 %v1540, %v1536
        %v1589 = vpack.c.b16 %v1541, %v1537
        %v1590 = vpack.c.b16 %v1546, %v1542
        %v1591 = vpack.c.b16 %v1547, %v1543
        %v1592 = vpack.c.b16 %v1548, %v1544
        %v1593 = vpack.c.b16 %v1549, %v1545
        %v1594 = vpack.c.b16 %v1554, %v1550
        %v1595 = vpack.c.b16 %v1555, %v1551
        %v1596 = vpack.c.b16 %v1556, %v1552
        %v1597 = vpack.c.b16 %v1557, %v1553
        %v1598 = vpack.c.b16 %v1562, %v1558
        %v1599 = vpack.c.b16 %v1563, %v1559
        %v1600 = vpack.c.b16 %v1564, %v1560
        %v1601 = vpack.c.b16 %v1565, %v1561
        %v1602 = vpack.c.b16 %v1570, %v1566
        %v1603 = vpack.c.b16 %v1571, %v1567
        %v1604 = vpack.c.b16 %v1572, %v1568
        %v1605 = vpack.c.b16 %v1573, %v1569
        %1638 = vmatpush.bf16.msra.mxu0 %v1602
        %1639 = vmatpush.bf16.msra.mxu0 %v1598
        %1640 = vmatpush.bf16.msra.mxu0 %v1594
        %1641 = vmatpush.bf16.msra.mxu0 %v1590
        %1642 = vmatpush.bf16.msra.mxu0 %v1586
        %1643 = vmatpush.bf16.msra.mxu0 %v1582
        %1644 = vmatpush.bf16.msra.mxu0 %v1578
        %1645 = vmatpush.bf16.msra.mxu0 %v1574
        %1646 = vmatmul.bf16.gmra.mxu0 %v1468
        %v1647 = vpop.f32.mrf.mxu0
        %v1648 = vadd.f32 %v1470, %v1647
        %v1649 = vpop.f32.mrf.mxu0
        %v1650 = vadd.f32 %v1470, %v1649
        %1651 = vdwg.mxu0
        %1652 = vmatpush.bf16.msra.mxu0 %v1603
        %1653 = vmatpush.bf16.msra.mxu0 %v1599
        %1654 = vmatpush.bf16.msra.mxu0 %v1595
        %1655 = vmatpush.bf16.msra.mxu0 %v1591
        %1656 = vmatpush.bf16.msra.mxu0 %v1587
        %1657 = vmatpush.bf16.msra.mxu0 %v1583
        %1658 = vmatpush.bf16.msra.mxu0 %v1579
        %1659 = vmatpush.bf16.msra.mxu0 %v1575
        %1660 = vmatmul.bf16.gmra.mxu0 %v1468
        %v1661 = vpop.f32.mrf.mxu0
        %v1662 = vadd.f32 %v1471, %v1661
        %v1663 = vpop.f32.mrf.mxu0
        %v1664 = vadd.f32 %v1471, %v1663
        %1665 = vdwg.mxu0
        %1666 = vmatpush.bf16.msra.mxu0 %v1604
        %1667 = vmatpush.bf16.msra.mxu0 %v1600
        %1668 = vmatpush.bf16.msra.mxu0 %v1596
        %1669 = vmatpush.bf16.msra.mxu0 %v1592
        %1670 = vmatpush.bf16.msra.mxu0 %v1588
        %1671 = vmatpush.bf16.msra.mxu0 %v1584
        %1672 = vmatpush.bf16.msra.mxu0 %v1580
        %1673 = vmatpush.bf16.msra.mxu0 %v1576
        %1674 = vmatmul.bf16.gmra.mxu0 %v1468
        %v1675 = vpop.f32.mrf.mxu0
        %v1676 = vadd.f32 %v1472, %v1675
        %v1677 = vpop.f32.mrf.mxu0
        %v1678 = vadd.f32 %v1472, %v1677
        %1679 = vdwg.mxu0
        %1680 = vmatpush.bf16.msra.mxu0 %v1605
        %1681 = vmatpush.bf16.msra.mxu0 %v1601
        %1682 = vmatpush.bf16.msra.mxu0 %v1597
        %1683 = vmatpush.bf16.msra.mxu0 %v1593
        %1684 = vmatpush.bf16.msra.mxu0 %v1589
        %1685 = vmatpush.bf16.msra.mxu0 %v1585
        %1686 = vmatpush.bf16.msra.mxu0 %v1581
        %1687 = vmatpush.bf16.msra.mxu0 %v1577
        %1688 = vmatmul.bf16.gmra.mxu0 %v1468
        %v1689 = vpop.f32.mrf.mxu0
        %v1690 = vadd.f32 %v1473, %v1689
        %v1691 = vpop.f32.mrf.mxu0
        %v1692 = vadd.f32 %v1473, %v1691
        %1693 = vdwg.mxu0
        %v1694 = vmul.f32 %v1648, 0.5
        %v1695 = vmul.f32 %v1662, 0.5
        %v1696 = vmul.f32 %v1676, 0.5
        %v1697 = vmul.f32 %v1690, 0.5
        %v1698 = vmul.f32 %v1650, 0.5
        %v1699 = vmul.f32 %v1664, 0.5
        %v1700 = vmul.f32 %v1678, 0.5
        %v1701 = vmul.f32 %v1692, 0.5
        %v1702 = vmul.f32 %v1648, 0.70710677
        %v1703 = vmul.f32 %v1662, 0.70710677
        %v1704 = vmul.f32 %v1676, 0.70710677
        %v1705 = vmul.f32 %v1690, 0.70710677
        %v1706 = vmul.f32 %v1650, 0.70710677
        %v1707 = vmul.f32 %v1664, 0.70710677
        %v1708 = vmul.f32 %v1678, 0.70710677
        %v1709 = vmul.f32 %v1692, 0.70710677
        %v1710 = vmul.f32 %v1702, %v1702
        %v1711 = vmin.f32 16.0, %v1710
        %v1712 = vmul.f32 %v1711, 2.1237322e-06
        %v1713 = vadd.f32 %v1712, 0.00028619796
        %v1714 = vmul.f32 %v1711, %v1713
        %v1715 = vadd.f32 %v1714, 0.0036580483
        %v1716 = vmul.f32 %v1711, %v1715
        %v1717 = vadd.f32 %v1716, 0.05243302
        %v1718 = vmul.f32 %v1711, %v1717
        %v1719 = vadd.f32 %v1718, 0.18741608
        %v1720 = vmul.f32 %v1711, %v1719
        %v1721 = vadd.f32 %v1720, 1.1283791
        %v1722 = vmul.f32 %v1702, %v1721
        %v1723 = vmul.f32 %v1711, 3.8918573e-05
        %v1724 = vadd.f32 %v1723, 0.001143296
        %v1725 = vmul.f32 %v1711, %v1724
        %v1726 = vadd.f32 %v1725, 0.014752088
        %v1727 = vmul.f32 %v1711, %v1726
        %v1728 = vadd.f32 %v1727, 0.112945676
        %v1729 = vmul.f32 %v1711, %v1728
        %v1730 = vadd.f32 %v1729, 0.4994258
        %v1731 = vmul.f32 %v1711, %v1730
        %v1732 = vadd.f32 %v1731, 1.0
        %v1733 = vrcp.pop %v1732
        %v1734 = vmul.f32 %v1732, %v1733
        %v1735 = vsub.f32 1.0, %v1734
        %v1736 = vmul.f32 %v1733, %v1735
        %v1737 = vadd.f32 %v1733, %v1736
        %vm1738 = vweird.f32 %v1732
        %vm1739 = vweird.f32 %v1733
        %vm1740 = vmor %vm1738, %vm1739
        %v1741 = vsel %vm1740, %v1733, %v1737
        %v1742 = vand.u32 2147483647, %v1732
        %vm1743 = vcmp.eq.f32.partialorder %v1742, 8.507059e+37
        %v1744 = vand.u32 %v1732, 2147483648
        %v1745 = vor.u32 1.1754944e-38, %v1744
        %v1746 = vsel %vm1743, %v1745, %v1741
        %v1747 = vmul.f32 %v1722, %v1746
        %v1748 = vmin.f32 %v1747, 1.0
        %v1749 = vmax.f32 %v1748, -1.0
        %v1750 = vmul.f32 %v1703, %v1703
        %v1751 = vmin.f32 16.0, %v1750
        %v1752 = vmul.f32 %v1751, 2.1237322e-06
        %v1753 = vadd.f32 %v1752, 0.00028619796
        %v1754 = vmul.f32 %v1751, %v1753
        %v1755 = vadd.f32 %v1754, 0.0036580483
        %v1756 = vmul.f32 %v1751, %v1755
        %v1757 = vadd.f32 %v1756, 0.05243302
        %v1758 = vmul.f32 %v1751, %v1757
        %v1759 = vadd.f32 %v1758, 0.18741608
        %v1760 = vmul.f32 %v1751, %v1759
        %v1761 = vadd.f32 %v1760, 1.1283791
        %v1762 = vmul.f32 %v1703, %v1761
        %v1763 = vmul.f32 %v1751, 3.8918573e-05
        %v1764 = vadd.f32 %v1763, 0.001143296
        %v1765 = vmul.f32 %v1751, %v1764
        %v1766 = vadd.f32 %v1765, 0.014752088
        %v1767 = vmul.f32 %v1751, %v1766
        %v1768 = vadd.f32 %v1767, 0.112945676
        %v1769 = vmul.f32 %v1751, %v1768
        %v1770 = vadd.f32 %v1769, 0.4994258
        %v1771 = vmul.f32 %v1751, %v1770
        %v1772 = vadd.f32 %v1771, 1.0
        %v1773 = vrcp.pop %v1772
        %v1774 = vmul.f32 %v1772, %v1773
        %v1775 = vsub.f32 1.0, %v1774
        %v1776 = vmul.f32 %v1773, %v1775
        %v1777 = vadd.f32 %v1773, %v1776
        %vm1778 = vweird.f32 %v1772
        %vm1779 = vweird.f32 %v1773
        %vm1780 = vmor %vm1778, %vm1779
        %v1781 = vsel %vm1780, %v1773, %v1777
        %v1782 = vand.u32 2147483647, %v1772
        %vm1783 = vcmp.eq.f32.partialorder %v1782, 8.507059e+37
        %v1784 = vand.u32 %v1772, 2147483648
        %v1785 = vor.u32 1.1754944e-38, %v1784
        %v1786 = vsel %vm1783, %v1785, %v1781
        %v1787 = vmul.f32 %v1762, %v1786
        %v1788 = vmin.f32 %v1787, 1.0
        %v1789 = vmax.f32 %v1788, -1.0
        %v1790 = vmul.f32 %v1704, %v1704
        %v1791 = vmin.f32 16.0, %v1790
        %v1792 = vmul.f32 %v1791, 2.1237322e-06
        %v1793 = vadd.f32 %v1792, 0.00028619796
        %v1794 = vmul.f32 %v1791, %v1793
        %v1795 = vadd.f32 %v1794, 0.0036580483
        %v1796 = vmul.f32 %v1791, %v1795
        %v1797 = vadd.f32 %v1796, 0.05243302
        %v1798 = vmul.f32 %v1791, %v1797
        %v1799 = vadd.f32 %v1798, 0.18741608
        %v1800 = vmul.f32 %v1791, %v1799
        %v1801 = vadd.f32 %v1800, 1.1283791
        %v1802 = vmul.f32 %v1704, %v1801
        %v1803 = vmul.f32 %v1791, 3.8918573e-05
        %v1804 = vadd.f32 %v1803, 0.001143296
        %v1805 = vmul.f32 %v1791, %v1804
        %v1806 = vadd.f32 %v1805, 0.014752088
        %v1807 = vmul.f32 %v1791, %v1806
        %v1808 = vadd.f32 %v1807, 0.112945676
        %v1809 = vmul.f32 %v1791, %v1808
        %v1810 = vadd.f32 %v1809, 0.4994258
        %v1811 = vmul.f32 %v1791, %v1810
        %v1812 = vadd.f32 %v1811, 1.0
        %v1813 = vrcp.pop %v1812
        %v1814 = vmul.f32 %v1812, %v1813
        %v1815 = vsub.f32 1.0, %v1814
        %v1816 = vmul.f32 %v1813, %v1815
        %v1817 = vadd.f32 %v1813, %v1816
        %vm1818 = vweird.f32 %v1812
        %vm1819 = vweird.f32 %v1813
        %vm1820 = vmor %vm1818, %vm1819
        %v1821 = vsel %vm1820, %v1813, %v1817
        %v1822 = vand.u32 2147483647, %v1812
        %vm1823 = vcmp.eq.f32.partialorder %v1822, 8.507059e+37
        %v1824 = vand.u32 %v1812, 2147483648
        %v1825 = vor.u32 1.1754944e-38, %v1824
        %v1826 = vsel %vm1823, %v1825, %v1821
        %v1827 = vmul.f32 %v1802, %v1826
        %v1828 = vmin.f32 %v1827, 1.0
        %v1829 = vmax.f32 %v1828, -1.0
        %v1830 = vmul.f32 %v1705, %v1705
        %v1831 = vmin.f32 16.0, %v1830
        %v1832 = vmul.f32 %v1831, 2.1237322e-06
        %v1833 = vadd.f32 %v1832, 0.00028619796
        %v1834 = vmul.f32 %v1831, %v1833
        %v1835 = vadd.f32 %v1834, 0.0036580483
        %v1836 = vmul.f32 %v1831, %v1835
        %v1837 = vadd.f32 %v1836, 0.05243302
        %v1838 = vmul.f32 %v1831, %v1837
        %v1839 = vadd.f32 %v1838, 0.18741608
        %v1840 = vmul.f32 %v1831, %v1839
        %v1841 = vadd.f32 %v1840, 1.1283791
        %v1842 = vmul.f32 %v1705, %v1841
        %v1843 = vmul.f32 %v1831, 3.8918573e-05
        %v1844 = vadd.f32 %v1843, 0.001143296
        %v1845 = vmul.f32 %v1831, %v1844
        %v1846 = vadd.f32 %v1845, 0.014752088
        %v1847 = vmul.f32 %v1831, %v1846
        %v1848 = vadd.f32 %v1847, 0.112945676
        %v1849 = vmul.f32 %v1831, %v1848
        %v1850 = vadd.f32 %v1849, 0.4994258
        %v1851 = vmul.f32 %v1831, %v1850
        %v1852 = vadd.f32 %v1851, 1.0
        %v1853 = vrcp.pop %v1852
        %v1854 = vmul.f32 %v1852, %v1853
        %v1855 = vsub.f32 1.0, %v1854
        %v1856 = vmul.f32 %v1853, %v1855
        %v1857 = vadd.f32 %v1853, %v1856
        %vm1858 = vweird.f32 %v1852
        %vm1859 = vweird.f32 %v1853
        %vm1860 = vmor %vm1858, %vm1859
        %v1861 = vsel %vm1860, %v1853, %v1857
        %v1862 = vand.u32 2147483647, %v1852
        %vm1863 = vcmp.eq.f32.partialorder %v1862, 8.507059e+37
        %v1864 = vand.u32 %v1852, 2147483648
        %v1865 = vor.u32 1.1754944e-38, %v1864
        %v1866 = vsel %vm1863, %v1865, %v1861
        %v1867 = vmul.f32 %v1842, %v1866
        %v1868 = vmin.f32 %v1867, 1.0
        %v1869 = vmax.f32 %v1868, -1.0
        %v1870 = vmul.f32 %v1706, %v1706
        %v1871 = vmin.f32 16.0, %v1870
        %v1872 = vmul.f32 %v1871, 2.1237322e-06
        %v1873 = vadd.f32 %v1872, 0.00028619796
        %v1874 = vmul.f32 %v1871, %v1873
        %v1875 = vadd.f32 %v1874, 0.0036580483
        %v1876 = vmul.f32 %v1871, %v1875
        %v1877 = vadd.f32 %v1876, 0.05243302
        %v1878 = vmul.f32 %v1871, %v1877
        %v1879 = vadd.f32 %v1878, 0.18741608
        %v1880 = vmul.f32 %v1871, %v1879
        %v1881 = vadd.f32 %v1880, 1.1283791
        %v1882 = vmul.f32 %v1706, %v1881
        %v1883 = vmul.f32 %v1871, 3.8918573e-05
        %v1884 = vadd.f32 %v1883, 0.001143296
        %v1885 = vmul.f32 %v1871, %v1884
        %v1886 = vadd.f32 %v1885, 0.014752088
        %v1887 = vmul.f32 %v1871, %v1886
        %v1888 = vadd.f32 %v1887, 0.112945676
        %v1889 = vmul.f32 %v1871, %v1888
        %v1890 = vadd.f32 %v1889, 0.4994258
        %v1891 = vmul.f32 %v1871, %v1890
        %v1892 = vadd.f32 %v1891, 1.0
        %v1893 = vrcp.pop %v1892
        %v1894 = vmul.f32 %v1892, %v1893
        %v1895 = vsub.f32 1.0, %v1894
        %v1896 = vmul.f32 %v1893, %v1895
        %v1897 = vadd.f32 %v1893, %v1896
        %vm1898 = vweird.f32 %v1892
        %vm1899 = vweird.f32 %v1893
        %vm1900 = vmor %vm1898, %vm1899
        %v1901 = vsel %vm1900, %v1893, %v1897
        %v1902 = vand.u32 2147483647, %v1892
        %vm1903 = vcmp.eq.f32.partialorder %v1902, 8.507059e+37
        %v1904 = vand.u32 %v1892, 2147483648
        %v1905 = vor.u32 1.1754944e-38, %v1904
        %v1906 = vsel %vm1903, %v1905, %v1901
        %v1907 = vmul.f32 %v1882, %v1906
        %v1908 = vmin.f32 %v1907, 1.0
        %v1909 = vmax.f32 %v1908, -1.0
        %v1910 = vmul.f32 %v1707, %v1707
        %v1911 = vmin.f32 16.0, %v1910
        %v1912 = vmul.f32 %v1911, 2.1237322e-06
        %v1913 = vadd.f32 %v1912, 0.00028619796
        %v1914 = vmul.f32 %v1911, %v1913
        %v1915 = vadd.f32 %v1914, 0.0036580483
        %v1916 = vmul.f32 %v1911, %v1915
        %v1917 = vadd.f32 %v1916, 0.05243302
        %v1918 = vmul.f32 %v1911, %v1917
        %v1919 = vadd.f32 %v1918, 0.18741608
        %v1920 = vmul.f32 %v1911, %v1919
        %v1921 = vadd.f32 %v1920, 1.1283791
        %v1922 = vmul.f32 %v1707, %v1921
        %v1923 = vmul.f32 %v1911, 3.8918573e-05
        %v1924 = vadd.f32 %v1923, 0.001143296
        %v1925 = vmul.f32 %v1911, %v1924
        %v1926 = vadd.f32 %v1925, 0.014752088
        %v1927 = vmul.f32 %v1911, %v1926
        %v1928 = vadd.f32 %v1927, 0.112945676
        %v1929 = vmul.f32 %v1911, %v1928
        %v1930 = vadd.f32 %v1929, 0.4994258
        %v1931 = vmul.f32 %v1911, %v1930
        %v1932 = vadd.f32 %v1931, 1.0
        %v1933 = vrcp.pop %v1932
        %v1934 = vmul.f32 %v1932, %v1933
        %v1935 = vsub.f32 1.0, %v1934
        %v1936 = vmul.f32 %v1933, %v1935
        %v1937 = vadd.f32 %v1933, %v1936
        %vm1938 = vweird.f32 %v1932
        %vm1939 = vweird.f32 %v1933
        %vm1940 = vmor %vm1938, %vm1939
        %v1941 = vsel %vm1940, %v1933, %v1937
        %v1942 = vand.u32 2147483647, %v1932
        %vm1943 = vcmp.eq.f32.partialorder %v1942, 8.507059e+37
        %v1944 = vand.u32 %v1932, 2147483648
        %v1945 = vor.u32 1.1754944e-38, %v1944
        %v1946 = vsel %vm1943, %v1945, %v1941
        %v1947 = vmul.f32 %v1922, %v1946
        %v1948 = vmin.f32 %v1947, 1.0
        %v1949 = vmax.f32 %v1948, -1.0
        %v1950 = vmul.f32 %v1708, %v1708
        %v1951 = vmin.f32 16.0, %v1950
        %v1952 = vmul.f32 %v1951, 2.1237322e-06
        %v1953 = vadd.f32 %v1952, 0.00028619796
        %v1954 = vmul.f32 %v1951, %v1953
        %v1955 = vadd.f32 %v1954, 0.0036580483
        %v1956 = vmul.f32 %v1951, %v1955
        %v1957 = vadd.f32 %v1956, 0.05243302
        %v1958 = vmul.f32 %v1951, %v1957
        %v1959 = vadd.f32 %v1958, 0.18741608
        %v1960 = vmul.f32 %v1951, %v1959
        %v1961 = vadd.f32 %v1960, 1.1283791
        %v1962 = vmul.f32 %v1708, %v1961
        %v1963 = vmul.f32 %v1951, 3.8918573e-05
        %v1964 = vadd.f32 %v1963, 0.001143296
        %v1965 = vmul.f32 %v1951, %v1964
        %v1966 = vadd.f32 %v1965, 0.014752088
        %v1967 = vmul.f32 %v1951, %v1966
        %v1968 = vadd.f32 %v1967, 0.112945676
        %v1969 = vmul.f32 %v1951, %v1968
        %v1970 = vadd.f32 %v1969, 0.4994258
        %v1971 = vmul.f32 %v1951, %v1970
        %v1972 = vadd.f32 %v1971, 1.0
        %v1973 = vrcp.pop %v1972
        %v1974 = vmul.f32 %v1972, %v1973
        %v1975 = vsub.f32 1.0, %v1974
        %v1976 = vmul.f32 %v1973, %v1975
        %v1977 = vadd.f32 %v1973, %v1976
        %vm1978 = vweird.f32 %v1972
        %vm1979 = vweird.f32 %v1973
        %vm1980 = vmor %vm1978, %vm1979
        %v1981 = vsel %vm1980, %v1973, %v1977
        %v1982 = vand.u32 2147483647, %v1972
        %vm1983 = vcmp.eq.f32.partialorder %v1982, 8.507059e+37
        %v1984 = vand.u32 %v1972, 2147483648
        %v1985 = vor.u32 1.1754944e-38, %v1984
        %v1986 = vsel %vm1983, %v1985, %v1981
        %v1987 = vmul.f32 %v1962, %v1986
        %v1988 = vmin.f32 %v1987, 1.0
        %v1989 = vmax.f32 %v1988, -1.0
        %v1990 = vmul.f32 %v1709, %v1709
        %v1991 = vmin.f32 16.0, %v1990
        %v1992 = vmul.f32 %v1991, 2.1237322e-06
        %v1993 = vadd.f32 %v1992, 0.00028619796
        %v1994 = vmul.f32 %v1991, %v1993
        %v1995 = vadd.f32 %v1994, 0.0036580483
        %v1996 = vmul.f32 %v1991, %v1995
        %v1997 = vadd.f32 %v1996, 0.05243302
        %v1998 = vmul.f32 %v1991, %v1997
        %v1999 = vadd.f32 %v1998, 0.18741608
        %v2000 = vmul.f32 %v1991, %v1999
        %v2001 = vadd.f32 %v2000, 1.1283791
        %v2002 = vmul.f32 %v1709, %v2001
        %v2003 = vmul.f32 %v1991, 3.8918573e-05
        %v2004 = vadd.f32 %v2003, 0.001143296
        %v2005 = vmul.f32 %v1991, %v2004
        %v2006 = vadd.f32 %v2005, 0.014752088
        %v2007 = vmul.f32 %v1991, %v2006
        %v2008 = vadd.f32 %v2007, 0.112945676
        %v2009 = vmul.f32 %v1991, %v2008
        %v2010 = vadd.f32 %v2009, 0.4994258
        %v2011 = vmul.f32 %v1991, %v2010
        %v2012 = vadd.f32 %v2011, 1.0
        %v2013 = vrcp.pop %v2012
        %v2014 = vmul.f32 %v2012, %v2013
        %v2015 = vsub.f32 1.0, %v2014
        %v2016 = vmul.f32 %v2013, %v2015
        %v2017 = vadd.f32 %v2013, %v2016
        %vm2018 = vweird.f32 %v2012
        %vm2019 = vweird.f32 %v2013
        %vm2020 = vmor %vm2018, %vm2019
        %v2021 = vsel %vm2020, %v2013, %v2017
        %v2022 = vand.u32 2147483647, %v2012
        %vm2023 = vcmp.eq.f32.partialorder %v2022, 8.507059e+37
        %v2024 = vand.u32 %v2012, 2147483648
        %v2025 = vor.u32 1.1754944e-38, %v2024
        %v2026 = vsel %vm2023, %v2025, %v2021
        %v2027 = vmul.f32 %v2002, %v2026
        %v2028 = vmin.f32 %v2027, 1.0
        %v2029 = vmax.f32 %v2028, -1.0
        %v2030 = vadd.f32 %v1749, 1.0
        %v2031 = vadd.f32 %v1789, 1.0
        %v2032 = vadd.f32 %v1829, 1.0
        %v2033 = vadd.f32 %v1869, 1.0
        %v2034 = vadd.f32 %v1909, 1.0
        %v2035 = vadd.f32 %v1949, 1.0
        %v2036 = vadd.f32 %v1989, 1.0
        %v2037 = vadd.f32 %v2029, 1.0
        %v2038 = vmul.f32 %v1694, %v2030
        %v2039 = vmul.f32 %v1695, %v2031
        %v2040 = vmul.f32 %v1696, %v2032
        %v2041 = vmul.f32 %v1697, %v2033
        %v2042 = vmul.f32 %v1698, %v2034
        %v2043 = vmul.f32 %v1699, %v2035
        %v2044 = vmul.f32 %v1700, %v2036
        %v2045 = vmul.f32 %v1701, %v2037
        %v2046 = vpack.c.bf16 %v2042, %v2038
        %v2047 = vpack.c.bf16 %v2043, %v2039
        %v2048 = vpack.c.bf16 %v2044, %v2040
        %v2049 = vpack.c.bf16 %v2045, %v2041
        %v2051 = vperm.slane %v752, 0
        %v2117 = vunpack.c.l.b16 %v688
        %v2118 = vunpack.c.l.b16 %v689
        %v2119 = vunpack.c.l.b16 %v690
        %v2120 = vunpack.c.l.b16 %v691
        %v2121 = vunpack.c.l.b16 %v692
        %v2122 = vunpack.c.l.b16 %v693
        %v2123 = vunpack.c.l.b16 %v694
        %v2124 = vunpack.c.l.b16 %v695
        %v2125 = vunpack.c.l.b16 %v696
        %v2126 = vunpack.c.l.b16 %v697
        %v2127 = vunpack.c.l.b16 %v698
        %v2128 = vunpack.c.l.b16 %v699
        %v2129 = vunpack.c.l.b16 %v700
        %v2130 = vunpack.c.l.b16 %v701
        %v2131 = vunpack.c.l.b16 %v702
        %v2132 = vunpack.c.l.b16 %v703
        %v2133 = vunpack.c.l.b16 %v704
        %v2134 = vunpack.c.l.b16 %v705
        %v2135 = vunpack.c.l.b16 %v706
        %v2136 = vunpack.c.l.b16 %v707
        %v2137 = vunpack.c.l.b16 %v708
        %v2138 = vunpack.c.l.b16 %v709
        %v2139 = vunpack.c.l.b16 %v710
        %v2140 = vunpack.c.l.b16 %v711
        %v2141 = vunpack.c.l.b16 %v712
        %v2142 = vunpack.c.l.b16 %v713
        %v2143 = vunpack.c.l.b16 %v714
        %v2144 = vunpack.c.l.b16 %v715
        %v2145 = vunpack.c.l.b16 %v716
        %v2146 = vunpack.c.l.b16 %v717
        %v2147 = vunpack.c.l.b16 %v718
        %v2148 = vunpack.c.l.b16 %v719
        %v2149 = vunpack.c.l.b16 %v720
        %v2150 = vunpack.c.l.b16 %v721
        %v2151 = vunpack.c.l.b16 %v722
        %v2152 = vunpack.c.l.b16 %v723
        %v2153 = vunpack.c.l.b16 %v724
        %v2154 = vunpack.c.l.b16 %v725
        %v2155 = vunpack.c.l.b16 %v726
        %v2156 = vunpack.c.l.b16 %v727
        %v2157 = vunpack.c.l.b16 %v728
        %v2158 = vunpack.c.l.b16 %v729
        %v2159 = vunpack.c.l.b16 %v730
        %v2160 = vunpack.c.l.b16 %v731
        %v2161 = vunpack.c.l.b16 %v732
        %v2162 = vunpack.c.l.b16 %v733
        %v2163 = vunpack.c.l.b16 %v734
        %v2164 = vunpack.c.l.b16 %v735
        %v2165 = vunpack.c.l.b16 %v736
        %v2166 = vunpack.c.l.b16 %v737
        %v2167 = vunpack.c.l.b16 %v738
        %v2168 = vunpack.c.l.b16 %v739
        %v2169 = vunpack.c.l.b16 %v740
        %v2170 = vunpack.c.l.b16 %v741
        %v2171 = vunpack.c.l.b16 %v742
        %v2172 = vunpack.c.l.b16 %v743
        %v2173 = vunpack.c.l.b16 %v744
        %v2174 = vunpack.c.l.b16 %v745
        %v2175 = vunpack.c.l.b16 %v746
        %v2176 = vunpack.c.l.b16 %v747
        %v2177 = vunpack.c.l.b16 %v748
        %v2178 = vunpack.c.l.b16 %v749
        %v2179 = vunpack.c.l.b16 %v750
        %v2180 = vunpack.c.l.b16 %v751
        %v2181 = vpack.c.b16 %v2118, %v2117
        %v2182 = vpack.c.b16 %v2120, %v2119
        %v2183 = vpack.c.b16 %v2122, %v2121
        %v2184 = vpack.c.b16 %v2124, %v2123
        %v2185 = vpack.c.b16 %v2126, %v2125
        %v2186 = vpack.c.b16 %v2128, %v2127
        %v2187 = vpack.c.b16 %v2130, %v2129
        %v2188 = vpack.c.b16 %v2132, %v2131
        %v2189 = vpack.c.b16 %v2134, %v2133
        %v2190 = vpack.c.b16 %v2136, %v2135
        %v2191 = vpack.c.b16 %v2138, %v2137
        %v2192 = vpack.c.b16 %v2140, %v2139
        %v2193 = vpack.c.b16 %v2142, %v2141
        %v2194 = vpack.c.b16 %v2144, %v2143
        %v2195 = vpack.c.b16 %v2146, %v2145
        %v2196 = vpack.c.b16 %v2148, %v2147
        %v2197 = vpack.c.b16 %v2150, %v2149
        %v2198 = vpack.c.b16 %v2152, %v2151
        %v2199 = vpack.c.b16 %v2154, %v2153
        %v2200 = vpack.c.b16 %v2156, %v2155
        %v2201 = vpack.c.b16 %v2158, %v2157
        %v2202 = vpack.c.b16 %v2160, %v2159
        %v2203 = vpack.c.b16 %v2162, %v2161
        %v2204 = vpack.c.b16 %v2164, %v2163
        %v2205 = vpack.c.b16 %v2166, %v2165
        %v2206 = vpack.c.b16 %v2168, %v2167
        %v2207 = vpack.c.b16 %v2170, %v2169
        %v2208 = vpack.c.b16 %v2172, %v2171
        %v2209 = vpack.c.b16 %v2174, %v2173
        %v2210 = vpack.c.b16 %v2176, %v2175
        %v2211 = vpack.c.b16 %v2178, %v2177
        %v2212 = vpack.c.b16 %v2180, %v2179
        %2245 = vmatpush.bf16.msra.mxu0 %v2188
        %2246 = vmatpush.bf16.msra.mxu0 %v2187
        %2247 = vmatpush.bf16.msra.mxu0 %v2186
        %2248 = vmatpush.bf16.msra.mxu0 %v2185
        %2249 = vmatpush.bf16.msra.mxu0 %v2184
        %2250 = vmatpush.bf16.msra.mxu0 %v2183
        %2251 = vmatpush.bf16.msra.mxu0 %v2182
        %2252 = vmatpush.bf16.msra.mxu0 %v2181
        %2253 = vmatmul.bf16.gmra.mxu0 %v2046
        %v2254 = vpop.f32.mrf.mxu0
        %v2255 = vadd.f32 %v2051, %v2254
        %v2256 = vpop.f32.mrf.mxu0
        %v2257 = vadd.f32 %v2051, %v2256
        %2258 = vdwg.mxu0
        %2259 = vmatpush.bf16.msra.mxu0 %v2196
        %2260 = vmatpush.bf16.msra.mxu0 %v2195
        %2261 = vmatpush.bf16.msra.mxu0 %v2194
        %2262 = vmatpush.bf16.msra.mxu0 %v2193
        %2263 = vmatpush.bf16.msra.mxu0 %v2192
        %2264 = vmatpush.bf16.msra.mxu0 %v2191
        %2265 = vmatpush.bf16.msra.mxu0 %v2190
        %2266 = vmatpush.bf16.msra.mxu0 %v2189
        %2267 = vmatmul.bf16.gmra.mxu0 %v2047
        %v2268 = vpop.f32.mrf.mxu0
        %v2269 = vadd.f32 %v2255, %v2268
        %v2270 = vpop.f32.mrf.mxu0
        %v2271 = vadd.f32 %v2257, %v2270
        %2272 = vdwg.mxu0
        %2273 = vmatpush.bf16.msra.mxu0 %v2204
        %2274 = vmatpush.bf16.msra.mxu0 %v2203
        %2275 = vmatpush.bf16.msra.mxu0 %v2202
        %2276 = vmatpush.bf16.msra.mxu0 %v2201
        %2277 = vmatpush.bf16.msra.mxu0 %v2200
        %2278 = vmatpush.bf16.msra.mxu0 %v2199
        %2279 = vmatpush.bf16.msra.mxu0 %v2198
        %2280 = vmatpush.bf16.msra.mxu0 %v2197
        %2281 = vmatmul.bf16.gmra.mxu0 %v2048
        %v2282 = vpop.f32.mrf.mxu0
        %v2283 = vadd.f32 %v2269, %v2282
        %v2284 = vpop.f32.mrf.mxu0
        %v2285 = vadd.f32 %v2271, %v2284
        %2286 = vdwg.mxu0
        %2287 = vmatpush.bf16.msra.mxu0 %v2212
        %2288 = vmatpush.bf16.msra.mxu0 %v2211
        %2289 = vmatpush.bf16.msra.mxu0 %v2210
        %2290 = vmatpush.bf16.msra.mxu0 %v2209
        %2291 = vmatpush.bf16.msra.mxu0 %v2208
        %2292 = vmatpush.bf16.msra.mxu0 %v2207
        %2293 = vmatpush.bf16.msra.mxu0 %v2206
        %2294 = vmatpush.bf16.msra.mxu0 %v2205
        %2295 = vmatmul.bf16.gmra.mxu0 %v2049
        %v2296 = vpop.f32.mrf.mxu0
        %v2297 = vadd.f32 %v2283, %v2296
        %v2298 = vpop.f32.mrf.mxu0
        %v2299 = vadd.f32 %v2285, %v2298
        %2300 = vdwg.mxu0
        %v2301 = vadd.f32 %v1416, %v2297
        %v2302 = vadd.f32 %v1417, %v2299
        %2303 = vst [vmem:[%s599] sm:$0xff] %v2301
        %2304 = vst [vmem:[%s599 + $0x8] sm:$0xff] %v2302
        %s2305 = sand.u32 %s321, 1
        %s2306 = scalar_lea.sflag [#allocation5], %s2305
        %s2307 = sand.u32 %s321, 1
        %s2308 = smul.addr %s2307, 16
        %s2309 = scalar_lea.vmem [#allocation20], %s2308
        // Predicated region
        $region113: #{tpu_custom_call.1} parent=71 // pred_check
          %p2310 = pneg %p331
        $region114: #{tpu_custom_call.1} parent=71 // pred_check_branch
          %2312 = sbr.rel (%p2310) target = $region116
        $region115: #{tpu_custom_call.1} parent=71 // pred_region
          %2314 = vsyncadd %s2306, 0
          %s2315 = smul.addr %s35, 2
          %s2316 = smul.addr %s2315, 8
          %s2317 = scalar_lea.hbm %s13, %s2316
          %s2318 = sshll.u32 %s2309, 4
          %s2319 = int_to_ptr.vmem [resolvable:$true] %s2318
          %s2320 = sshll.u32 %s2317, 4
          %s2321 = int_to_ptr.hbm [resolvable:$true] %s2320
          %2326 = dma.vmem_to_hbm [thread:$0]  %s2319, 256, %s2321, %s2306, 128, 128, 8
        $region116: #{tpu_custom_call.1} parent=71 // pred_fallthru
          _
      $region72: #{tpu_custom_call.1} parent=5 // pred_fallthru
        _
      %p2327 = scmp.le.s32.totalorder 2, %s30
      // Predicated region
      $region117: #{tpu_custom_call.1} parent=5 // pred_check
        %p2328 = pneg %p2327
      $region118: #{tpu_custom_call.1} parent=5 // pred_check_branch
        %2330 = sbr.rel (%p2328) target = $region120
      $region119: #{tpu_custom_call.1} parent=5 // pred_region
        %s2331 = ssub.s32 %s30, 2
        // Predicated region
        $region121: #{tpu_custom_call.1} parent=119 // pred_check
          %p2332 = pneg %p337
        $region122: #{tpu_custom_call.1} parent=119 // pred_check_branch
          %2334 = sbr.rel (%p2332) target = $region124
        $region123: #{tpu_custom_call.1} parent=119 // pred_region
          %s2335 = sand.u32 %s322, 1
          %s2336 = scalar_lea.sflag [#allocation5], %s2335
          %s2337 = sand.u32 %s322, 1
          %s2338 = smul.addr %s2337, 16
          %s2339 = scalar_lea.vmem [#allocation20], %s2338
          %2341 = dma.done %s2336, 256
        $region124: #{tpu_custom_call.1} parent=119 // pred_fallthru
          _
      $region120: #{tpu_custom_call.1} parent=5 // pred_fallthru
        _
    $region6: #{tpu_custom_call.1} parent=1 // loop_footer
      %s34 = sadd.s32 1, %s30
    $region7: #{tpu_custom_call.1} parent=1 // loop_footer_branch
      %29 = sbr.rel target = $region3
    $region8: #{tpu_custom_call.1} parent=1 // loop_exit
      _
    %2342 = vsyncpa [#allocation4], 1
    %s2343 = scalar_lea.sflag [#allocation4], 1
    %2344 = vsyncpa %s2343, 1
    %2345 = vsyncpa [#allocation7], 1
    %2346 = vsyncpa [#allocation10], 1
    %2347 = vsyncpa [#allocation13], 1
    %2348 = vsyncpa [#allocation16], 1
    %2349 = vsyncpa [#allocation19], 1
    %2350 = vsyncpa [#allocation5], 1
    %s2351 = scalar_lea.sflag [#allocation5], 1
    %2352 = vsyncpa %s2351, 1

// kernel: tpu_custom_call.1
$region0: #{tpu_custom_call.1}
  #allocation0 [shape = 'u32[]', space=smem, size = 0x4, offset = 0x4, fixed_abs, tag = 'smem constant byte address 0x4 - core index']
  #allocation1 [shape = 'u32[72,128]{1,0:T(1,128)}', space=vmem, size = 0x9000, scoped, tag = 'internal scratch']
  #allocation2 [shape = 'bf16[1,16,128]{2,1,0:T(8,128)(2,1)}', space=vmem, size = 0x1000, scoped, tag = 'scratch operand']
  %s0 = inlined_call_operand.hbm [shape: f32[2,16,128], index: 0, kind: input, shape index: {}]
  %s1 = inlined_call_operand.hbm [shape: f32[1,128], index: 1, kind: input, shape index: {}]
  %s2 = inlined_call_operand.hbm [shape: f32[1,128], index: 2, kind: input, shape index: {}]
  %s3 = inlined_call_operand.hbm [shape: bf16[128,384], index: 3, kind: input, shape index: {}]
  %s4 = inlined_call_operand.vmem [shape: f32[1,384], index: 4, kind: input, shape index: {}]
  %s5 = inlined_call_operand.hbm [shape: bf16[128,128], index: 5, kind: input, shape index: {}]
  %s6 = inlined_call_operand.hbm [shape: f32[1,128], index: 6, kind: input, shape index: {}]
  %s7 = inlined_call_operand.hbm [shape: f32[1,128], index: 7, kind: input, shape index: {}]
  %s8 = inlined_call_operand.hbm [shape: f32[1,128], index: 8, kind: input, shape index: {}]
  %s9 = inlined_call_operand.hbm [shape: bf16[128,512], index: 9, kind: input, shape index: {}]
  %s10 = inlined_call_operand.vmem [shape: f32[1,512], index: 10, kind: input, shape index: {}]
  %s11 = inlined_call_operand.hbm [shape: bf16[512,128], index: 11, kind: input, shape index: {}]
  %s12 = inlined_call_operand.vmem [shape: f32[1,128], index: 12, kind: input, shape index: {}]
  %s13 = inlined_call_operand.hbm [shape: f32[2,16,128], index: 13, kind: output, shape index: {}]
  %s14 = sld [smem:[#allocation0]]
  $region125: #{tpu_custom_call.1} parent=0
    _
  %s16 = ssub.s32 1, %s14
  %s17 = scalar_select 0, %s16, %s14
  $region1: #{tpu_custom_call.1} parent=0
    #allocation3 [shape = 'u8[16384]{0}', space=vmem, size = 0x4000, scoped, tag = 'input window, operand 0']
    #allocation4 [shape = 's32[2]{0}', space=sflag, size = 0x8, scoped, tag = 'scoped memory for tpu_custom_call.1']
    #allocation5 [shape = 's32[2]{0}', space=sflag, size = 0x8, scoped, tag = 'scoped memory for tpu_custom_call.1']
    #allocation6 [shape = 'u8[512]{0}', space=vmem, size = 0x400, scoped, tag = 'input window, operand 1, single buffered']
    #allocation7 [shape = 's32[1]{0}', space=sflag, size = 0x4, scoped, tag = 'scoped memory for tpu_custom_call.1']
    #allocation8 [shape = 'u8[512]{0}', space=vmem, size = 0x400, scoped, tag = 'input window, operand 2, single buffered']
    #allocation9 [shape = 'u8[98304]{0}', space=vmem, size = 0x18000, scoped, tag = 'input window, operand 3, single buffered']
    #allocation10 [shape = 's32[1]{0}', space=sflag, size = 0x4, scoped, tag = 'scoped memory for tpu_custom_call.1']
    #allocation11 [shape = 'u8[32768]{0}', space=vmem, size = 0x8000, scoped, tag = 'input window, operand 5, single buffered']
    #allocation12 [shape = 'u8[512]{0}', space=vmem, size = 0x400, scoped, tag = 'input window, operand 6, single buffered']
    #allocation13 [shape = 's32[1]{0}', space=sflag, size = 0x4, scoped, tag = 'scoped memory for tpu_custom_call.1']
    #allocation14 [shape = 'u8[512]{0}', space=vmem, size = 0x400, scoped, tag = 'input window, operand 7, single buffered']
    #allocation15 [shape = 'u8[512]{0}', space=vmem, size = 0x400, scoped, tag = 'input window, operand 8, single buffered']
    #allocation16 [shape = 's32[1]{0}', space=sflag, size = 0x4, scoped, tag = 'scoped memory for tpu_custom_call.1']
    #allocation17 [shape = 'u8[131072]{0}', space=vmem, size = 0x20000, scoped, tag = 'input window, operand 9, single buffered']
    #allocation18 [shape = 'u8[131072]{0}', space=vmem, size = 0x20000, scoped, tag = 'input window, operand 11, single buffered']
    #allocation19 [shape = 's32[1]{0}', space=sflag, size = 0x4, scoped, tag = 'scoped memory for tpu_custom_call.1']
    #allocation20 [shape = 'u8[16384]{0}', space=vmem, size = 0x4000, scoped, tag = 'output window, operand 0']
    %18 = vsyncpa [#allocation4], 0
    %s19 = scalar_lea.sflag [#allocation4], 1
    %20 = vsyncpa %s19, 0
    %21 = vsyncpa [#allocation7], 0
    %22 = vsyncpa [#allocation10], 0
    %23 = vsyncpa [#allocation13], 0
    %24 = vsyncpa [#allocation16], 0
    %25 = vsyncpa [#allocation19], 0
    %26 = vsyncpa [#allocation5], 0
    %s27 = scalar_lea.sflag [#allocation5], 1
    %28 = vsyncpa %s27, 0
    loop: start=0, step=1, limit=4
    $region2: #{tpu_custom_call.1} parent=1 // loop_pre_header
      _
    $region3: #{tpu_custom_call.1} parent=1 // loop_header
      %s30 = sphi 0, %s34
      %p31 = scmp.ge.s32.totalorder %s30, 4
      %s40 = sphi 0, %s42
      %s43 = sphi 0, %s40
      %s44 = sphi 0, %s43
      %s60 = sphi 0, %s44
      %s64 = sphi 0, %s64
      %s66 = sphi 0, %s64
      %s67 = sphi 0, %s66
      %s81 = sphi 0, %s67
      %s85 = sphi 0, %s85
      %s87 = sphi 0, %s85
      %s88 = sphi 0, %s87
      %s102 = sphi 0, %s88
      %s106 = sphi 0, %s106
      %s108 = sphi 0, %s106
      %s109 = sphi 0, %s108
      %s123 = sphi 0, %s109
      %s127 = sphi 0, %s127
      %s129 = sphi 0, %s127
      %s130 = sphi 0, %s129
      %s144 = sphi 0, %s130
      %s148 = sphi 0, %s148
      %s150 = sphi 0, %s148
      %s151 = sphi 0, %s150
      %s165 = sphi 0, %s151
      %s169 = sphi 0, %s169
      %s171 = sphi 0, %s169
      %s172 = sphi 0, %s171
      %s186 = sphi 0, %s172
      %s190 = sphi 0, %s190
      %s192 = sphi 0, %s190
      %s193 = sphi 0, %s192
      %s207 = sphi 0, %s193
      %s211 = sphi 0, %s211
      %s213 = sphi 0, %s211
      %s214 = sphi 0, %s213
      %s228 = sphi 0, %s214
      %s232 = sphi 0, %s232
      %s234 = sphi 0, %s232
      %s235 = sphi 0, %s234
      %s249 = sphi 0, %s235
      %s253 = sphi 0, %s253
      %s255 = sphi 0, %s253
      %s256 = sphi 0, %s255
      %s270 = sphi 0, %s256
      %s274 = sphi 0, %s274
      %s276 = sphi 0, %s274
      %s277 = sphi 0, %s276
      %s291 = sphi 0, %s277
      %s295 = sphi 0, %s295
      %s297 = sphi 0, %s295
      %s298 = sphi 0, %s297
      %s312 = sphi 0, %s298
      %s318 = sphi 0, %s320
      %s321 = sphi 0, %s318
      %s322 = sphi 0, %s321
      %s338 = sphi 0, %s322
    $region4: #{tpu_custom_call.1} parent=1 // loop_header_branch
      %33 = sbr.rel (%p31) target = $region8
    $region5: #{tpu_custom_call.1} parent=1 // loop_body
      %s35 = ssub.s32 %s30, 1
      %s36 = ssub.s32 %s30, 2
      %s37 = sadd.s32 %s30, 1
      %s38 = ssub.s32 %s30, %s37
      %p39 = scmp.eq.s32.totalorder %s38, 0
      %s41 = sadd.s32 %s40, 1
      %s42 = scalar_select %p39, %s40, %s41
      %p45 = pneg %p39
      %p46 = scmp.eq.s32.totalorder %s30, 1
      %p47 = por %p45, %p46
      %p48 = scmp.ne.s32.totalorder %s40, %s43
      %p49 = scmp.eq.s32.totalorder %s30, 0
      %p50 = por %p48, %p49
      %p51 = scmp.ne.s32.totalorder %s40, %s43
      %p52 = scmp.eq.s32.totalorder %s35, 1
      %p53 = por %p51, %p52
      %p54 = scmp.ne.s32.totalorder %s43, %s44
      %p55 = scmp.eq.s32.totalorder %s35, 0
      %p56 = por %p54, %p55
      %p57 = scmp.ne.s32.totalorder %s43, %s44
      %p58 = scmp.eq.s32.totalorder %s36, 1
      %p59 = por %p57, %p58
      %p61 = scmp.ne.s32.totalorder %s44, %s60
      %p62 = scmp.eq.s32.totalorder %s36, 0
      %p63 = por %p61, %p62
      %s65 = sadd.s32 %s64, 1
      %p68 = scmp.eq.s32.totalorder %s30, 1
      %p69 = scmp.ne.s32.totalorder %s64, %s66
      %p70 = scmp.eq.s32.totalorder %s30, 0
      %p71 = por %p69, %p70
      %p72 = scmp.ne.s32.totalorder %s64, %s66
      %p73 = scmp.eq.s32.totalorder %s35, 1
      %p74 = por %p72, %p73
      %p75 = scmp.ne.s32.totalorder %s66, %s67
      %p76 = scmp.eq.s32.totalorder %s35, 0
      %p77 = por %p75, %p76
      %p78 = scmp.ne.s32.totalorder %s66, %s67
      %p79 = scmp.eq.s32.totalorder %s36, 1
      %p80 = por %p78, %p79
      %p82 = scmp.ne.s32.totalorder %s67, %s81
      %p83 = scmp.eq.s32.totalorder %s36, 0
      %p84 = por %p82, %p83
      %s86 = sadd.s32 %s85, 1
      %p89 = scmp.eq.s32.totalorder %s30, 1
      %p90 = scmp.ne.s32.totalorder %s85, %s87
      %p91 = scmp.eq.s32.totalorder %s30, 0
      %p92 = por %p90, %p91
      %p93 = scmp.ne.s32.totalorder %s85, %s87
      %p94 = scmp.eq.s32.totalorder %s35, 1
      %p95 = por %p93, %p94
      %p96 = scmp.ne.s32.totalorder %s87, %s88
      %p97 = scmp.eq.s32.totalorder %s35, 0
      %p98 = por %p96, %p97
      %p99 = scmp.ne.s32.totalorder %s87, %s88
      %p100 = scmp.eq.s32.totalorder %s36, 1
      %p101 = por %p99, %p100
      %p103 = scmp.ne.s32.totalorder %s88, %s102
      %p104 = scmp.eq.s32.totalorder %s36, 0
      %p105 = por %p103, %p104
      %s107 = sadd.s32 %s106, 1
      %p110 = scmp.eq.s32.totalorder %s30, 1
      %p111 = scmp.ne.s32.totalorder %s106, %s108
      %p112 = scmp.eq.s32.totalorder %s30, 0
      %p113 = por %p111, %p112
      %p114 = scmp.ne.s32.totalorder %s106, %s108
      %p115 = scmp.eq.s32.totalorder %s35, 1
      %p116 = por %p114, %p115
      %p117 = scmp.ne.s32.totalorder %s108, %s109
      %p118 = scmp.eq.s32.totalorder %s35, 0
      %p119 = por %p117, %p118
      %p120 = scmp.ne.s32.totalorder %s108, %s109
      %p121 = scmp.eq.s32.totalorder %s36, 1
      %p122 = por %p120, %p121
      %p124 = scmp.ne.s32.totalorder %s109, %s123
      %p125 = scmp.eq.s32.totalorder %s36, 0
      %p126 = por %p124, %p125
      %s128 = sadd.s32 %s127, 1
      %p131 = scmp.eq.s32.totalorder %s30, 1
      %p132 = scmp.ne.s32.totalorder %s127, %s129
      %p133 = scmp.eq.s32.totalorder %s30, 0
      %p134 = por %p132, %p133
      %p135 = scmp.ne.s32.totalorder %s127, %s129
      %p136 = scmp.eq.s32.totalorder %s35, 1
      %p137 = por %p135, %p136
      %p138 = scmp.ne.s32.totalorder %s129, %s130
      %p139 = scmp.eq.s32.totalorder %s35, 0
      %p140 = por %p138, %p139
      %p141 = scmp.ne.s32.totalorder %s129, %s130
      %p142 = scmp.eq.s32.totalorder %s36, 1
      %p143 = por %p141, %p142
      %p145 = scmp.ne.s32.totalorder %s130, %s144
      %p146 = scmp.eq.s32.totalorder %s36, 0
      %p147 = por %p145, %p146
      %s149 = sadd.s32 %s148, 1
      %p152 = scmp.eq.s32.totalorder %s30, 1
      %p153 = scmp.ne.s32.totalorder %s148, %s150
      %p154 = scmp.eq.s32.totalorder %s30, 0
      %p155 = por %p153, %p154
      %p156 = scmp.ne.s32.totalorder %s148, %s150
      %p157 = scmp.eq.s32.totalorder %s35, 1
      %p158 = por %p156, %p157
      %p159 = scmp.ne.s32.totalorder %s150, %s151
      %p160 = scmp.eq.s32.totalorder %s35, 0
      %p161 = por %p159, %p160
      %p162 = scmp.ne.s32.totalorder %s150, %s151
      %p163 = scmp.eq.s32.totalorder %s36, 1
      %p164 = por %p162, %p163
      %p166 = scmp.ne.s32.totalorder %s151, %s165
      %p167 = scmp.eq.s32.totalorder %s36, 0
      %p168 = por %p166, %p167
      %s170 = sadd.s32 %s169, 1
      %p173 = scmp.eq.s32.totalorder %s30, 1
      %p174 = scmp.ne.s32.totalorder %s169, %s171
      %p175 = scmp.eq.s32.totalorder %s30, 0
      %p176 = por %p174, %p175
      %p177 = scmp.ne.s32.totalorder %s169, %s171
      %p178 = scmp.eq.s32.totalorder %s35, 1
      %p179 = por %p177, %p178
      %p180 = scmp.ne.s32.totalorder %s171, %s172
      %p181 = scmp.eq.s32.totalorder %s35, 0
      %p182 = por %p180, %p181
      %p183 = scmp.ne.s32.totalorder %s171, %s172
      %p184 = scmp.eq.s32.totalorder %s36, 1
      %p185 = por %p183, %p184
      %p187 = scmp.ne.s32.totalorder %s172, %s186
      %p188 = scmp.eq.s32.totalorder %s36, 0
      %p189 = por %p187, %p188
      %s191 = sadd.s32 %s190, 1
      %p194 = scmp.eq.s32.totalorder %s30, 1
      %p195 = scmp.ne.s32.totalorder %s190, %s192
      %p196 = scmp.eq.s32.totalorder %s30, 0
      %p197 = por %p195, %p196
      %p198 = scmp.ne.s32.totalorder %s190, %s192
      %p199 = scmp.eq.s32.totalorder %s35, 1
      %p200 = por %p198, %p199
      %p201 = scmp.ne.s32.totalorder %s192, %s193
      %p202 = scmp.eq.s32.totalorder %s35, 0
      %p203 = por %p201, %p202
      %p204 = scmp.ne.s32.totalorder %s192, %s193
      %p205 = scmp.eq.s32.totalorder %s36, 1
      %p206 = por %p204, %p205
      %p208 = scmp.ne.s32.totalorder %s193, %s207
      %p209 = scmp.eq.s32.totalorder %s36, 0
      %p210 = por %p208, %p209
      %s212 = sadd.s32 %s211, 1
      %p215 = scmp.eq.s32.totalorder %s30, 1
      %p216 = scmp.ne.s32.totalorder %s211, %s213
      %p217 = scmp.eq.s32.totalorder %s30, 0
      %p218 = por %p216, %p217
      %p219 = scmp.ne.s32.totalorder %s211, %s213
      %p220 = scmp.eq.s32.totalorder %s35, 1
      %p221 = por %p219, %p220
      %p222 = scmp.ne.s32.totalorder %s213, %s214
      %p223 = scmp.eq.s32.totalorder %s35, 0
      %p224 = por %p222, %p223
      %p225 = scmp.ne.s32.totalorder %s213, %s214
      %p226 = scmp.eq.s32.totalorder %s36, 1
      %p227 = por %p225, %p226
      %p229 = scmp.ne.s32.totalorder %s214, %s228
      %p230 = scmp.eq.s32.totalorder %s36, 0
      %p231 = por %p229, %p230
      %s233 = sadd.s32 %s232, 1
      %p236 = scmp.eq.s32.totalorder %s30, 1
      %p237 = scmp.ne.s32.totalorder %s232, %s234
      %p238 = scmp.eq.s32.totalorder %s30, 0
      %p239 = por %p237, %p238
      %p240 = scmp.ne.s32.totalorder %s232, %s234
      %p241 = scmp.eq.s32.totalorder %s35, 1
      %p242 = por %p240, %p241
      %p243 = scmp.ne.s32.totalorder %s234, %s235
      %p244 = scmp.eq.s32.totalorder %s35, 0
      %p245 = por %p243, %p244
      %p246 = scmp.ne.s32.totalorder %s234, %s235
      %p247 = scmp.eq.s32.totalorder %s36, 1
      %p248 = por %p246, %p247
      %p250 = scmp.ne.s32.totalorder %s235, %s249
      %p251 = scmp.eq.s32.totalorder %s36, 0
      %p252 = por %p250, %p251
      %s254 = sadd.s32 %s253, 1
      %p257 = scmp.eq.s32.totalorder %s30, 1
      %p258 = scmp.ne.s32.totalorder %s253, %s255
      %p259 = scmp.eq.s32.totalorder %s30, 0
      %p260 = por %p258, %p259
      %p261 = scmp.ne.s32.totalorder %s253, %s255
      %p262 = scmp.eq.s32.totalorder %s35, 1
      %p263 = por %p261, %p262
      %p264 = scmp.ne.s32.totalorder %s255, %s256
      %p265 = scmp.eq.s32.totalorder %s35, 0
      %p266 = por %p264, %p265
      %p267 = scmp.ne.s32.totalorder %s255, %s256
      %p268 = scmp.eq.s32.totalorder %s36, 1
      %p269 = por %p267, %p268
      %p271 = scmp.ne.s32.totalorder %s256, %s270
      %p272 = scmp.eq.s32.totalorder %s36, 0
      %p273 = por %p271, %p272
      %s275 = sadd.s32 %s274, 1
      %p278 = scmp.eq.s32.totalorder %s30, 1
      %p279 = scmp.ne.s32.totalorder %s274, %s276
      %p280 = scmp.eq.s32.totalorder %s30, 0
      %p281 = por %p279, %p280
      %p282 = scmp.ne.s32.totalorder %s274, %s276
      %p283 = scmp.eq.s32.totalorder %s35, 1
      %p284 = por %p282, %p283
      %p285 = scmp.ne.s32.totalorder %s276, %s277
      %p286 = scmp.eq.s32.totalorder %s35, 0
      %p287 = por %p285, %p286
      %p288 = scmp.ne.s32.totalorder %s276, %s277
      %p289 = scmp.eq.s32.totalorder %s36, 1
      %p290 = por %p288, %p289
      %p292 = scmp.ne.s32.totalorder %s277, %s291
      %p293 = scmp.eq.s32.totalorder %s36, 0
      %p294 = por %p292, %p293
      %s296 = sadd.s32 %s295, 1
      %p299 = scmp.eq.s32.totalorder %s30, 1
      %p300 = scmp.ne.s32.totalorder %s295, %s297
      %p301 = scmp.eq.s32.totalorder %s30, 0
      %p302 = por %p300, %p301
      %p303 = scmp.ne.s32.totalorder %s295, %s297
      %p304 = scmp.eq.s32.totalorder %s35, 1
      %p305 = por %p303, %p304
      %p306 = scmp.ne.s32.totalorder %s297, %s298
      %p307 = scmp.eq.s32.totalorder %s35, 0
      %p308 = por %p306, %p307
      %p309 = scmp.ne.s32.totalorder %s297, %s298
      %p310 = scmp.eq.s32.totalorder %s36, 1
      %p311 = por %p309, %p310
      %p313 = scmp.ne.s32.totalorder %s298, %s312
      %p314 = scmp.eq.s32.totalorder %s36, 0
      %p315 = por %p313, %p314
      %s316 = ssub.s32 %s30, %s37
      %p317 = scmp.eq.s32.totalorder %s316, 0
      %s319 = sadd.s32 %s318, 1
      %s320 = scalar_select %p317, %s318, %s319
      %p323 = pneg %p317
      %p324 = scmp.eq.s32.totalorder %s30, 1
      %p325 = por %p323, %p324
      %p326 = scmp.ne.s32.totalorder %s318, %s321
      %p327 = scmp.eq.s32.totalorder %s30, 0
      %p328 = por %p326, %p327
      %p329 = scmp.ne.s32.totalorder %s318, %s321
      %p330 = scmp.eq.s32.totalorder %s35, 1
      %p331 = por %p329, %p330
      %p332 = scmp.ne.s32.totalorder %s321, %s322
      %p333 = scmp.eq.s32.totalorder %s35, 0
      %p334 = por %p332, %p333
      %p335 = scmp.ne.s32.totalorder %s321, %s322
      %p336 = scmp.eq.s32.totalorder %s36, 1
      %p337 = por %p335, %p336
      %p339 = scmp.ne.s32.totalorder %s322, %s338
      %p340 = scmp.eq.s32.totalorder %s36, 0
      %p341 = por %p339, %p340
      %p342 = scmp.le.s32.totalorder 1, %s30
      %p343 = scmp.lt.s32.totalorder %s30, 3
      %p344 = pnand %p342, %p343
      %p345 = pneg %p344
      // Predicated region
      $region9: #{tpu_custom_call.1} parent=5 // pred_check
        _
      $region10: #{tpu_custom_call.1} parent=5 // pred_check_branch
        %347 = sbr.rel (%p344) target = $region12
      $region11: #{tpu_custom_call.1} parent=5 // pred_region
        %s348 = ssub.s32 %s30, 1
        // Predicated region
        $region13: #{tpu_custom_call.1} parent=11 // pred_check
          %p349 = pneg %p77
        $region14: #{tpu_custom_call.1} parent=11 // pred_check_branch
          %351 = sbr.rel (%p349) target = $region16
        $region15: #{tpu_custom_call.1} parent=11 // pred_region
          %353 = vsyncadd [#allocation7], 0
          %s355 = sshll.u32 %s1, 4
          %s356 = int_to_ptr.hbm [resolvable:$true] %s355
          %s357 = sshll.u32 [#allocation6], 4
          %s358 = int_to_ptr.vmem [resolvable:$true] %s357
          %360 = dma.hbm_to_vmem [thread:$0]  %s356, 16, %s358, [#allocation7]
        $region16: #{tpu_custom_call.1} parent=11 // pred_fallthru
          _
        // Predicated region
        $region17: #{tpu_custom_call.1} parent=11 // pred_check
          %p361 = pneg %p98
        $region18: #{tpu_custom_call.1} parent=11 // pred_check_branch
          %363 = sbr.rel (%p361) target = $region20
        $region19: #{tpu_custom_call.1} parent=11 // pred_region
          %365 = vsyncadd [#allocation7], 0
          %s367 = sshll.u32 %s2, 4
          %s368 = int_to_ptr.hbm [resolvable:$true] %s367
          %s369 = sshll.u32 [#allocation8], 4
          %s370 = int_to_ptr.vmem [resolvable:$true] %s369
          %372 = dma.hbm_to_vmem [thread:$0]  %s368, 16, %s370, [#allocation7]
        $region20: #{tpu_custom_call.1} parent=11 // pred_fallthru
          _
        // Predicated region
        $region21: #{tpu_custom_call.1} parent=11 // pred_check
          %p373 = pneg %p119
        $region22: #{tpu_custom_call.1} parent=11 // pred_check_branch
          %375 = sbr.rel (%p373) target = $region24
        $region23: #{tpu_custom_call.1} parent=11 // pred_region
          %377 = vsyncadd [#allocation10], 0
          %s378 = sshll.u32 %s3, 4
          %s379 = int_to_ptr.hbm [resolvable:$true] %s378
          %s380 = sshll.u32 [#allocation9], 4
          %s381 = int_to_ptr.vmem [resolvable:$true] %s380
          %386 = dma.hbm_to_vmem [thread:$0]  %s379, 3072, %s381, [#allocation10], 192, 192, 12
        $region24: #{tpu_custom_call.1} parent=11 // pred_fallthru
          _
        // Predicated region
        $region25: #{tpu_custom_call.1} parent=11 // pred_check
          %p387 = pneg %p140
        $region26: #{tpu_custom_call.1} parent=11 // pred_check_branch
          %389 = sbr.rel (%p387) target = $region28
        $region27: #{tpu_custom_call.1} parent=11 // pred_region
          _
        $region28: #{tpu_custom_call.1} parent=11 // pred_fallthru
          _
        // Predicated region
        $region29: #{tpu_custom_call.1} parent=11 // pred_check
          %p390 = pneg %p161
        $region30: #{tpu_custom_call.1} parent=11 // pred_check_branch
          %392 = sbr.rel (%p390) target = $region32
        $region31: #{tpu_custom_call.1} parent=11 // pred_region
          %394 = vsyncadd [#allocation10], 0
          %s395 = sshll.u32 %s5, 4
          %s396 = int_to_ptr.hbm [resolvable:$true] %s395
          %s397 = sshll.u32 [#allocation11], 4
          %s398 = int_to_ptr.vmem [resolvable:$true] %s397
          %403 = dma.hbm_to_vmem [thread:$0]  %s396, 1024, %s398, [#allocation10], 64, 64, 4
        $region32: #{tpu_custom_call.1} parent=11 // pred_fallthru
          _
        // Predicated region
        $region33: #{tpu_custom_call.1} parent=11 // pred_check
          %p404 = pneg %p182
        $region34: #{tpu_custom_call.1} parent=11 // pred_check_branch
          %406 = sbr.rel (%p404) target = $region36
        $region35: #{tpu_custom_call.1} parent=11 // pred_region
          %408 = vsyncadd [#allocation13], 0
          %s410 = sshll.u32 %s6, 4
          %s411 = int_to_ptr.hbm [resolvable:$true] %s410
          %s412 = sshll.u32 [#allocation12], 4
          %s413 = int_to_ptr.vmem [resolvable:$true] %s412
          %415 = dma.hbm_to_vmem [thread:$0]  %s411, 16, %s413, [#allocation13]
        $region36: #{tpu_custom_call.1} parent=11 // pred_fallthru
          _
        // Predicated region
        $region37: #{tpu_custom_call.1} parent=11 // pred_check
          %p416 = pneg %p203
        $region38: #{tpu_custom_call.1} parent=11 // pred_check_branch
          %418 = sbr.rel (%p416) target = $region40
        $region39: #{tpu_custom_call.1} parent=11 // pred_region
          %420 = vsyncadd [#allocation13], 0
          %s422 = sshll.u32 %s7, 4
          %s423 = int_to_ptr.hbm [resolvable:$true] %s422
          %s424 = sshll.u32 [#allocation14], 4
          %s425 = int_to_ptr.vmem [resolvable:$true] %s424
          %427 = dma.hbm_to_vmem [thread:$0]  %s423, 16, %s425, [#allocation13]
        $region40: #{tpu_custom_call.1} parent=11 // pred_fallthru
          _
        // Predicated region
        $region41: #{tpu_custom_call.1} parent=11 // pred_check
          %p428 = pneg %p224
        $region42: #{tpu_custom_call.1} parent=11 // pred_check_branch
          %430 = sbr.rel (%p428) target = $region44
        $region43: #{tpu_custom_call.1} parent=11 // pred_region
          %432 = vsyncadd [#allocation16], 0
          %s434 = sshll.u32 %s8, 4
          %s435 = int_to_ptr.hbm [resolvable:$true] %s434
          %s436 = sshll.u32 [#allocation15], 4
          %s437 = int_to_ptr.vmem [resolvable:$true] %s436
          %439 = dma.hbm_to_vmem [thread:$0]  %s435, 16, %s437, [#allocation16]
        $region44: #{tpu_custom_call.1} parent=11 // pred_fallthru
          _
        // Predicated region
        $region45: #{tpu_custom_call.1} parent=11 // pred_check
          %p440 = pneg %p245
        $region46: #{tpu_custom_call.1} parent=11 // pred_check_branch
          %442 = sbr.rel (%p440) target = $region48
        $region47: #{tpu_custom_call.1} parent=11 // pred_region
          %444 = vsyncadd [#allocation16], 0
          %s445 = sshll.u32 %s9, 4
          %s446 = int_to_ptr.hbm [resolvable:$true] %s445
          %s447 = sshll.u32 [#allocation17], 4
          %s448 = int_to_ptr.vmem [resolvable:$true] %s447
          %453 = dma.hbm_to_vmem [thread:$0]  %s446, 4096, %s448, [#allocation16], 256, 256, 16
        $region48: #{tpu_custom_call.1} parent=11 // pred_fallthru
          _
        // Predicated region
        $region49: #{tpu_custom_call.1} parent=11 // pred_check
          %p454 = pneg %p266
        $region50: #{tpu_custom_call.1} parent=11 // pred_check_branch
          %456 = sbr.rel (%p454) target = $region52
        $region51: #{tpu_custom_call.1} parent=11 // pred_region
          _
        $region52: #{tpu_custom_call.1} parent=11 // pred_fallthru
          _
        // Predicated region
        $region53: #{tpu_custom_call.1} parent=11 // pred_check
          %p457 = pneg %p287
        $region54: #{tpu_custom_call.1} parent=11 // pred_check_branch
          %459 = sbr.rel (%p457) target = $region56
        $region55: #{tpu_custom_call.1} parent=11 // pred_region
          %461 = vsyncadd [#allocation19], 0
          %s462 = sshll.u32 %s11, 4
          %s463 = int_to_ptr.hbm [resolvable:$true] %s462
          %s464 = sshll.u32 [#allocation18], 4
          %s465 = int_to_ptr.vmem [resolvable:$true] %s464
          %470 = dma.hbm_to_vmem [thread:$0]  %s463, 4096, %s465, [#allocation19], 64, 64, 4
        $region56: #{tpu_custom_call.1} parent=11 // pred_fallthru
          _
        // Predicated region
        $region57: #{tpu_custom_call.1} parent=11 // pred_check
          %p471 = pneg %p308
        $region58: #{tpu_custom_call.1} parent=11 // pred_check_branch
          %473 = sbr.rel (%p471) target = $region60
        $region59: #{tpu_custom_call.1} parent=11 // pred_region
          _
        $region60: #{tpu_custom_call.1} parent=11 // pred_fallthru
          _
      $region12: #{tpu_custom_call.1} parent=5 // pred_fallthru
        _
      %p474 = scmp.lt.s32.totalorder %s30, 2
      // Predicated region
      $region61: #{tpu_custom_call.1} parent=5 // pred_check
        %p475 = pneg %p474
      $region62: #{tpu_custom_call.1} parent=5 // pred_check_branch
        %477 = sbr.rel (%p475) target = $region64
      $region63: #{tpu_custom_call.1} parent=5 // pred_region
        // Predicated region
        $region65: #{tpu_custom_call.1} parent=63 // pred_check
          %p478 = pneg %p50
        $region66: #{tpu_custom_call.1} parent=63 // pred_check_branch
          %480 = sbr.rel (%p478) target = $region68
        $region67: #{tpu_custom_call.1} parent=63 // pred_region
          %s481 = sand.u32 %s40, 1
          %s482 = scalar_lea.sflag [#allocation4], %s481
          %s483 = sand.u32 %s40, 1
          %s484 = smul.addr %s483, 16
          %s485 = scalar_lea.vmem [#allocation3], %s484
          %487 = vsyncadd %s482, 0
          %s488 = smul.addr %s30, 2
          %s489 = smul.addr %s488, 8
          %s490 = scalar_lea.hbm %s0, %s489
          %s491 = sshll.u32 %s490, 4
          %s492 = int_to_ptr.hbm [resolvable:$true] %s491
          %s493 = sshll.u32 %s485, 4
          %s494 = int_to_ptr.vmem [resolvable:$true] %s493
          %499 = dma.hbm_to_vmem [thread:$0]  %s492, 256, %s494, %s482, 128, 128, 8
        $region68: #{tpu_custom_call.1} parent=63 // pred_fallthru
          _
      $region64: #{tpu_custom_call.1} parent=5 // pred_fallthru
        _
      %p500 = scmp.le.s32.totalorder 1, %s30
      %p501 = scmp.lt.s32.totalorder %s30, 3
      %p502 = pnand %p500, %p501
      %p503 = pneg %p502
      // Predicated region
      $region69: #{tpu_custom_call.1} parent=5 // pred_check
        _
      $region70: #{tpu_custom_call.1} parent=5 // pred_check_branch
        %505 = sbr.rel (%p502) target = $region72
      $region71: #{tpu_custom_call.1} parent=5 // pred_region
        %s506 = ssub.s32 %s30, 1
        %s507 = sand.u32 %s43, 1
        %s508 = scalar_lea.sflag [#allocation4], %s507
        %s509 = sand.u32 %s43, 1
        %s510 = smul.addr %s509, 16
        %s511 = scalar_lea.vmem [#allocation3], %s510
        // Predicated region
        $region73: #{tpu_custom_call.1} parent=71 // pred_check
          %p512 = pneg %p56
        $region74: #{tpu_custom_call.1} parent=71 // pred_check_branch
          %514 = sbr.rel (%p512) target = $region76
        $region75: #{tpu_custom_call.1} parent=71 // pred_region
          %516 = dma.done %s508, 256
        $region76: #{tpu_custom_call.1} parent=71 // pred_fallthru
          _
        // Predicated region
        $region77: #{tpu_custom_call.1} parent=71 // pred_check
          %p517 = pneg %p77
        $region78: #{tpu_custom_call.1} parent=71 // pred_check_branch
          %519 = sbr.rel (%p517) target = $region80
        $region79: #{tpu_custom_call.1} parent=71 // pred_region
          %521 = dma.done [#allocation7], 16
        $region80: #{tpu_custom_call.1} parent=71 // pred_fallthru
          _
        // Predicated region
        $region81: #{tpu_custom_call.1} parent=71 // pred_check
          %p522 = pneg %p98
        $region82: #{tpu_custom_call.1} parent=71 // pred_check_branch
          %524 = sbr.rel (%p522) target = $region84
        $region83: #{tpu_custom_call.1} parent=71 // pred_region
          %526 = dma.done [#allocation7], 16
        $region84: #{tpu_custom_call.1} parent=71 // pred_fallthru
          _
        // Predicated region
        $region85: #{tpu_custom_call.1} parent=71 // pred_check
          %p527 = pneg %p119
        $region86: #{tpu_custom_call.1} parent=71 // pred_check_branch
          %529 = sbr.rel (%p527) target = $region88
        $region87: #{tpu_custom_call.1} parent=71 // pred_region
          %531 = dma.done [#allocation10], 3072
        $region88: #{tpu_custom_call.1} parent=71 // pred_fallthru
          _
        // Predicated region
        $region89: #{tpu_custom_call.1} parent=71 // pred_check
          %p532 = pneg %p161
        $region90: #{tpu_custom_call.1} parent=71 // pred_check_branch
          %534 = sbr.rel (%p532) target = $region92
        $region91: #{tpu_custom_call.1} parent=71 // pred_region
          %536 = dma.done [#allocation10], 1024
        $region92: #{tpu_custom_call.1} parent=71 // pred_fallthru
          _
        // Predicated region
        $region93: #{tpu_custom_call.1} parent=71 // pred_check
          %p537 = pneg %p182
        $region94: #{tpu_custom_call.1} parent=71 // pred_check_branch
          %539 = sbr.rel (%p537) target = $region96
        $region95: #{tpu_custom_call.1} parent=71 // pred_region
          %541 = dma.done [#allocation13], 16
        $region96: #{tpu_custom_call.1} parent=71 // pred_fallthru
          _
        // Predicated region
        $region97: #{tpu_custom_call.1} parent=71 // pred_check
          %p542 = pneg %p203
        $region98: #{tpu_custom_call.1} parent=71 // pred_check_branch
          %544 = sbr.rel (%p542) target = $region100
        $region99: #{tpu_custom_call.1} parent=71 // pred_region
          %546 = dma.done [#allocation13], 16
        $region100: #{tpu_custom_call.1} parent=71 // pred_fallthru
          _
        // Predicated region
        $region101: #{tpu_custom_call.1} parent=71 // pred_check
          %p547 = pneg %p224
        $region102: #{tpu_custom_call.1} parent=71 // pred_check_branch
          %549 = sbr.rel (%p547) target = $region104
        $region103: #{tpu_custom_call.1} parent=71 // pred_region
          %551 = dma.done [#allocation16], 16
        $region104: #{tpu_custom_call.1} parent=71 // pred_fallthru
          _
        // Predicated region
        $region105: #{tpu_custom_call.1} parent=71 // pred_check
          %p552 = pneg %p245
        $region106: #{tpu_custom_call.1} parent=71 // pred_check_branch
          %554 = sbr.rel (%p552) target = $region108
        $region107: #{tpu_custom_call.1} parent=71 // pred_region
          %556 = dma.done [#allocation16], 4096
        $region108: #{tpu_custom_call.1} parent=71 // pred_fallthru
          _
        // Predicated region
        $region109: #{tpu_custom_call.1} parent=71 // pred_check
          %p557 = pneg %p287
        $region110: #{tpu_custom_call.1} parent=71 // pred_check_branch
          %559 = sbr.rel (%p557) target = $region112
        $region111: #{tpu_custom_call.1} parent=71 // pred_region
          %561 = dma.done [#allocation19], 4096
        $region112: #{tpu_custom_call.1} parent=71 // pred_fallthru
          _
        %s562 = sand.u32 %s43, 1
        %s563 = scalar_lea.sflag [#allocation4], %s562
        %s564 = sand.u32 %s43, 1
        %s565 = smul.addr %s564, 16
        %s566 = scalar_lea.vmem [#allocation3], %s565
        %p567 = pneg %p56
        %p568 = pneg %p53
        %p569 = pneg %p77
        %p570 = pneg %p74
        %p571 = pneg %p98
        %p572 = pneg %p95
        %p573 = pneg %p119
        %p574 = pneg %p116
        %p575 = pneg %p140
        %p576 = pneg %p137
        %p577 = pneg %p161
        %p578 = pneg %p158
        %p579 = pneg %p182
        %p580 = pneg %p179
        %p581 = pneg %p203
        %p582 = pneg %p200
        %p583 = pneg %p224
        %p584 = pneg %p221
        %p585 = pneg %p245
        %p586 = pneg %p242
        %p587 = pneg %p266
        %p588 = pneg %p263
        %p589 = pneg %p287
        %p590 = pneg %p284
        %p591 = pneg %p308
        %p592 = pneg %p305
        %p593 = pneg %p334
        %p594 = pneg %p331
        %s595 = sand.u32 %s321, 1
        %s596 = scalar_lea.sflag [#allocation5], %s595
        %s597 = sand.u32 %s321, 1
        %s598 = smul.addr %s597, 16
        %s599 = scalar_lea.vmem [#allocation20], %s598
        %v601 = vld [vmem:[#allocation6] sm:$0x1]
        %v602 = vld [vmem:[#allocation8] sm:$0x1]
        %v603 = vld [vmem:[#allocation14] sm:$0x1]
        %v604 = vld [vmem:[#allocation15] sm:$0x1]
        %v605 = vld [vmem:[#allocation9] sm:$0xff]
        %v606 = vld [vmem:[#allocation9 + $0x8] sm:$0xf]
        %v607 = vld [vmem:[#allocation9 + $0xc] sm:$0xff]
        %v608 = vld [vmem:[#allocation9 + $0x14] sm:$0xf]
        %v609 = vld [vmem:[#allocation9 + $0x18] sm:$0xff]
        %v610 = vld [vmem:[#allocation9 + $0x20] sm:$0xf]
        %v611 = vld [vmem:[#allocation9 + $0x24] sm:$0xff]
        %v612 = vld [vmem:[#allocation9 + $0x2c] sm:$0xf]
        %v613 = vld [vmem:[#allocation9 + $0x30] sm:$0xff]
        %v614 = vld [vmem:[#allocation9 + $0x38] sm:$0xf]
        %v615 = vld [vmem:[#allocation9 + $0x3c] sm:$0xff]
        %v616 = vld [vmem:[#allocation9 + $0x44] sm:$0xf]
        %v617 = vld [vmem:[#allocation9 + $0x48] sm:$0xff]
        %v618 = vld [vmem:[#allocation9 + $0x50] sm:$0xf]
        %v619 = vld [vmem:[#allocation9 + $0x54] sm:$0xff]
        %v620 = vld [vmem:[#allocation9 + $0x5c] sm:$0xf]
        %v621 = vld [vmem:[#allocation9 + $0x60] sm:$0xff]
        %v622 = vld [vmem:[#allocation9 + $0x68] sm:$0xf]
        %v623 = vld [vmem:[#allocation9 + $0x6c] sm:$0xff]
        %v624 = vld [vmem:[#allocation9 + $0x74] sm:$0xf]
        %v625 = vld [vmem:[#allocation9 + $0x78] sm:$0xff]
        %v626 = vld [vmem:[#allocation9 + $0x80] sm:$0xf]
        %v627 = vld [vmem:[#allocation9 + $0x84] sm:$0xff]
        %v628 = vld [vmem:[#allocation9 + $0x8c] sm:$0xf]
        %v629 = vld [vmem:[#allocation9 + $0x90] sm:$0xff]
        %v630 = vld [vmem:[#allocation9 + $0x98] sm:$0xf]
        %v631 = vld [vmem:[#allocation9 + $0x9c] sm:$0xff]
        %v632 = vld [vmem:[#allocation9 + $0xa4] sm:$0xf]
        %v633 = vld [vmem:[#allocation9 + $0xa8] sm:$0xff]
        %v634 = vld [vmem:[#allocation9 + $0xb0] sm:$0xf]
        %v635 = vld [vmem:[#allocation9 + $0xb4] sm:$0xff]
        %v636 = vld [vmem:[#allocation9 + $0xbc] sm:$0xf]
        %v637 = vld [vmem:[%s4] sm:$0x7]
        %v638 = vld [vmem:[#allocation11] sm:$0xf]
        %v639 = vld [vmem:[#allocation11 + $0x4] sm:$0xf]
        %v640 = vld [vmem:[#allocation11 + $0x8] sm:$0xf]
        %v641 = vld [vmem:[#allocation11 + $0xc] sm:$0xf]
        %v642 = vld [vmem:[#allocation11 + $0x10] sm:$0xf]
        %v643 = vld [vmem:[#allocation11 + $0x14] sm:$0xf]
        %v644 = vld [vmem:[#allocation11 + $0x18] sm:$0xf]
        %v645 = vld [vmem:[#allocation11 + $0x1c] sm:$0xf]
        %v646 = vld [vmem:[#allocation11 + $0x20] sm:$0xf]
        %v647 = vld [vmem:[#allocation11 + $0x24] sm:$0xf]
        %v648 = vld [vmem:[#allocation11 + $0x28] sm:$0xf]
        %v649 = vld [vmem:[#allocation11 + $0x2c] sm:$0xf]
        %v650 = vld [vmem:[#allocation11 + $0x30] sm:$0xf]
        %v651 = vld [vmem:[#allocation11 + $0x34] sm:$0xf]
        %v652 = vld [vmem:[#allocation11 + $0x38] sm:$0xf]
        %v653 = vld [vmem:[#allocation11 + $0x3c] sm:$0xf]
        %v654 = vld [vmem:[#allocation12] sm:$0x1]
        %v655 = vld [vmem:[#allocation17] sm:$0xff]
        %v656 = vld [vmem:[#allocation17 + $0x8] sm:$0xff]
        %v657 = vld [vmem:[#allocation17 + $0x10] sm:$0xff]
        %v658 = vld [vmem:[#allocation17 + $0x18] sm:$0xff]
        %v659 = vld [vmem:[#allocation17 + $0x20] sm:$0xff]
        %v660 = vld [vmem:[#allocation17 + $0x28] sm:$0xff]
        %v661 = vld [vmem:[#allocation17 + $0x30] sm:$0xff]
        %v662 = vld [vmem:[#allocation17 + $0x38] sm:$0xff]
        %v663 = vld [vmem:[#allocation17 + $0x40] sm:$0xff]
        %v664 = vld [vmem:[#allocation17 + $0x48] sm:$0xff]
        %v665 = vld [vmem:[#allocation17 + $0x50] sm:$0xff]
        %v666 = vld [vmem:[#allocation17 + $0x58] sm:$0xff]
        %v667 = vld [vmem:[#allocation17 + $0x60] sm:$0xff]
        %v668 = vld [vmem:[#allocation17 + $0x68] sm:$0xff]
        %v669 = vld [vmem:[#allocation17 + $0x70] sm:$0xff]
        %v670 = vld [vmem:[#allocation17 + $0x78] sm:$0xff]
        %v671 = vld [vmem:[#allocation17 + $0x80] sm:$0xff]
        %v672 = vld [vmem:[#allocation17 + $0x88] sm:$0xff]
        %v673 = vld [vmem:[#allocation17 + $0x90] sm:$0xff]
        %v674 = vld [vmem:[#allocation17 + $0x98] sm:$0xff]
        %v675 = vld [vmem:[#allocation17 + $0xa0] sm:$0xff]
        %v676 = vld [vmem:[#allocation17 + $0xa8] sm:$0xff]
        %v677 = vld [vmem:[#allocation17 + $0xb0] sm:$0xff]
        %v678 = vld [vmem:[#allocation17 + $0xb8] sm:$0xff]
        %v679 = vld [vmem:[#allocation17 + $0xc0] sm:$0xff]
        %v680 = vld [vmem:[#allocation17 + $0xc8] sm:$0xff]
        %v681 = vld [vmem:[#allocation17 + $0xd0] sm:$0xff]
        %v682 = vld [vmem:[#allocation17 + $0xd8] sm:$0xff]
        %v683 = vld [vmem:[#allocation17 + $0xe0] sm:$0xff]
        %v684 = vld [vmem:[#allocation17 + $0xe8] sm:$0xff]
        %v685 = vld [vmem:[#allocation17 + $0xf0] sm:$0xff]
        %v686 = vld [vmem:[#allocation17 + $0xf8] sm:$0xff]
        %v687 = vld [vmem:[%s10] sm:$0xf]
        %v688 = vld [vmem:[#allocation18] sm:$0xf]
        %v689 = vld [vmem:[#allocation18 + $0x4] sm:$0xf]
        %v690 = vld [vmem:[#allocation18 + $0x8] sm:$0xf]
        %v691 = vld [vmem:[#allocation18 + $0xc] sm:$0xf]
        %v692 = vld [vmem:[#allocation18 + $0x10] sm:$0xf]
        %v693 = vld [vmem:[#allocation18 + $0x14] sm:$0xf]
        %v694 = vld [vmem:[#allocation18 + $0x18] sm:$0xf]
        %v695 = vld [vmem:[#allocation18 + $0x1c] sm:$0xf]
        %v696 = vld [vmem:[#allocation18 + $0x20] sm:$0xf]
        %v697 = vld [vmem:[#allocation18 + $0x24] sm:$0xf]
        %v698 = vld [vmem:[#allocation18 + $0x28] sm:$0xf]
        %v699 = vld [vmem:[#allocation18 + $0x2c] sm:$0xf]
        %v700 = vld [vmem:[#allocation18 + $0x30] sm:$0xf]
        %v701 = vld [vmem:[#allocation18 + $0x34] sm:$0xf]
        %v702 = vld [vmem:[#allocation18 + $0x38] sm:$0xf]
        %v703 = vld [vmem:[#allocation18 + $0x3c] sm:$0xf]
        %v704 = vld [vmem:[#allocation18 + $0x40] sm:$0xf]
        %v705 = vld [vmem:[#allocation18 + $0x44] sm:$0xf]
        %v706 = vld [vmem:[#allocation18 + $0x48] sm:$0xf]
        %v707 = vld [vmem:[#allocation18 + $0x4c] sm:$0xf]
        %v708 = vld [vmem:[#allocation18 + $0x50] sm:$0xf]
        %v709 = vld [vmem:[#allocation18 + $0x54] sm:$0xf]
        %v710 = vld [vmem:[#allocation18 + $0x58] sm:$0xf]
        %v711 = vld [vmem:[#allocation18 + $0x5c] sm:$0xf]
        %v712 = vld [vmem:[#allocation18 + $0x60] sm:$0xf]
        %v713 = vld [vmem:[#allocation18 + $0x64] sm:$0xf]
        %v714 = vld [vmem:[#allocation18 + $0x68] sm:$0xf]
        %v715 = vld [vmem:[#allocation18 + $0x6c] sm:$0xf]
        %v716 = vld [vmem:[#allocation18 + $0x70] sm:$0xf]
        %v717 = vld [vmem:[#allocation18 + $0x74] sm:$0xf]
        %v718 = vld [vmem:[#allocation18 + $0x78] sm:$0xf]
        %v719 = vld [vmem:[#allocation18 + $0x7c] sm:$0xf]
        %v720 = vld [vmem:[#allocation18 + $0x80] sm:$0xf]
        %v721 = vld [vmem:[#allocation18 + $0x84] sm:$0xf]
        %v722 = vld [vmem:[#allocation18 + $0x88] sm:$0xf]
        %v723 = vld [vmem:[#allocation18 + $0x8c] sm:$0xf]
        %v724 = vld [vmem:[#allocation18 + $0x90] sm:$0xf]
        %v725 = vld [vmem:[#allocation18 + $0x94] sm:$0xf]
        %v726 = vld [vmem:[#allocation18 + $0x98] sm:$0xf]
        %v727 = vld [vmem:[#allocation18 + $0x9c] sm:$0xf]
        %v728 = vld [vmem:[#allocation18 + $0xa0] sm:$0xf]
        %v729 = vld [vmem:[#allocation18 + $0xa4] sm:$0xf]
        %v730 = vld [vmem:[#allocation18 + $0xa8] sm:$0xf]
        %v731 = vld [vmem:[#allocation18 + $0xac] sm:$0xf]
        %v732 = vld [vmem:[#allocation18 + $0xb0] sm:$0xf]
        %v733 = vld [vmem:[#allocation18 + $0xb4] sm:$0xf]
        %v734 = vld [vmem:[#allocation18 + $0xb8] sm:$0xf]
        %v735 = vld [vmem:[#allocation18 + $0xbc] sm:$0xf]
        %v736 = vld [vmem:[#allocation18 + $0xc0] sm:$0xf]
        %v737 = vld [vmem:[#allocation18 + $0xc4] sm:$0xf]
        %v738 = vld [vmem:[#allocation18 + $0xc8] sm:$0xf]
        %v739 = vld [vmem:[#allocation18 + $0xcc] sm:$0xf]
        %v740 = vld [vmem:[#allocation18 + $0xd0] sm:$0xf]
        %v741 = vld [vmem:[#allocation18 + $0xd4] sm:$0xf]
        %v742 = vld [vmem:[#allocation18 + $0xd8] sm:$0xf]
        %v743 = vld [vmem:[#allocation18 + $0xdc] sm:$0xf]
        %v744 = vld [vmem:[#allocation18 + $0xe0] sm:$0xf]
        %v745 = vld [vmem:[#allocation18 + $0xe4] sm:$0xf]
        %v746 = vld [vmem:[#allocation18 + $0xe8] sm:$0xf]
        %v747 = vld [vmem:[#allocation18 + $0xec] sm:$0xf]
        %v748 = vld [vmem:[#allocation18 + $0xf0] sm:$0xf]
        %v749 = vld [vmem:[#allocation18 + $0xf4] sm:$0xf]
        %v750 = vld [vmem:[#allocation18 + $0xf8] sm:$0xf]
        %v751 = vld [vmem:[#allocation18 + $0xfc] sm:$0xf]
        %v752 = vld [vmem:[%s12] sm:$0x1]
        %v753 = vld [vmem:[%s511] sm:$0xff]
        %v754 = vld [vmem:[%s511 + $0x8] sm:$0xff]
        %755 = vadd.xlane.f32.xlu0 %v753
        %v756 = vpop.xlane.xlu0 %755
        %757 = vadd.xlane.f32.xlu0 %v754
        %v758 = vpop.xlane.xlu0 %757
        %v759 = vrcp.pop 128.0
        %v760 = vmul.f32 128.0, %v759
        %v761 = vsub.f32 1.0, %v760
        %v762 = vmul.f32 %v759, %v761
        %v763 = vadd.f32 %v759, %v762
        %vm764 = vweird.f32 %v759
        %v765 = vsel %vm764, %v759, %v763
        %v766 = vmul.f32 %v756, %v765
        %v767 = vmul.f32 %v758, %v765
        %v768 = vsub.f32 %v753, %v766
        %v769 = vsub.f32 %v754, %v767
        %v770 = vmul.f32 %v768, %v768
        %v771 = vmul.f32 %v769, %v769
        %772 = vadd.xlane.f32.xlu0 %v770
        %v773 = vpop.xlane.xlu0 %772
        %774 = vadd.xlane.f32.xlu0 %v771
        %v775 = vpop.xlane.xlu0 %774
        %v776 = vmul.f32 %v773, %v765
        %v777 = vmul.f32 %v775, %v765
        %v778 = vadd.f32 %v776, 1e-06
        %v779 = vadd.f32 %v777, 1e-06
        %v780 = vrsqrt.pop %v778
        %v781 = vmul.f32 %v780, %v778
        %v782 = vmul.f32 %v781, %v780
        %v783 = vmul.f32 0.5, %v782
        %v784 = vsub.f32 1.5, %v783
        %v785 = vmul.f32 %v780, %v784
        %vm786 = vweird.f32 %v778
        %vm787 = vweird.f32 %v780
        %vm788 = vmor %vm786, %vm787
        %v789 = vsel %vm788, %v780, %v785
        %v790 = vrsqrt.pop %v779
        %v791 = vmul.f32 %v790, %v779
        %v792 = vmul.f32 %v791, %v790
        %v793 = vmul.f32 0.5, %v792
        %v794 = vsub.f32 1.5, %v793
        %v795 = vmul.f32 %v790, %v794
        %vm796 = vweird.f32 %v779
        %vm797 = vweird.f32 %v790
        %vm798 = vmor %vm796, %vm797
        %v799 = vsel %vm798, %v790, %v795
        %v800 = vmul.f32 %v768, %v789
        %v801 = vmul.f32 %v769, %v799
        %v803 = vperm.slane %v601, 0
        %v805 = vmul.f32 %v800, %v803
        %v806 = vmul.f32 %v801, %v803
        %v808 = vperm.slane %v602, 0
        %v810 = vadd.f32 %v805, %v808
        %v811 = vadd.f32 %v806, %v808
        %v812 = vpack.c.bf16 %v811, %v810
        %v814 = vperm.slane %v637, 0
        %v815 = vperm.slane %v637, 1
        %v816 = vperm.slane %v637, 2
        %v852 = vunpack.c.l.b16 %v605
        %v853 = vunpack.c.h.b16 %v605
        %v854 = vunpack.c.l.b16 %v606
        %v855 = vunpack.c.l.b16 %v607
        %v856 = vunpack.c.h.b16 %v607
        %v857 = vunpack.c.l.b16 %v608
        %v858 = vunpack.c.l.b16 %v609
        %v859 = vunpack.c.h.b16 %v609
        %v860 = vunpack.c.l.b16 %v610
        %v861 = vunpack.c.l.b16 %v611
        %v862 = vunpack.c.h.b16 %v611
        %v863 = vunpack.c.l.b16 %v612
        %v864 = vunpack.c.l.b16 %v613
        %v865 = vunpack.c.h.b16 %v613
        %v866 = vunpack.c.l.b16 %v614
        %v867 = vunpack.c.l.b16 %v615
        %v868 = vunpack.c.h.b16 %v615
        %v869 = vunpack.c.l.b16 %v616
        %v870 = vunpack.c.l.b16 %v617
        %v871 = vunpack.c.h.b16 %v617
        %v872 = vunpack.c.l.b16 %v618
        %v873 = vunpack.c.l.b16 %v619
        %v874 = vunpack.c.h.b16 %v619
        %v875 = vunpack.c.l.b16 %v620
        %v876 = vunpack.c.l.b16 %v621
        %v877 = vunpack.c.h.b16 %v621
        %v878 = vunpack.c.l.b16 %v622
        %v879 = vunpack.c.l.b16 %v623
        %v880 = vunpack.c.h.b16 %v623
        %v881 = vunpack.c.l.b16 %v624
        %v882 = vunpack.c.l.b16 %v625
        %v883 = vunpack.c.h.b16 %v625
        %v884 = vunpack.c.l.b16 %v626
        %v885 = vunpack.c.l.b16 %v627
        %v886 = vunpack.c.h.b16 %v627
        %v887 = vunpack.c.l.b16 %v628
        %v888 = vunpack.c.l.b16 %v629
        %v889 = vunpack.c.h.b16 %v629
        %v890 = vunpack.c.l.b16 %v630
        %v891 = vunpack.c.l.b16 %v631
        %v892 = vunpack.c.h.b16 %v631
        %v893 = vunpack.c.l.b16 %v632
        %v894 = vunpack.c.l.b16 %v633
        %v895 = vunpack.c.h.b16 %v633
        %v896 = vunpack.c.l.b16 %v634
        %v897 = vunpack.c.l.b16 %v635
        %v898 = vunpack.c.h.b16 %v635
        %v899 = vunpack.c.l.b16 %v636
        %v900 = vpack.c.b16 %v855, %v852
        %v901 = vpack.c.b16 %v856, %v853
        %v902 = vpack.c.b16 %v857, %v854
        %v903 = vpack.c.b16 %v861, %v858
        %v904 = vpack.c.b16 %v862, %v859
        %v905 = vpack.c.b16 %v863, %v860
        %v906 = vpack.c.b16 %v867, %v864
        %v907 = vpack.c.b16 %v868, %v865
        %v908 = vpack.c.b16 %v869, %v866
        %v909 = vpack.c.b16 %v873, %v870
        %v910 = vpack.c.b16 %v874, %v871
        %v911 = vpack.c.b16 %v875, %v872
        %v912 = vpack.c.b16 %v879, %v876
        %v913 = vpack.c.b16 %v880, %v877
        %v914 = vpack.c.b16 %v881, %v878
        %v915 = vpack.c.b16 %v885, %v882
        %v916 = vpack.c.b16 %v886, %v883
        %v917 = vpack.c.b16 %v887, %v884
        %v918 = vpack.c.b16 %v891, %v888
        %v919 = vpack.c.b16 %v892, %v889
        %v920 = vpack.c.b16 %v893, %v890
        %v921 = vpack.c.b16 %v897, %v894
        %v922 = vpack.c.b16 %v898, %v895
        %v923 = vpack.c.b16 %v899, %v896
        %948 = vmatpush.bf16.msra.mxu0 %v921
        %949 = vmatpush.bf16.msra.mxu0 %v918
        %950 = vmatpush.bf16.msra.mxu0 %v915
        %951 = vmatpush.bf16.msra.mxu0 %v912
        %952 = vmatpush.bf16.msra.mxu0 %v909
        %953 = vmatpush.bf16.msra.mxu0 %v906
        %954 = vmatpush.bf16.msra.mxu0 %v903
        %955 = vmatpush.bf16.msra.mxu0 %v900
        %956 = vmatmul.bf16.gmra.mxu0 %v812
        %v957 = vpop.f32.mrf.mxu0
        %v958 = vadd.f32 %v814, %v957
        %v959 = vpop.f32.mrf.mxu0
        %v960 = vadd.f32 %v814, %v959
        %961 = vdwg.mxu0
        %962 = vmatpush.bf16.msra.mxu0 %v922
        %963 = vmatpush.bf16.msra.mxu0 %v919
        %964 = vmatpush.bf16.msra.mxu0 %v916
        %965 = vmatpush.bf16.msra.mxu0 %v913
        %966 = vmatpush.bf16.msra.mxu0 %v910
        %967 = vmatpush.bf16.msra.mxu0 %v907
        %968 = vmatpush.bf16.msra.mxu0 %v904
        %969 = vmatpush.bf16.msra.mxu0 %v901
        %970 = vmatmul.bf16.gmra.mxu0 %v812
        %v971 = vpop.f32.mrf.mxu0
        %v972 = vadd.f32 %v815, %v971
        %v973 = vpop.f32.mrf.mxu0
        %v974 = vadd.f32 %v815, %v973
        %975 = vdwg.mxu0
        %976 = vmatpush.bf16.msra.mxu0 %v923
        %977 = vmatpush.bf16.msra.mxu0 %v920
        %978 = vmatpush.bf16.msra.mxu0 %v917
        %979 = vmatpush.bf16.msra.mxu0 %v914
        %980 = vmatpush.bf16.msra.mxu0 %v911
        %981 = vmatpush.bf16.msra.mxu0 %v908
        %982 = vmatpush.bf16.msra.mxu0 %v905
        %983 = vmatpush.bf16.msra.mxu0 %v902
        %984 = vmatmul.bf16.gmra.mxu0 %v812
        %v985 = vpop.f32.mrf.mxu0
        %v986 = vadd.f32 %v816, %v985
        %v987 = vpop.f32.mrf.mxu0
        %v988 = vadd.f32 %v816, %v987
        %989 = vdwg.mxu0
        %v990 = vpack.c.bf16 %v958, %v958
        %v991 = vpack.c.bf16 %v960, %v960
        %v992 = vpack.c.bf16 %v972, %v972
        %v993 = vpack.c.bf16 %v974, %v974
        %v994 = vpack.c.bf16 %v986, %v986
        %v995 = vpack.c.bf16 %v988, %v988
        %v998 = vunpack.c.l.b16 %v990
        %v999 = vunpack.c.l.b16 %v991
        %v1000 = vpack.c.b16 %v999, %v998
        %v1003 = vunpack.c.l.b16 %v992
        %v1004 = vunpack.c.l.b16 %v993
        %v1005 = vpack.c.b16 %v1004, %v1003
        %vm1006 = vcmask 261120
        %v1008 = vsel %vm1006, %v1000, 0
        %v1011 = vsel %vm1006, %v1005, 0
        %1013 = vmatpush.bf16.xpose.msra.mxu0 0
        %1014 = vmatpush.bf16.xpose.msra.mxu0 0
        %1015 = vmatpush.bf16.xpose.msra.mxu0 0
        %1016 = vmatpush.bf16.xpose.msra.mxu0 0
        %1017 = vmatpush.bf16.xpose.msra.mxu0 0
        %1018 = vmatpush.bf16.xpose.msra.mxu0 0
        %1019 = vmatpush.bf16.xpose.msra.mxu0 0
        %1020 = vmatpush.bf16.xpose.msra.mxu0 %v1011
        %1021 = vmatmul.bf16.gmra.mxu0 %v1008
        %v1022 = vpop.f32.mrf.mxu0
        %v1023 = vadd.f32 0.0, %v1022
        %v1024 = vpop.f32.mrf.mxu0
        %v1025 = vadd.f32 0.0, %v1024
        %1026 = vdwg.mxu0
        %vm1027 = vcmask 130048
        %v1028 = vsel %vm1027, %v1023, -inf
        %1029 = vmax.xlane.f32.xlu0 %v1028
        %v1030 = vpop.xlane.xlu0 %1029
        %v1031 = vsel %vm1027, %v1025, -inf
        %1032 = vmax.xlane.f32.xlu0 %v1031
        %v1033 = vpop.xlane.xlu0 %1032
        %v1034 = vsub.f32 %v1023, %v1030
        %v1035 = vsub.f32 %v1025, %v1033
        %v1036 = vmul.f32 %v1034, 1.442695
        %v1037 = vpow.pop %v1036
        %v1038 = vmul.f32 %v1035, 1.442695
        %v1039 = vpow.pop %v1038
        %v1040 = vsel %vm1027, %v1037, 0.0
        %1041 = vadd.xlane.f32.xlu0 %v1040
        %v1042 = vpop.xlane.xlu0 %1041
        %v1043 = vsel %vm1027, %v1039, 0.0
        %1044 = vadd.xlane.f32.xlu0 %v1043
        %v1045 = vpop.xlane.xlu0 %1044
        %v1046 = vrcp.pop %v1042
        %v1047 = vrcp.pop %v1045
        %v1048 = vmul.f32 %v1037, %v1046
        %v1049 = vmul.f32 %v1039, %v1047
        %v1050 = vpack.c.bf16 %v1048, %v1048
        %v1051 = vpack.c.bf16 %v1049, %v1049
        %v1054 = vunpack.c.l.b16 %v1050
        %v1055 = vunpack.c.l.b16 %v1051
        %v1056 = vpack.c.b16 %v1055, %v1054
        %v1059 = vunpack.c.l.b16 %v994
        %v1060 = vunpack.c.l.b16 %v995
        %v1061 = vpack.c.b16 %v1060, %v1059
        %v1064 = vsel %vm1027, %v1056, 0
        %1066 = vmatpush.bf16.msra.mxu0 0
        %1067 = vmatpush.bf16.msra.mxu0 0
        %1068 = vmatpush.bf16.msra.mxu0 0
        %1069 = vmatpush.bf16.msra.mxu0 0
        %1070 = vmatpush.bf16.msra.mxu0 0
        %1071 = vmatpush.bf16.msra.mxu0 0
        %1072 = vmatpush.bf16.msra.mxu0 0
        %1073 = vmatpush.bf16.msra.mxu0 %v1061
        %1074 = vmatmul.bf16.gmra.mxu0 %v1064
        %v1075 = vpop.f32.mrf.mxu0
        %v1076 = vadd.f32 0.0, %v1075
        %v1077 = vpop.f32.mrf.mxu0
        %v1078 = vadd.f32 0.0, %v1077
        %1079 = vdwg.mxu0
        %v1080 = vpack.c.bf16 %v1076, %v1076
        %v1081 = vpack.c.bf16 %v1078, %v1078
        %vm1082 = vcmask 257024
        %1083 = vst.msk [vmem:[#allocation2] sm:$0xf] %vm1082, %v1080
        %1084 = vst.msk [vmem:[#allocation2 + $0x4] sm:$0xf] %vm1082, %v1081
        %1085 = vrot.lane.b32.xlu0 %v1000, 96
        %v1086 = vpop.permute.xlu0 %1085
        %1087 = vrot.lane.b32.xlu0 %v1005, 96
        %v1088 = vpop.permute.xlu0 %1087
        %v1090 = vsel %vm1006, %v1086, 0
        %v1093 = vsel %vm1006, %v1088, 0
        %1095 = vmatpush.bf16.xpose.msra.mxu0 0
        %1096 = vmatpush.bf16.xpose.msra.mxu0 0
        %1097 = vmatpush.bf16.xpose.msra.mxu0 0
        %1098 = vmatpush.bf16.xpose.msra.mxu0 0
        %1099 = vmatpush.bf16.xpose.msra.mxu0 0
        %1100 = vmatpush.bf16.xpose.msra.mxu0 0
        %1101 = vmatpush.bf16.xpose.msra.mxu0 0
        %1102 = vmatpush.bf16.xpose.msra.mxu0 %v1093
        %1103 = vmatmul.bf16.gmra.mxu0 %v1090
        %v1104 = vpop.f32.mrf.mxu0
        %v1105 = vadd.f32 0.0, %v1104
        %v1106 = vpop.f32.mrf.mxu0
        %v1107 = vadd.f32 0.0, %v1106
        %1108 = vdwg.mxu0
        %v1109 = vsel %vm1027, %v1105, -inf
        %1110 = vmax.xlane.f32.xlu0 %v1109
        %v1111 = vpop.xlane.xlu0 %1110
        %v1112 = vsel %vm1027, %v1107, -inf
        %1113 = vmax.xlane.f32.xlu0 %v1112
        %v1114 = vpop.xlane.xlu0 %1113
        %v1115 = vsub.f32 %v1105, %v1111
        %v1116 = vsub.f32 %v1107, %v1114
        %v1117 = vmul.f32 %v1115, 1.442695
        %v1118 = vpow.pop %v1117
        %v1119 = vmul.f32 %v1116, 1.442695
        %v1120 = vpow.pop %v1119
        %v1121 = vsel %vm1027, %v1118, 0.0
        %1122 = vadd.xlane.f32.xlu0 %v1121
        %v1123 = vpop.xlane.xlu0 %1122
        %v1124 = vsel %vm1027, %v1120, 0.0
        %1125 = vadd.xlane.f32.xlu0 %v1124
        %v1126 = vpop.xlane.xlu0 %1125
        %v1127 = vrcp.pop %v1123
        %v1128 = vrcp.pop %v1126
        %v1129 = vmul.f32 %v1118, %v1127
        %v1130 = vmul.f32 %v1120, %v1128
        %v1131 = vpack.c.bf16 %v1129, %v1129
        %v1132 = vpack.c.bf16 %v1130, %v1130
        %v1135 = vunpack.c.l.b16 %v1131
        %v1136 = vunpack.c.l.b16 %v1132
        %v1137 = vpack.c.b16 %v1136, %v1135
        %1138 = vrot.lane.b32.xlu0 %v1061, 96
        %v1139 = vpop.permute.xlu0 %1138
        %v1142 = vsel %vm1027, %v1137, 0
        %1144 = vmatpush.bf16.msra.mxu0 0
        %1145 = vmatpush.bf16.msra.mxu0 0
        %1146 = vmatpush.bf16.msra.mxu0 0
        %1147 = vmatpush.bf16.msra.mxu0 0
        %1148 = vmatpush.bf16.msra.mxu0 0
        %1149 = vmatpush.bf16.msra.mxu0 0
        %1150 = vmatpush.bf16.msra.mxu0 0
        %1151 = vmatpush.bf16.msra.mxu0 %v1139
        %1152 = vmatmul.bf16.gmra.mxu0 %v1142
        %v1153 = vpop.f32.mrf.mxu0
        %v1154 = vadd.f32 0.0, %v1153
        %v1155 = vpop.f32.mrf.mxu0
        %v1156 = vadd.f32 0.0, %v1155
        %1157 = vdwg.mxu0
        %v1158 = vpack.c.bf16 %v1154, %v1154
        %v1159 = vpack.c.bf16 %v1156, %v1156
        %1162 = vrot.lane.b32.xlu0 %v1158, 32
        %v1163 = vpop.permute.xlu0 %1162
        %1164 = vrot.lane.b32.xlu0 %v1159, 32
        %v1165 = vpop.permute.xlu0 %1164
        %vm1168 = vcmask 519424
        %1169 = vst.msk [vmem:[#allocation2] sm:$0xf] %vm1168, %v1163
        %1170 = vst.msk [vmem:[#allocation2 + $0x4] sm:$0xf] %vm1168, %v1165
        %1171 = vrot.lane.b32.xlu0 %v1000, 64
        %v1172 = vpop.permute.xlu0 %1171
        %1173 = vrot.lane.b32.xlu0 %v1005, 64
        %v1174 = vpop.permute.xlu0 %1173
        %v1176 = vsel %vm1006, %v1172, 0
        %v1179 = vsel %vm1006, %v1174, 0
        %1181 = vmatpush.bf16.xpose.msra.mxu0 0
        %1182 = vmatpush.bf16.xpose.msra.mxu0 0
        %1183 = vmatpush.bf16.xpose.msra.mxu0 0
        %1184 = vmatpush.bf16.xpose.msra.mxu0 0
        %1185 = vmatpush.bf16.xpose.msra.mxu0 0
        %1186 = vmatpush.bf16.xpose.msra.mxu0 0
        %1187 = vmatpush.bf16.xpose.msra.mxu0 0
        %1188 = vmatpush.bf16.xpose.msra.mxu0 %v1179
        %1189 = vmatmul.bf16.gmra.mxu0 %v1176
        %v1190 = vpop.f32.mrf.mxu0
        %v1191 = vadd.f32 0.0, %v1190
        %v1192 = vpop.f32.mrf.mxu0
        %v1193 = vadd.f32 0.0, %v1192
        %1194 = vdwg.mxu0
        %v1195 = vsel %vm1027, %v1191, -inf
        %1196 = vmax.xlane.f32.xlu0 %v1195
        %v1197 = vpop.xlane.xlu0 %1196
        %v1198 = vsel %vm1027, %v1193, -inf
        %1199 = vmax.xlane.f32.xlu0 %v1198
        %v1200 = vpop.xlane.xlu0 %1199
        %v1201 = vsub.f32 %v1191, %v1197
        %v1202 = vsub.f32 %v1193, %v1200
        %v1203 = vmul.f32 %v1201, 1.442695
        %v1204 = vpow.pop %v1203
        %v1205 = vmul.f32 %v1202, 1.442695
        %v1206 = vpow.pop %v1205
        %v1207 = vsel %vm1027, %v1204, 0.0
        %1208 = vadd.xlane.f32.xlu0 %v1207
        %v1209 = vpop.xlane.xlu0 %1208
        %v1210 = vsel %vm1027, %v1206, 0.0
        %1211 = vadd.xlane.f32.xlu0 %v1210
        %v1212 = vpop.xlane.xlu0 %1211
        %v1213 = vrcp.pop %v1209
        %v1214 = vrcp.pop %v1212
        %v1215 = vmul.f32 %v1204, %v1213
        %v1216 = vmul.f32 %v1206, %v1214
        %v1217 = vpack.c.bf16 %v1215, %v1215
        %v1218 = vpack.c.bf16 %v1216, %v1216
        %v1221 = vunpack.c.l.b16 %v1217
        %v1222 = vunpack.c.l.b16 %v1218
        %v1223 = vpack.c.b16 %v1222, %v1221
        %1224 = vrot.lane.b32.xlu0 %v1061, 64
        %v1225 = vpop.permute.xlu0 %1224
        %v1228 = vsel %vm1027, %v1223, 0
        %1230 = vmatpush.bf16.msra.mxu0 0
        %1231 = vmatpush.bf16.msra.mxu0 0
        %1232 = vmatpush.bf16.msra.mxu0 0
        %1233 = vmatpush.bf16.msra.mxu0 0
        %1234 = vmatpush.bf16.msra.mxu0 0
        %1235 = vmatpush.bf16.msra.mxu0 0
        %1236 = vmatpush.bf16.msra.mxu0 0
        %1237 = vmatpush.bf16.msra.mxu0 %v1225
        %1238 = vmatmul.bf16.gmra.mxu0 %v1228
        %v1239 = vpop.f32.mrf.mxu0
        %v1240 = vadd.f32 0.0, %v1239
        %v1241 = vpop.f32.mrf.mxu0
        %v1242 = vadd.f32 0.0, %v1241
        %1243 = vdwg.mxu0
        %v1244 = vpack.c.bf16 %v1240, %v1240
        %v1245 = vpack.c.bf16 %v1242, %v1242
        %1248 = vrot.lane.b32.xlu0 %v1244, 64
        %v1249 = vpop.permute.xlu0 %1248
        %1250 = vrot.lane.b32.xlu0 %v1245, 64
        %v1251 = vpop.permute.xlu0 %1250
        %vm1254 = vcmask 781824
        %1255 = vst.msk [vmem:[#allocation2] sm:$0xf] %vm1254, %v1249
        %1256 = vst.msk [vmem:[#allocation2 + $0x4] sm:$0xf] %vm1254, %v1251
        %1257 = vrot.lane.b32.xlu0 %v1000, 32
        %v1258 = vpop.permute.xlu0 %1257
        %1259 = vrot.lane.b32.xlu0 %v1005, 32
        %v1260 = vpop.permute.xlu0 %1259
        %v1262 = vsel %vm1006, %v1258, 0
        %v1265 = vsel %vm1006, %v1260, 0
        %1267 = vmatpush.bf16.xpose.msra.mxu0 0
        %1268 = vmatpush.bf16.xpose.msra.mxu0 0
        %1269 = vmatpush.bf16.xpose.msra.mxu0 0
        %1270 = vmatpush.bf16.xpose.msra.mxu0 0
        %1271 = vmatpush.bf16.xpose.msra.mxu0 0
        %1272 = vmatpush.bf16.xpose.msra.mxu0 0
        %1273 = vmatpush.bf16.xpose.msra.mxu0 0
        %1274 = vmatpush.bf16.xpose.msra.mxu0 %v1265
        %1275 = vmatmul.bf16.gmra.mxu0 %v1262
        %v1276 = vpop.f32.mrf.mxu0
        %v1277 = vadd.f32 0.0, %v1276
        %v1278 = vpop.f32.mrf.mxu0
        %v1279 = vadd.f32 0.0, %v1278
        %1280 = vdwg.mxu0
        %v1281 = vsel %vm1027, %v1277, -inf
        %1282 = vmax.xlane.f32.xlu0 %v1281
        %v1283 = vpop.xlane.xlu0 %1282
        %v1284 = vsel %vm1027, %v1279, -inf
        %1285 = vmax.xlane.f32.xlu0 %v1284
        %v1286 = vpop.xlane.xlu0 %1285
        %v1287 = vsub.f32 %v1277, %v1283
        %v1288 = vsub.f32 %v1279, %v1286
        %v1289 = vmul.f32 %v1287, 1.442695
        %v1290 = vpow.pop %v1289
        %v1291 = vmul.f32 %v1288, 1.442695
        %v1292 = vpow.pop %v1291
        %v1293 = vsel %vm1027, %v1290, 0.0
        %1294 = vadd.xlane.f32.xlu0 %v1293
        %v1295 = vpop.xlane.xlu0 %1294
        %v1296 = vsel %vm1027, %v1292, 0.0
        %1297 = vadd.xlane.f32.xlu0 %v1296
        %v1298 = vpop.xlane.xlu0 %1297
        %v1299 = vrcp.pop %v1295
        %v1300 = vrcp.pop %v1298
        %v1301 = vmul.f32 %v1290, %v1299
        %v1302 = vmul.f32 %v1292, %v1300
        %v1303 = vpack.c.bf16 %v1301, %v1301
        %v1304 = vpack.c.bf16 %v1302, %v1302
        %v1307 = vunpack.c.l.b16 %v1303
        %v1308 = vunpack.c.l.b16 %v1304
        %v1309 = vpack.c.b16 %v1308, %v1307
        %1310 = vrot.lane.b32.xlu0 %v1061, 32
        %v1311 = vpop.permute.xlu0 %1310
        %v1314 = vsel %vm1027, %v1309, 0
        %1316 = vmatpush.bf16.msra.mxu0 0
        %1317 = vmatpush.bf16.msra.mxu0 0
        %1318 = vmatpush.bf16.msra.mxu0 0
        %1319 = vmatpush.bf16.msra.mxu0 0
        %1320 = vmatpush.bf16.msra.mxu0 0
        %1321 = vmatpush.bf16.msra.mxu0 0
        %1322 = vmatpush.bf16.msra.mxu0 0
        %1323 = vmatpush.bf16.msra.mxu0 %v1311
        %1324 = vmatmul.bf16.gmra.mxu0 %v1314
        %v1325 = vpop.f32.mrf.mxu0
        %v1326 = vadd.f32 0.0, %v1325
        %v1327 = vpop.f32.mrf.mxu0
        %v1328 = vadd.f32 0.0, %v1327
        %1329 = vdwg.mxu0
        %v1330 = vpack.c.bf16 %v1326, %v1326
        %v1331 = vpack.c.bf16 %v1328, %v1328
        %1334 = vrot.lane.b32.xlu0 %v1330, 96
        %v1335 = vpop.permute.xlu0 %1334
        %1336 = vrot.lane.b32.xlu0 %v1331, 96
        %v1337 = vpop.permute.xlu0 %1336
        %vm1340 = vcmask 1044224
        %1341 = vst.msk [vmem:[#allocation2] sm:$0xf] %vm1340, %v1335
        %1342 = vst.msk [vmem:[#allocation2 + $0x4] sm:$0xf] %vm1340, %v1337
        %v1343 = vld [vmem:[#allocation2] sm:$0xf]
        %v1344 = vld [vmem:[#allocation2 + $0x4] sm:$0xf]
        %v1346 = vperm.slane %v654, 0
        %v1350 = vunpack.c.l.b16 %v1343
        %v1351 = vunpack.c.l.b16 %v1344
        %v1352 = vpack.c.b16 %v1351, %v1350
        %v1370 = vunpack.c.l.b16 %v638
        %v1371 = vunpack.c.l.b16 %v639
        %v1372 = vunpack.c.l.b16 %v640
        %v1373 = vunpack.c.l.b16 %v641
        %v1374 = vunpack.c.l.b16 %v642
        %v1375 = vunpack.c.l.b16 %v643
        %v1376 = vunpack.c.l.b16 %v644
        %v1377 = vunpack.c.l.b16 %v645
        %v1378 = vunpack.c.l.b16 %v646
        %v1379 = vunpack.c.l.b16 %v647
        %v1380 = vunpack.c.l.b16 %v648
        %v1381 = vunpack.c.l.b16 %v649
        %v1382 = vunpack.c.l.b16 %v650
        %v1383 = vunpack.c.l.b16 %v651
        %v1384 = vunpack.c.l.b16 %v652
        %v1385 = vunpack.c.l.b16 %v653
        %v1386 = vpack.c.b16 %v1371, %v1370
        %v1387 = vpack.c.b16 %v1373, %v1372
        %v1388 = vpack.c.b16 %v1375, %v1374
        %v1389 = vpack.c.b16 %v1377, %v1376
        %v1390 = vpack.c.b16 %v1379, %v1378
        %v1391 = vpack.c.b16 %v1381, %v1380
        %v1392 = vpack.c.b16 %v1383, %v1382
        %v1393 = vpack.c.b16 %v1385, %v1384
        %1402 = vmatpush.bf16.msra.mxu0 %v1393
        %1403 = vmatpush.bf16.msra.mxu0 %v1392
        %1404 = vmatpush.bf16.msra.mxu0 %v1391
        %1405 = vmatpush.bf16.msra.mxu0 %v1390
        %1406 = vmatpush.bf16.msra.mxu0 %v1389
        %1407 = vmatpush.bf16.msra.mxu0 %v1388
        %1408 = vmatpush.bf16.msra.mxu0 %v1387
        %1409 = vmatpush.bf16.msra.mxu0 %v1386
        %1410 = vmatmul.bf16.gmra.mxu0 %v1352
        %v1411 = vpop.f32.mrf.mxu0
        %v1412 = vadd.f32 %v1346, %v1411
        %v1413 = vpop.f32.mrf.mxu0
        %v1414 = vadd.f32 %v1346, %v1413
        %1415 = vdwg.mxu0
        %v1416 = vadd.f32 %v753, %v1412
        %v1417 = vadd.f32 %v754, %v1414
        %1418 = vadd.xlane.f32.xlu0 %v1416
        %v1419 = vpop.xlane.xlu0 %1418
        %1420 = vadd.xlane.f32.xlu0 %v1417
        %v1421 = vpop.xlane.xlu0 %1420
        %v1422 = vmul.f32 %v1419, %v765
        %v1423 = vmul.f32 %v1421, %v765
        %v1424 = vsub.f32 %v1416, %v1422
        %v1425 = vsub.f32 %v1417, %v1423
        %v1426 = vmul.f32 %v1424, %v1424
        %v1427 = vmul.f32 %v1425, %v1425
        %1428 = vadd.xlane.f32.xlu0 %v1426
        %v1429 = vpop.xlane.xlu0 %1428
        %1430 = vadd.xlane.f32.xlu0 %v1427
        %v1431 = vpop.xlane.xlu0 %1430
        %v1432 = vmul.f32 %v1429, %v765
        %v1433 = vmul.f32 %v1431, %v765
        %v1434 = vadd.f32 %v1432, 1e-06
        %v1435 = vadd.f32 %v1433, 1e-06
        %v1436 = vrsqrt.pop %v1434
        %v1437 = vmul.f32 %v1436, %v1434
        %v1438 = vmul.f32 %v1437, %v1436
        %v1439 = vmul.f32 0.5, %v1438
        %v1440 = vsub.f32 1.5, %v1439
        %v1441 = vmul.f32 %v1436, %v1440
        %vm1442 = vweird.f32 %v1434
        %vm1443 = vweird.f32 %v1436
        %vm1444 = vmor %vm1442, %vm1443
        %v1445 = vsel %vm1444, %v1436, %v1441
        %v1446 = vrsqrt.pop %v1435
        %v1447 = vmul.f32 %v1446, %v1435
        %v1448 = vmul.f32 %v1447, %v1446
        %v1449 = vmul.f32 0.5, %v1448
        %v1450 = vsub.f32 1.5, %v1449
        %v1451 = vmul.f32 %v1446, %v1450
        %vm1452 = vweird.f32 %v1435
        %vm1453 = vweird.f32 %v1446
        %vm1454 = vmor %vm1452, %vm1453
        %v1455 = vsel %vm1454, %v1446, %v1451
        %v1456 = vmul.f32 %v1424, %v1445
        %v1457 = vmul.f32 %v1425, %v1455
        %v1459 = vperm.slane %v603, 0
        %v1461 = vmul.f32 %v1456, %v1459
        %v1462 = vmul.f32 %v1457, %v1459
        %v1464 = vperm.slane %v604, 0
        %v1466 = vadd.f32 %v1461, %v1464
        %v1467 = vadd.f32 %v1462, %v1464
        %v1468 = vpack.c.bf16 %v1467, %v1466
        %v1470 = vperm.slane %v687, 0
        %v1471 = vperm.slane %v687, 1
        %v1472 = vperm.slane %v687, 2
        %v1473 = vperm.slane %v687, 3
        %v1510 = vunpack.c.l.b16 %v655
        %v1511 = vunpack.c.h.b16 %v655
        %v1512 = vunpack.c.l.b16 %v656
        %v1513 = vunpack.c.h.b16 %v656
        %v1514 = vunpack.c.l.b16 %v657
        %v1515 = vunpack.c.h.b16 %v657
        %v1516 = vunpack.c.l.b16 %v658
        %v1517 = vunpack.c.h.b16 %v658
        %v1518 = vunpack.c.l.b16 %v659
        %v1519 = vunpack.c.h.b16 %v659
        %v1520 = vunpack.c.l.b16 %v660
        %v1521 = vunpack.c.h.b16 %v660
        %v1522 = vunpack.c.l.b16 %v661
        %v1523 = vunpack.c.h.b16 %v661
        %v1524 = vunpack.c.l.b16 %v662
        %v1525 = vunpack.c.h.b16 %v662
        %v1526 = vunpack.c.l.b16 %v663
        %v1527 = vunpack.c.h.b16 %v663
        %v1528 = vunpack.c.l.b16 %v664
        %v1529 = vunpack.c.h.b16 %v664
        %v1530 = vunpack.c.l.b16 %v665
        %v1531 = vunpack.c.h.b16 %v665
        %v1532 = vunpack.c.l.b16 %v666
        %v1533 = vunpack.c.h.b16 %v666
        %v1534 = vunpack.c.l.b16 %v667
        %v1535 = vunpack.c.h.b16 %v667
        %v1536 = vunpack.c.l.b16 %v668
        %v1537 = vunpack.c.h.b16 %v668
        %v1538 = vunpack.c.l.b16 %v669
        %v1539 = vunpack.c.h.b16 %v669
        %v1540 = vunpack.c.l.b16 %v670
        %v1541 = vunpack.c.h.b16 %v670
        %v1542 = vunpack.c.l.b16 %v671
        %v1543 = vunpack.c.h.b16 %v671
        %v1544 = vunpack.c.l.b16 %v672
        %v1545 = vunpack.c.h.b16 %v672
        %v1546 = vunpack.c.l.b16 %v673
        %v1547 = vunpack.c.h.b16 %v673
        %v1548 = vunpack.c.l.b16 %v674
        %v1549 = vunpack.c.h.b16 %v674
        %v1550 = vunpack.c.l.b16 %v675
        %v1551 = vunpack.c.h.b16 %v675
        %v1552 = vunpack.c.l.b16 %v676
        %v1553 = vunpack.c.h.b16 %v676
        %v1554 = vunpack.c.l.b16 %v677
        %v1555 = vunpack.c.h.b16 %v677
        %v1556 = vunpack.c.l.b16 %v678
        %v1557 = vunpack.c.h.b16 %v678
        %v1558 = vunpack.c.l.b16 %v679
        %v1559 = vunpack.c.h.b16 %v679
        %v1560 = vunpack.c.l.b16 %v680
        %v1561 = vunpack.c.h.b16 %v680
        %v1562 = vunpack.c.l.b16 %v681
        %v1563 = vunpack.c.h.b16 %v681
        %v1564 = vunpack.c.l.b16 %v682
        %v1565 = vunpack.c.h.b16 %v682
        %v1566 = vunpack.c.l.b16 %v683
        %v1567 = vunpack.c.h.b16 %v683
        %v1568 = vunpack.c.l.b16 %v684
        %v1569 = vunpack.c.h.b16 %v684
        %v1570 = vunpack.c.l.b16 %v685
        %v1571 = vunpack.c.h.b16 %v685
        %v1572 = vunpack.c.l.b16 %v686
        %v1573 = vunpack.c.h.b16 %v686
        %v1574 = vpack.c.b16 %v1514, %v1510
        %v1575 = vpack.c.b16 %v1515, %v1511
        %v1576 = vpack.c.b16 %v1516, %v1512
        %v1577 = vpack.c.b16 %v1517, %v1513
        %v1578 = vpack.c.b16 %v1522, %v1518
        %v1579 = vpack.c.b16 %v1523, %v1519
        %v1580 = vpack.c.b16 %v1524, %v1520
        %v1581 = vpack.c.b16 %v1525, %v1521
        %v1582 = vpack.c.b16 %v1530, %v1526
        %v1583 = vpack.c.b16 %v1531, %v1527
        %v1584 = vpack.c.b16 %v1532, %v1528
        %v1585 = vpack.c.b16 %v1533, %v1529
        %v1586 = vpack.c.b16 %v1538, %v1534
        %v1587 = vpack.c.b16 %v1539, %v1535
        %v1588 = vpack.c.b16 %v1540, %v1536
        %v1589 = vpack.c.b16 %v1541, %v1537
        %v1590 = vpack.c.b16 %v1546, %v1542
        %v1591 = vpack.c.b16 %v1547, %v1543
        %v1592 = vpack.c.b16 %v1548, %v1544
        %v1593 = vpack.c.b16 %v1549, %v1545
        %v1594 = vpack.c.b16 %v1554, %v1550
        %v1595 = vpack.c.b16 %v1555, %v1551
        %v1596 = vpack.c.b16 %v1556, %v1552
        %v1597 = vpack.c.b16 %v1557, %v1553
        %v1598 = vpack.c.b16 %v1562, %v1558
        %v1599 = vpack.c.b16 %v1563, %v1559
        %v1600 = vpack.c.b16 %v1564, %v1560
        %v1601 = vpack.c.b16 %v1565, %v1561
        %v1602 = vpack.c.b16 %v1570, %v1566
        %v1603 = vpack.c.b16 %v1571, %v1567
        %v1604 = vpack.c.b16 %v1572, %v1568
        %v1605 = vpack.c.b16 %v1573, %v1569
        %1638 = vmatpush.bf16.msra.mxu0 %v1602
        %1639 = vmatpush.bf16.msra.mxu0 %v1598
        %1640 = vmatpush.bf16.msra.mxu0 %v1594
        %1641 = vmatpush.bf16.msra.mxu0 %v1590
        %1642 = vmatpush.bf16.msra.mxu0 %v1586
        %1643 = vmatpush.bf16.msra.mxu0 %v1582
        %1644 = vmatpush.bf16.msra.mxu0 %v1578
        %1645 = vmatpush.bf16.msra.mxu0 %v1574
        %1646 = vmatmul.bf16.gmra.mxu0 %v1468
        %v1647 = vpop.f32.mrf.mxu0
        %v1648 = vadd.f32 %v1470, %v1647
        %v1649 = vpop.f32.mrf.mxu0
        %v1650 = vadd.f32 %v1470, %v1649
        %1651 = vdwg.mxu0
        %1652 = vmatpush.bf16.msra.mxu0 %v1603
        %1653 = vmatpush.bf16.msra.mxu0 %v1599
        %1654 = vmatpush.bf16.msra.mxu0 %v1595
        %1655 = vmatpush.bf16.msra.mxu0 %v1591
        %1656 = vmatpush.bf16.msra.mxu0 %v1587
        %1657 = vmatpush.bf16.msra.mxu0 %v1583
        %1658 = vmatpush.bf16.msra.mxu0 %v1579
        %1659 = vmatpush.bf16.msra.mxu0 %v1575
        %1660 = vmatmul.bf16.gmra.mxu0 %v1468
        %v1661 = vpop.f32.mrf.mxu0
        %v1662 = vadd.f32 %v1471, %v1661
        %v1663 = vpop.f32.mrf.mxu0
        %v1664 = vadd.f32 %v1471, %v1663
        %1665 = vdwg.mxu0
        %1666 = vmatpush.bf16.msra.mxu0 %v1604
        %1667 = vmatpush.bf16.msra.mxu0 %v1600
        %1668 = vmatpush.bf16.msra.mxu0 %v1596
        %1669 = vmatpush.bf16.msra.mxu0 %v1592
        %1670 = vmatpush.bf16.msra.mxu0 %v1588
        %1671 = vmatpush.bf16.msra.mxu0 %v1584
        %1672 = vmatpush.bf16.msra.mxu0 %v1580
        %1673 = vmatpush.bf16.msra.mxu0 %v1576
        %1674 = vmatmul.bf16.gmra.mxu0 %v1468
        %v1675 = vpop.f32.mrf.mxu0
        %v1676 = vadd.f32 %v1472, %v1675
        %v1677 = vpop.f32.mrf.mxu0
        %v1678 = vadd.f32 %v1472, %v1677
        %1679 = vdwg.mxu0
        %1680 = vmatpush.bf16.msra.mxu0 %v1605
        %1681 = vmatpush.bf16.msra.mxu0 %v1601
        %1682 = vmatpush.bf16.msra.mxu0 %v1597
        %1683 = vmatpush.bf16.msra.mxu0 %v1593
        %1684 = vmatpush.bf16.msra.mxu0 %v1589
        %1685 = vmatpush.bf16.msra.mxu0 %v1585
        %1686 = vmatpush.bf16.msra.mxu0 %v1581
        %1687 = vmatpush.bf16.msra.mxu0 %v1577
        %1688 = vmatmul.bf16.gmra.mxu0 %v1468
        %v1689 = vpop.f32.mrf.mxu0
        %v1690 = vadd.f32 %v1473, %v1689
        %v1691 = vpop.f32.mrf.mxu0
        %v1692 = vadd.f32 %v1473, %v1691
        %1693 = vdwg.mxu0
        %v1694 = vmul.f32 %v1648, 0.5
        %v1695 = vmul.f32 %v1662, 0.5
        %v1696 = vmul.f32 %v1676, 0.5
        %v1697 = vmul.f32 %v1690, 0.5
        %v1698 = vmul.f32 %v1650, 0.5
        %v1699 = vmul.f32 %v1664, 0.5
        %v1700 = vmul.f32 %v1678, 0.5
        %v1701 = vmul.f32 %v1692, 0.5
        %v1702 = vmul.f32 %v1648, 0.70710677
        %v1703 = vmul.f32 %v1662, 0.70710677
        %v1704 = vmul.f32 %v1676, 0.70710677
        %v1705 = vmul.f32 %v1690, 0.70710677
        %v1706 = vmul.f32 %v1650, 0.70710677
        %v1707 = vmul.f32 %v1664, 0.70710677
        %v1708 = vmul.f32 %v1678, 0.70710677
        %v1709 = vmul.f32 %v1692, 0.70710677
        %v1710 = vmul.f32 %v1702, %v1702
        %v1711 = vmin.f32 16.0, %v1710
        %v1712 = vmul.f32 %v1711, 2.1237322e-06
        %v1713 = vadd.f32 %v1712, 0.00028619796
        %v1714 = vmul.f32 %v1711, %v1713
        %v1715 = vadd.f32 %v1714, 0.0036580483
        %v1716 = vmul.f32 %v1711, %v1715
        %v1717 = vadd.f32 %v1716, 0.05243302
        %v1718 = vmul.f32 %v1711, %v1717
        %v1719 = vadd.f32 %v1718, 0.18741608
        %v1720 = vmul.f32 %v1711, %v1719
        %v1721 = vadd.f32 %v1720, 1.1283791
        %v1722 = vmul.f32 %v1702, %v1721
        %v1723 = vmul.f32 %v1711, 3.8918573e-05
        %v1724 = vadd.f32 %v1723, 0.001143296
        %v1725 = vmul.f32 %v1711, %v1724
        %v1726 = vadd.f32 %v1725, 0.014752088
        %v1727 = vmul.f32 %v1711, %v1726
        %v1728 = vadd.f32 %v1727, 0.112945676
        %v1729 = vmul.f32 %v1711, %v1728
        %v1730 = vadd.f32 %v1729, 0.4994258
        %v1731 = vmul.f32 %v1711, %v1730
        %v1732 = vadd.f32 %v1731, 1.0
        %v1733 = vrcp.pop %v1732
        %v1734 = vmul.f32 %v1732, %v1733
        %v1735 = vsub.f32 1.0, %v1734
        %v1736 = vmul.f32 %v1733, %v1735
        %v1737 = vadd.f32 %v1733, %v1736
        %vm1738 = vweird.f32 %v1732
        %vm1739 = vweird.f32 %v1733
        %vm1740 = vmor %vm1738, %vm1739
        %v1741 = vsel %vm1740, %v1733, %v1737
        %v1742 = vand.u32 2147483647, %v1732
        %vm1743 = vcmp.eq.f32.partialorder %v1742, 8.507059e+37
        %v1744 = vand.u32 %v1732, 2147483648
        %v1745 = vor.u32 1.1754944e-38, %v1744
        %v1746 = vsel %vm1743, %v1745, %v1741
        %v1747 = vmul.f32 %v1722, %v1746
        %v1748 = vmin.f32 %v1747, 1.0
        %v1749 = vmax.f32 %v1748, -1.0
        %v1750 = vmul.f32 %v1703, %v1703
        %v1751 = vmin.f32 16.0, %v1750
        %v1752 = vmul.f32 %v1751, 2.1237322e-06
        %v1753 = vadd.f32 %v1752, 0.00028619796
        %v1754 = vmul.f32 %v1751, %v1753
        %v1755 = vadd.f32 %v1754, 0.0036580483
        %v1756 = vmul.f32 %v1751, %v1755
        %v1757 = vadd.f32 %v1756, 0.05243302
        %v1758 = vmul.f32 %v1751, %v1757
        %v1759 = vadd.f32 %v1758, 0.18741608
        %v1760 = vmul.f32 %v1751, %v1759
        %v1761 = vadd.f32 %v1760, 1.1283791
        %v1762 = vmul.f32 %v1703, %v1761
        %v1763 = vmul.f32 %v1751, 3.8918573e-05
        %v1764 = vadd.f32 %v1763, 0.001143296
        %v1765 = vmul.f32 %v1751, %v1764
        %v1766 = vadd.f32 %v1765, 0.014752088
        %v1767 = vmul.f32 %v1751, %v1766
        %v1768 = vadd.f32 %v1767, 0.112945676
        %v1769 = vmul.f32 %v1751, %v1768
        %v1770 = vadd.f32 %v1769, 0.4994258
        %v1771 = vmul.f32 %v1751, %v1770
        %v1772 = vadd.f32 %v1771, 1.0
        %v1773 = vrcp.pop %v1772
        %v1774 = vmul.f32 %v1772, %v1773
        %v1775 = vsub.f32 1.0, %v1774
        %v1776 = vmul.f32 %v1773, %v1775
        %v1777 = vadd.f32 %v1773, %v1776
        %vm1778 = vweird.f32 %v1772
        %vm1779 = vweird.f32 %v1773
        %vm1780 = vmor %vm1778, %vm1779
        %v1781 = vsel %vm1780, %v1773, %v1777
        %v1782 = vand.u32 2147483647, %v1772
        %vm1783 = vcmp.eq.f32.partialorder %v1782, 8.507059e+37
        %v1784 = vand.u32 %v1772, 2147483648
        %v1785 = vor.u32 1.1754944e-38, %v1784
        %v1786 = vsel %vm1783, %v1785, %v1781
        %v1787 = vmul.f32 %v1762, %v1786
        %v1788 = vmin.f32 %v1787, 1.0
        %v1789 = vmax.f32 %v1788, -1.0
        %v1790 = vmul.f32 %v1704, %v1704
        %v1791 = vmin.f32 16.0, %v1790
        %v1792 = vmul.f32 %v1791, 2.1237322e-06
        %v1793 = vadd.f32 %v1792, 0.00028619796
        %v1794 = vmul.f32 %v1791, %v1793
        %v1795 = vadd.f32 %v1794, 0.0036580483
        %v1796 = vmul.f32 %v1791, %v1795
        %v1797 = vadd.f32 %v1796, 0.05243302
        %v1798 = vmul.f32 %v1791, %v1797
        %v1799 = vadd.f32 %v1798, 0.18741608
        %v1800 = vmul.f32 %v1791, %v1799
        %v1801 = vadd.f32 %v1800, 1.1283791
        %v1802 = vmul.f32 %v1704, %v1801
        %v1803 = vmul.f32 %v1791, 3.8918573e-05
        %v1804 = vadd.f32 %v1803, 0.001143296
        %v1805 = vmul.f32 %v1791, %v1804
        %v1806 = vadd.f32 %v1805, 0.014752088
        %v1807 = vmul.f32 %v1791, %v1806
        %v1808 = vadd.f32 %v1807, 0.112945676
        %v1809 = vmul.f32 %v1791, %v1808
        %v1810 = vadd.f32 %v1809, 0.4994258
        %v1811 = vmul.f32 %v1791, %v1810
        %v1812 = vadd.f32 %v1811, 1.0
        %v1813 = vrcp.pop %v1812
        %v1814 = vmul.f32 %v1812, %v1813
        %v1815 = vsub.f32 1.0, %v1814
        %v1816 = vmul.f32 %v1813, %v1815
        %v1817 = vadd.f32 %v1813, %v1816
        %vm1818 = vweird.f32 %v1812
        %vm1819 = vweird.f32 %v1813
        %vm1820 = vmor %vm1818, %vm1819
        %v1821 = vsel %vm1820, %v1813, %v1817
        %v1822 = vand.u32 2147483647, %v1812
        %vm1823 = vcmp.eq.f32.partialorder %v1822, 8.507059e+37
        %v1824 = vand.u32 %v1812, 2147483648
        %v1825 = vor.u32 1.1754944e-38, %v1824
        %v1826 = vsel %vm1823, %v1825, %v1821
        %v1827 = vmul.f32 %v1802, %v1826
        %v1828 = vmin.f32 %v1827, 1.0
        %v1829 = vmax.f32 %v1828, -1.0
        %v1830 = vmul.f32 %v1705, %v1705
        %v1831 = vmin.f32 16.0, %v1830
        %v1832 = vmul.f32 %v1831, 2.1237322e-06
        %v1833 = vadd.f32 %v1832, 0.00028619796
        %v1834 = vmul.f32 %v1831, %v1833
        %v1835 = vadd.f32 %v1834, 0.0036580483
        %v1836 = vmul.f32 %v1831, %v1835
        %v1837 = vadd.f32 %v1836, 0.05243302
        %v1838 = vmul.f32 %v1831, %v1837
        %v1839 = vadd.f32 %v1838, 0.18741608
        %v1840 = vmul.f32 %v1831, %v1839
        %v1841 = vadd.f32 %v1840, 1.1283791
        %v1842 = vmul.f32 %v1705, %v1841
        %v1843 = vmul.f32 %v1831, 3.8918573e-05
        %v1844 = vadd.f32 %v1843, 0.001143296
        %v1845 = vmul.f32 %v1831, %v1844
        %v1846 = vadd.f32 %v1845, 0.014752088
        %v1847 = vmul.f32 %v1831, %v1846
        %v1848 = vadd.f32 %v1847, 0.112945676
        %v1849 = vmul.f32 %v1831, %v1848
        %v1850 = vadd.f32 %v1849, 0.4994258
        %v1851 = vmul.f32 %v1831, %v1850
        %v1852 = vadd.f32 %v1851, 1.0
        %v1853 = vrcp.pop %v1852
        %v1854 = vmul.f32 %v1852, %v1853
        %v1855 = vsub.f32 1.0, %v1854
        %v1856 = vmul.f32 %v1853, %v1855
        %v1857 = vadd.f32 %v1853, %v1856
        %vm1858 = vweird.f32 %v1852
        %vm1859 = vweird.f32 %v1853
        %vm1860 = vmor %vm1858, %vm1859
        %v1861 = vsel %vm1860, %v1853, %v1857
        %v1862 = vand.u32 2147483647, %v1852
        %vm1863 = vcmp.eq.f32.partialorder %v1862, 8.507059e+37
        %v1864 = vand.u32 %v1852, 2147483648
        %v1865 = vor.u32 1.1754944e-38, %v1864
        %v1866 = vsel %vm1863, %v1865, %v1861
        %v1867 = vmul.f32 %v1842, %v1866
        %v1868 = vmin.f32 %v1867, 1.0
        %v1869 = vmax.f32 %v1868, -1.0
        %v1870 = vmul.f32 %v1706, %v1706
        %v1871 = vmin.f32 16.0, %v1870
        %v1872 = vmul.f32 %v1871, 2.1237322e-06
        %v1873 = vadd.f32 %v1872, 0.00028619796
        %v1874 = vmul.f32 %v1871, %v1873
        %v1875 = vadd.f32 %v1874, 0.0036580483
        %v1876 = vmul.f32 %v1871, %v1875
        %v1877 = vadd.f32 %v1876, 0.05243302
        %v1878 = vmul.f32 %v1871, %v1877
        %v1879 = vadd.f32 %v1878, 0.18741608
        %v1880 = vmul.f32 %v1871, %v1879
        %v1881 = vadd.f32 %v1880, 1.1283791
        %v1882 = vmul.f32 %v1706, %v1881
        %v1883 = vmul.f32 %v1871, 3.8918573e-05
        %v1884 = vadd.f32 %v1883, 0.001143296
        %v1885 = vmul.f32 %v1871, %v1884
        %v1886 = vadd.f32 %v1885, 0.014752088
        %v1887 = vmul.f32 %v1871, %v1886
        %v1888 = vadd.f32 %v1887, 0.112945676
        %v1889 = vmul.f32 %v1871, %v1888
        %v1890 = vadd.f32 %v1889, 0.4994258
        %v1891 = vmul.f32 %v1871, %v1890
        %v1892 = vadd.f32 %v1891, 1.0
        %v1893 = vrcp.pop %v1892
        %v1894 = vmul.f32 %v1892, %v1893
        %v1895 = vsub.f32 1.0, %v1894
        %v1896 = vmul.f32 %v1893, %v1895
        %v1897 = vadd.f32 %v1893, %v1896
        %vm1898 = vweird.f32 %v1892
        %vm1899 = vweird.f32 %v1893
        %vm1900 = vmor %vm1898, %vm1899
        %v1901 = vsel %vm1900, %v1893, %v1897
        %v1902 = vand.u32 2147483647, %v1892
        %vm1903 = vcmp.eq.f32.partialorder %v1902, 8.507059e+37
        %v1904 = vand.u32 %v1892, 2147483648
        %v1905 = vor.u32 1.1754944e-38, %v1904
        %v1906 = vsel %vm1903, %v1905, %v1901
        %v1907 = vmul.f32 %v1882, %v1906
        %v1908 = vmin.f32 %v1907, 1.0
        %v1909 = vmax.f32 %v1908, -1.0
        %v1910 = vmul.f32 %v1707, %v1707
        %v1911 = vmin.f32 16.0, %v1910
        %v1912 = vmul.f32 %v1911, 2.1237322e-06
        %v1913 = vadd.f32 %v1912, 0.00028619796
        %v1914 = vmul.f32 %v1911, %v1913
        %v1915 = vadd.f32 %v1914, 0.0036580483
        %v1916 = vmul.f32 %v1911, %v1915
        %v1917 = vadd.f32 %v1916, 0.05243302
        %v1918 = vmul.f32 %v1911, %v1917
        %v1919 = vadd.f32 %v1918, 0.18741608
        %v1920 = vmul.f32 %v1911, %v1919
        %v1921 = vadd.f32 %v1920, 1.1283791
        %v1922 = vmul.f32 %v1707, %v1921
        %v1923 = vmul.f32 %v1911, 3.8918573e-05
        %v1924 = vadd.f32 %v1923, 0.001143296
        %v1925 = vmul.f32 %v1911, %v1924
        %v1926 = vadd.f32 %v1925, 0.014752088
        %v1927 = vmul.f32 %v1911, %v1926
        %v1928 = vadd.f32 %v1927, 0.112945676
        %v1929 = vmul.f32 %v1911, %v1928
        %v1930 = vadd.f32 %v1929, 0.4994258
        %v1931 = vmul.f32 %v1911, %v1930
        %v1932 = vadd.f32 %v1931, 1.0
        %v1933 = vrcp.pop %v1932
        %v1934 = vmul.f32 %v1932, %v1933
        %v1935 = vsub.f32 1.0, %v1934
        %v1936 = vmul.f32 %v1933, %v1935
        %v1937 = vadd.f32 %v1933, %v1936
        %vm1938 = vweird.f32 %v1932
        %vm1939 = vweird.f32 %v1933
        %vm1940 = vmor %vm1938, %vm1939
        %v1941 = vsel %vm1940, %v1933, %v1937
        %v1942 = vand.u32 2147483647, %v1932
        %vm1943 = vcmp.eq.f32.partialorder %v1942, 8.507059e+37
        %v1944 = vand.u32 %v1932, 2147483648
        %v1945 = vor.u32 1.1754944e-38, %v1944
        %v1946 = vsel %vm1943, %v1945, %v1941
        %v1947 = vmul.f32 %v1922, %v1946
        %v1948 = vmin.f32 %v1947, 1.0
        %v1949 = vmax.f32 %v1948, -1.0
        %v1950 = vmul.f32 %v1708, %v1708
        %v1951 = vmin.f32 16.0, %v1950
        %v1952 = vmul.f32 %v1951, 2.1237322e-06
        %v1953 = vadd.f32 %v1952, 0.00028619796
        %v1954 = vmul.f32 %v1951, %v1953
        %v1955 = vadd.f32 %v1954, 0.0036580483
        %v1956 = vmul.f32 %v1951, %v1955
        %v1957 = vadd.f32 %v1956, 0.05243302
        %v1958 = vmul.f32 %v1951, %v1957
        %v1959 = vadd.f32 %v1958, 0.18741608
        %v1960 = vmul.f32 %v1951, %v1959
        %v1961 = vadd.f32 %v1960, 1.1283791
        %v1962 = vmul.f32 %v1708, %v1961
        %v1963 = vmul.f32 %v1951, 3.8918573e-05
        %v1964 = vadd.f32 %v1963, 0.001143296
        %v1965 = vmul.f32 %v1951, %v1964
        %v1966 = vadd.f32 %v1965, 0.014752088
        %v1967 = vmul.f32 %v1951, %v1966
        %v1968 = vadd.f32 %v1967, 0.112945676
        %v1969 = vmul.f32 %v1951, %v1968
        %v1970 = vadd.f32 %v1969, 0.4994258
        %v1971 = vmul.f32 %v1951, %v1970
        %v1972 = vadd.f32 %v1971, 1.0
        %v1973 = vrcp.pop %v1972
        %v1974 = vmul.f32 %v1972, %v1973
        %v1975 = vsub.f32 1.0, %v1974
        %v1976 = vmul.f32 %v1973, %v1975
        %v1977 = vadd.f32 %v1973, %v1976
        %vm1978 = vweird.f32 %v1972
        %vm1979 = vweird.f32 %v1973
        %vm1980 = vmor %vm1978, %vm1979
        %v1981 = vsel %vm1980, %v1973, %v1977
        %v1982 = vand.u32 2147483647, %v1972
        %vm1983 = vcmp.eq.f32.partialorder %v1982, 8.507059e+37
        %v1984 = vand.u32 %v1972, 2147483648
        %v1985 = vor.u32 1.1754944e-38, %v1984
        %v1986 = vsel %vm1983, %v1985, %v1981
        %v1987 = vmul.f32 %v1962, %v1986
        %v1988 = vmin.f32 %v1987, 1.0
        %v1989 = vmax.f32 %v1988, -1.0
        %v1990 = vmul.f32 %v1709, %v1709
        %v1991 = vmin.f32 16.0, %v1990
        %v1992 = vmul.f32 %v1991, 2.1237322e-06
        %v1993 = vadd.f32 %v1992, 0.00028619796
        %v1994 = vmul.f32 %v1991, %v1993
        %v1995 = vadd.f32 %v1994, 0.0036580483
        %v1996 = vmul.f32 %v1991, %v1995
        %v1997 = vadd.f32 %v1996, 0.05243302
        %v1998 = vmul.f32 %v1991, %v1997
        %v1999 = vadd.f32 %v1998, 0.18741608
        %v2000 = vmul.f32 %v1991, %v1999
        %v2001 = vadd.f32 %v2000, 1.1283791
        %v2002 = vmul.f32 %v1709, %v2001
        %v2003 = vmul.f32 %v1991, 3.8918573e-05
        %v2004 = vadd.f32 %v2003, 0.001143296
        %v2005 = vmul.f32 %v1991, %v2004
        %v2006 = vadd.f32 %v2005, 0.014752088
        %v2007 = vmul.f32 %v1991, %v2006
        %v2008 = vadd.f32 %v2007, 0.112945676
        %v2009 = vmul.f32 %v1991, %v2008
        %v2010 = vadd.f32 %v2009, 0.4994258
        %v2011 = vmul.f32 %v1991, %v2010
        %v2012 = vadd.f32 %v2011, 1.0
        %v2013 = vrcp.pop %v2012
        %v2014 = vmul.f32 %v2012, %v2013
        %v2015 = vsub.f32 1.0, %v2014
        %v2016 = vmul.f32 %v2013, %v2015
        %v2017 = vadd.f32 %v2013, %v2016
        %vm2018 = vweird.f32 %v2012
        %vm2019 = vweird.f32 %v2013
        %vm2020 = vmor %vm2018, %vm2019
        %v2021 = vsel %vm2020, %v2013, %v2017
        %v2022 = vand.u32 2147483647, %v2012
        %vm2023 = vcmp.eq.f32.partialorder %v2022, 8.507059e+37
        %v2024 = vand.u32 %v2012, 2147483648
        %v2025 = vor.u32 1.1754944e-38, %v2024
        %v2026 = vsel %vm2023, %v2025, %v2021
        %v2027 = vmul.f32 %v2002, %v2026
        %v2028 = vmin.f32 %v2027, 1.0
        %v2029 = vmax.f32 %v2028, -1.0
        %v2030 = vadd.f32 %v1749, 1.0
        %v2031 = vadd.f32 %v1789, 1.0
        %v2032 = vadd.f32 %v1829, 1.0
        %v2033 = vadd.f32 %v1869, 1.0
        %v2034 = vadd.f32 %v1909, 1.0
        %v2035 = vadd.f32 %v1949, 1.0
        %v2036 = vadd.f32 %v1989, 1.0
        %v2037 = vadd.f32 %v2029, 1.0
        %v2038 = vmul.f32 %v1694, %v2030
        %v2039 = vmul.f32 %v1695, %v2031
        %v2040 = vmul.f32 %v1696, %v2032
        %v2041 = vmul.f32 %v1697, %v2033
        %v2042 = vmul.f32 %v1698, %v2034
        %v2043 = vmul.f32 %v1699, %v2035
        %v2044 = vmul.f32 %v1700, %v2036
        %v2045 = vmul.f32 %v1701, %v2037
        %v2046 = vpack.c.bf16 %v2042, %v2038
        %v2047 = vpack.c.bf16 %v2043, %v2039
        %v2048 = vpack.c.bf16 %v2044, %v2040
        %v2049 = vpack.c.bf16 %v2045, %v2041
        %v2051 = vperm.slane %v752, 0
        %v2117 = vunpack.c.l.b16 %v688
        %v2118 = vunpack.c.l.b16 %v689
        %v2119 = vunpack.c.l.b16 %v690
        %v2120 = vunpack.c.l.b16 %v691
        %v2121 = vunpack.c.l.b16 %v692
        %v2122 = vunpack.c.l.b16 %v693
        %v2123 = vunpack.c.l.b16 %v694
        %v2124 = vunpack.c.l.b16 %v695
        %v2125 = vunpack.c.l.b16 %v696
        %v2126 = vunpack.c.l.b16 %v697
        %v2127 = vunpack.c.l.b16 %v698
        %v2128 = vunpack.c.l.b16 %v699
        %v2129 = vunpack.c.l.b16 %v700
        %v2130 = vunpack.c.l.b16 %v701
        %v2131 = vunpack.c.l.b16 %v702
        %v2132 = vunpack.c.l.b16 %v703
        %v2133 = vunpack.c.l.b16 %v704
        %v2134 = vunpack.c.l.b16 %v705
        %v2135 = vunpack.c.l.b16 %v706
        %v2136 = vunpack.c.l.b16 %v707
        %v2137 = vunpack.c.l.b16 %v708
        %v2138 = vunpack.c.l.b16 %v709
        %v2139 = vunpack.c.l.b16 %v710
        %v2140 = vunpack.c.l.b16 %v711
        %v2141 = vunpack.c.l.b16 %v712
        %v2142 = vunpack.c.l.b16 %v713
        %v2143 = vunpack.c.l.b16 %v714
        %v2144 = vunpack.c.l.b16 %v715
        %v2145 = vunpack.c.l.b16 %v716
        %v2146 = vunpack.c.l.b16 %v717
        %v2147 = vunpack.c.l.b16 %v718
        %v2148 = vunpack.c.l.b16 %v719
        %v2149 = vunpack.c.l.b16 %v720
        %v2150 = vunpack.c.l.b16 %v721
        %v2151 = vunpack.c.l.b16 %v722
        %v2152 = vunpack.c.l.b16 %v723
        %v2153 = vunpack.c.l.b16 %v724
        %v2154 = vunpack.c.l.b16 %v725
        %v2155 = vunpack.c.l.b16 %v726
        %v2156 = vunpack.c.l.b16 %v727
        %v2157 = vunpack.c.l.b16 %v728
        %v2158 = vunpack.c.l.b16 %v729
        %v2159 = vunpack.c.l.b16 %v730
        %v2160 = vunpack.c.l.b16 %v731
        %v2161 = vunpack.c.l.b16 %v732
        %v2162 = vunpack.c.l.b16 %v733
        %v2163 = vunpack.c.l.b16 %v734
        %v2164 = vunpack.c.l.b16 %v735
        %v2165 = vunpack.c.l.b16 %v736
        %v2166 = vunpack.c.l.b16 %v737
        %v2167 = vunpack.c.l.b16 %v738
        %v2168 = vunpack.c.l.b16 %v739
        %v2169 = vunpack.c.l.b16 %v740
        %v2170 = vunpack.c.l.b16 %v741
        %v2171 = vunpack.c.l.b16 %v742
        %v2172 = vunpack.c.l.b16 %v743
        %v2173 = vunpack.c.l.b16 %v744
        %v2174 = vunpack.c.l.b16 %v745
        %v2175 = vunpack.c.l.b16 %v746
        %v2176 = vunpack.c.l.b16 %v747
        %v2177 = vunpack.c.l.b16 %v748
        %v2178 = vunpack.c.l.b16 %v749
        %v2179 = vunpack.c.l.b16 %v750
        %v2180 = vunpack.c.l.b16 %v751
        %v2181 = vpack.c.b16 %v2118, %v2117
        %v2182 = vpack.c.b16 %v2120, %v2119
        %v2183 = vpack.c.b16 %v2122, %v2121
        %v2184 = vpack.c.b16 %v2124, %v2123
        %v2185 = vpack.c.b16 %v2126, %v2125
        %v2186 = vpack.c.b16 %v2128, %v2127
        %v2187 = vpack.c.b16 %v2130, %v2129
        %v2188 = vpack.c.b16 %v2132, %v2131
        %v2189 = vpack.c.b16 %v2134, %v2133
        %v2190 = vpack.c.b16 %v2136, %v2135
        %v2191 = vpack.c.b16 %v2138, %v2137
        %v2192 = vpack.c.b16 %v2140, %v2139
        %v2193 = vpack.c.b16 %v2142, %v2141
        %v2194 = vpack.c.b16 %v2144, %v2143
        %v2195 = vpack.c.b16 %v2146, %v2145
        %v2196 = vpack.c.b16 %v2148, %v2147
        %v2197 = vpack.c.b16 %v2150, %v2149
        %v2198 = vpack.c.b16 %v2152, %v2151
        %v2199 = vpack.c.b16 %v2154, %v2153
        %v2200 = vpack.c.b16 %v2156, %v2155
        %v2201 = vpack.c.b16 %v2158, %v2157
        %v2202 = vpack.c.b16 %v2160, %v2159
        %v2203 = vpack.c.b16 %v2162, %v2161
        %v2204 = vpack.c.b16 %v2164, %v2163
        %v2205 = vpack.c.b16 %v2166, %v2165
        %v2206 = vpack.c.b16 %v2168, %v2167
        %v2207 = vpack.c.b16 %v2170, %v2169
        %v2208 = vpack.c.b16 %v2172, %v2171
        %v2209 = vpack.c.b16 %v2174, %v2173
        %v2210 = vpack.c.b16 %v2176, %v2175
        %v2211 = vpack.c.b16 %v2178, %v2177
        %v2212 = vpack.c.b16 %v2180, %v2179
        %2245 = vmatpush.bf16.msra.mxu0 %v2188
        %2246 = vmatpush.bf16.msra.mxu0 %v2187
        %2247 = vmatpush.bf16.msra.mxu0 %v2186
        %2248 = vmatpush.bf16.msra.mxu0 %v2185
        %2249 = vmatpush.bf16.msra.mxu0 %v2184
        %2250 = vmatpush.bf16.msra.mxu0 %v2183
        %2251 = vmatpush.bf16.msra.mxu0 %v2182
        %2252 = vmatpush.bf16.msra.mxu0 %v2181
        %2253 = vmatmul.bf16.gmra.mxu0 %v2046
        %v2254 = vpop.f32.mrf.mxu0
        %v2255 = vadd.f32 %v2051, %v2254
        %v2256 = vpop.f32.mrf.mxu0
        %v2257 = vadd.f32 %v2051, %v2256
        %2258 = vdwg.mxu0
        %2259 = vmatpush.bf16.msra.mxu0 %v2196
        %2260 = vmatpush.bf16.msra.mxu0 %v2195
        %2261 = vmatpush.bf16.msra.mxu0 %v2194
        %2262 = vmatpush.bf16.msra.mxu0 %v2193
        %2263 = vmatpush.bf16.msra.mxu0 %v2192
        %2264 = vmatpush.bf16.msra.mxu0 %v2191
        %2265 = vmatpush.bf16.msra.mxu0 %v2190
        %2266 = vmatpush.bf16.msra.mxu0 %v2189
        %2267 = vmatmul.bf16.gmra.mxu0 %v2047
        %v2268 = vpop.f32.mrf.mxu0
        %v2269 = vadd.f32 %v2255, %v2268
        %v2270 = vpop.f32.mrf.mxu0
        %v2271 = vadd.f32 %v2257, %v2270
        %2272 = vdwg.mxu0
        %2273 = vmatpush.bf16.msra.mxu0 %v2204
        %2274 = vmatpush.bf16.msra.mxu0 %v2203
        %2275 = vmatpush.bf16.msra.mxu0 %v2202
        %2276 = vmatpush.bf16.msra.mxu0 %v2201
        %2277 = vmatpush.bf16.msra.mxu0 %v2200
        %2278 = vmatpush.bf16.msra.mxu0 %v2199
        %2279 = vmatpush.bf16.msra.mxu0 %v2198
        %2280 = vmatpush.bf16.msra.mxu0 %v2197
        %2281 = vmatmul.bf16.gmra.mxu0 %v2048
        %v2282 = vpop.f32.mrf.mxu0
        %v2283 = vadd.f32 %v2269, %v2282
        %v2284 = vpop.f32.mrf.mxu0
        %v2285 = vadd.f32 %v2271, %v2284
        %2286 = vdwg.mxu0
        %2287 = vmatpush.bf16.msra.mxu0 %v2212
        %2288 = vmatpush.bf16.msra.mxu0 %v2211
        %2289 = vmatpush.bf16.msra.mxu0 %v2210
        %2290 = vmatpush.bf16.msra.mxu0 %v2209
        %2291 = vmatpush.bf16.msra.mxu0 %v2208
        %2292 = vmatpush.bf16.msra.mxu0 %v2207
        %2293 = vmatpush.bf16.msra.mxu0 %v2206
        %2294 = vmatpush.bf16.msra.mxu0 %v2205
        %2295 = vmatmul.bf16.gmra.mxu0 %v2049
        %v2296 = vpop.f32.mrf.mxu0
        %v2297 = vadd.f32 %v2283, %v2296
        %v2298 = vpop.f32.mrf.mxu0
        %v2299 = vadd.f32 %v2285, %v2298
        %2300 = vdwg.mxu0
        %v2301 = vadd.f32 %v1416, %v2297
        %v2302 = vadd.f32 %v1417, %v2299
        %2303 = vst [vmem:[%s599] sm:$0xff] %v2301
        %2304 = vst [vmem:[%s599 + $0x8] sm:$0xff] %v2302
        %s2305 = sand.u32 %s321, 1
        %s2306 = scalar_lea.sflag [#allocation5], %s2305
        %s2307 = sand.u32 %s321, 1
        %s2308 = smul.addr %s2307, 16
        %s2309 = scalar_lea.vmem [#allocation20], %s2308
        // Predicated region
        $region113: #{tpu_custom_call.1} parent=71 // pred_check
          %p2310 = pneg %p331
        $region114: #{tpu_custom_call.1} parent=71 // pred_check_branch
          %2312 = sbr.rel (%p2310) target = $region116
        $region115: #{tpu_custom_call.1} parent=71 // pred_region
          %2314 = vsyncadd %s2306, 0
          %s2315 = smul.addr %s35, 2
          %s2316 = smul.addr %s2315, 8
          %s2317 = scalar_lea.hbm %s13, %s2316
          %s2318 = sshll.u32 %s2309, 4
          %s2319 = int_to_ptr.vmem [resolvable:$true] %s2318
          %s2320 = sshll.u32 %s2317, 4
          %s2321 = int_to_ptr.hbm [resolvable:$true] %s2320
          %2326 = dma.vmem_to_hbm [thread:$0]  %s2319, 256, %s2321, %s2306, 128, 128, 8
        $region116: #{tpu_custom_call.1} parent=71 // pred_fallthru
          _
      $region72: #{tpu_custom_call.1} parent=5 // pred_fallthru
        _
      %p2327 = scmp.le.s32.totalorder 2, %s30
      // Predicated region
      $region117: #{tpu_custom_call.1} parent=5 // pred_check
        %p2328 = pneg %p2327
      $region118: #{tpu_custom_call.1} parent=5 // pred_check_branch
        %2330 = sbr.rel (%p2328) target = $region120
      $region119: #{tpu_custom_call.1} parent=5 // pred_region
        %s2331 = ssub.s32 %s30, 2
        // Predicated region
        $region121: #{tpu_custom_call.1} parent=119 // pred_check
          %p2332 = pneg %p337
        $region122: #{tpu_custom_call.1} parent=119 // pred_check_branch
          %2334 = sbr.rel (%p2332) target = $region124
        $region123: #{tpu_custom_call.1} parent=119 // pred_region
          %s2335 = sand.u32 %s322, 1
          %s2336 = scalar_lea.sflag [#allocation5], %s2335
          %s2337 = sand.u32 %s322, 1
          %s2338 = smul.addr %s2337, 16
          %s2339 = scalar_lea.vmem [#allocation20], %s2338
          %2341 = dma.done %s2336, 256
        $region124: #{tpu_custom_call.1} parent=119 // pred_fallthru
          _
      $region120: #{tpu_custom_call.1} parent=5 // pred_fallthru
        _
    $region6: #{tpu_custom_call.1} parent=1 // loop_footer
      %s34 = sadd.s32 1, %s30
    $region7: #{tpu_custom_call.1} parent=1 // loop_footer_branch
      %29 = sbr.rel target = $region3
    $region8: #{tpu_custom_call.1} parent=1 // loop_exit
      _
    %2342 = vsyncpa [#allocation4], 1
    %s2343 = scalar_lea.sflag [#allocation4], 1
    %2344 = vsyncpa %s2343, 1
    %2345 = vsyncpa [#allocation7], 1
    %2346 = vsyncpa [#allocation10], 1
    %2347 = vsyncpa [#allocation13], 1
    %2348 = vsyncpa [#allocation16], 1
    %2349 = vsyncpa [#allocation19], 1
    %2350 = vsyncpa [#allocation5], 1
    %s2351 = scalar_lea.sflag [#allocation5], 1
    %2352 = vsyncpa %s2351, 1

</llo_original>
